<compile_context>
chip_gen: v7x
topology: tpu7x:2x2x1
jax: 0.10.0
libtpu: 0.0.40
codegen_flags: <defaults>
</compile_context>

<pallas_src>
import jax
import jax.numpy as jnp
from jax.experimental import pallas as pl
from jax.experimental.pallas import tpu as pltpu

IN_FEATURES = 60
HIDDEN = 512


def _mlp_kernel(x_ref,
                w1_ref, b1_ref,
                w2_ref, b2_ref,
                w3_ref, b3_ref,
                w4_ref, b4_ref,
                w5_ref, b5_ref,
                w6_ref, b6_ref,
                o_ref):
    # fc1 (no activation in the reference forward). bf16 MXU inputs, f32 accumulate.
    h = jnp.dot(x_ref[...].astype(jnp.bfloat16), w1_ref[...],
                preferred_element_type=jnp.float32) + b1_ref[...]

    # relu(dropout1(fc2(x)))  -- dropout == identity in eval mode
    h = jnp.dot(h.astype(jnp.bfloat16), w2_ref[...],
                preferred_element_type=jnp.float32) + b2_ref[...]
    h = jnp.maximum(h, 0.0)

    # relu(dropout3(fc3(x)))
    h = jnp.dot(h.astype(jnp.bfloat16), w3_ref[...],
                preferred_element_type=jnp.float32) + b3_ref[...]
    h = jnp.maximum(h, 0.0)

    # relu(dropout5(fc4(x)))
    h = jnp.dot(h.astype(jnp.bfloat16), w4_ref[...],
                preferred_element_type=jnp.float32) + b4_ref[...]
    h = jnp.maximum(h, 0.0)

    # relu(dropout5(fc5(x)))
    h = jnp.dot(h.astype(jnp.bfloat16), w5_ref[...],
                preferred_element_type=jnp.float32) + b5_ref[...]
    h = jnp.maximum(h, 0.0)

    # fc6: single output column -> VPU multiply + XLU lane reduce instead of an
    # MXU pass that would use 1 of 128/256 output lanes.
    w6 = w6_ref[...].astype(jnp.float32)                      # (1, 512)
    out = jnp.sum(h * w6, axis=-1, keepdims=True) + b6_ref[...]
    o_ref[...] = out.astype(o_ref.dtype)


def _round_up(x, m):
    return (x + m - 1) // m * m


def bid_net_forward(x, params, tile_b=256):
    """x: (B, 60) float32.

    params: w1..w5 as (in, out) f32, w6 as (1, 512) f32 row, biases b1..b5 as
    (1, 512) f32, b6 as (1, 1) f32. Weights are cast to bf16 at the call boundary.
    """
    B = x.shape[0]
    tile_b = min(tile_b, _round_up(B, 8))
    padded_B = _round_up(B, tile_b)
    if padded_B != B:
        x = jnp.pad(x, ((0, padded_B - B), (0, 0)))
    nb = padded_B // tile_b

    def w(name):
        return params[name].astype(jnp.bfloat16)   # halve HBM weight traffic

    def b(name):
        return params[name].astype(jnp.float32)    # exact bias add in f32

    operands = [
        x,
        w("w1"), b("b1"),
        w("w2"), b("b2"),
        w("w3"), b("b3"),
        w("w4"), b("b4"),
        w("w5"), b("b5"),
        w("w6"), b("b6"),
    ]

    def resident_spec(a):
        # Constant block index across the batch grid -> DMA'd once, stays in VMEM.
        return pl.BlockSpec(a.shape, lambda i: (0,) * a.ndim)

    in_specs = [pl.BlockSpec((tile_b, IN_FEATURES), lambda i: (i, 0))]
    in_specs += [resident_spec(a) for a in operands[1:]]

    flops = 2 * padded_B * (IN_FEATURES * HIDDEN + 4 * HIDDEN * HIDDEN + HIDDEN)
    bytes_accessed = (sum(int(a.size) * a.dtype.itemsize for a in operands)
                      + padded_B * 1 * 4)

    out = pl.pallas_call(
        _mlp_kernel,
        out_shape=jax.ShapeDtypeStruct((padded_B, 1), jnp.float32),
        grid_spec=pltpu.PrefetchScalarGridSpec(
            num_scalar_prefetch=0,
            grid=(nb,),
            in_specs=in_specs,
            out_specs=pl.BlockSpec((tile_b, 1), lambda i: (i, 0)),
        ),
        compiler_params=pltpu.CompilerParams(
            dimension_semantics=("parallel",),     # v7x: shard batch tiles over 2 TCs
            vmem_limit_bytes=32 << 20,
        ),
        cost_estimate=pl.CostEstimate(
            flops=flops, transcendentals=0, bytes_accessed=bytes_accessed),
    )(*operands)
    return out[:B]


def init_params(key):
    """Deterministic init matching nn.Linear fan-in bounds (weights stored transposed)."""
    dims = [(60, 512), (512, 512), (512, 512), (512, 512), (512, 512), (512, 1)]
    params = {}
    for i, (fan_in, fan_out) in enumerate(dims, start=1):
        key, wk, bk = jax.random.split(key, 3)
        bound = 1.0 / jnp.sqrt(jnp.float32(fan_in))
        wgt = jax.random.uniform(wk, (fan_in, fan_out), jnp.float32, -bound, bound)
        if i == 6:
            wgt = wgt.T                           # store fc6 weight as a (1, 512) row
        params[f"w{i}"] = wgt
        params[f"b{i}"] = jax.random.uniform(
            bk, (1, fan_out), jnp.float32, -bound, bound)
    return params


def reference_forward(x, params):
    """Pure-JAX reference using the same bf16-weight / f32-accumulate math as the kernel."""
    def lin(h, wgt, bias):
        return jnp.dot(h.astype(jnp.bfloat16), wgt.astype(jnp.bfloat16),
                       preferred_element_type=jnp.float32) + bias

    h = lin(x, params["w1"], params["b1"])
    h = jnp.maximum(lin(h, params["w2"], params["b2"]), 0.0)
    h = jnp.maximum(lin(h, params["w3"], params["b3"]), 0.0)
    h = jnp.maximum(lin(h, params["w4"], params["b4"]), 0.0)
    h = jnp.maximum(lin(h, params["w5"], params["b5"]), 0.0)
    w6 = params["w6"].astype(jnp.bfloat16).astype(jnp.float32)
    return jnp.sum(h * w6, axis=-1, keepdims=True) + params["b6"]


if __name__ == "__main__":
    key = jax.random.PRNGKey(0)
    key, xk = jax.random.split(key)

    B = 256  # two batch tiles of 128 -> exercises the batch grid + resident weights
    x = jax.random.normal(xk, (B, IN_FEATURES), jnp.float32)
    params = init_params(key)

    out = bid_net_forward(x, params, tile_b=128)
    out = jax.block_until_ready(out)

    ref = reference_forward(x, params)
    assert out.shape == (B, 1), out.shape
    assert jnp.allclose(out, ref, atol=2e-2, rtol=2e-2), "mismatch vs reference"

    print("KERNEL_OK")
</pallas_src>

<mosaic_0001>
module attributes {stable_mosaic.version = 11 : i64} {
  func.func @_mlp_kernel(%arg0: i32, %arg1: memref<128x60xf32, #tpu.memory_space<vmem>>, %arg2: memref<60x512xbf16, #tpu.memory_space<vmem>>, %arg3: memref<1x512xf32, #tpu.memory_space<vmem>>, %arg4: memref<512x512xbf16, #tpu.memory_space<vmem>>, %arg5: memref<1x512xf32, #tpu.memory_space<vmem>>, %arg6: memref<512x512xbf16, #tpu.memory_space<vmem>>, %arg7: memref<1x512xf32, #tpu.memory_space<vmem>>, %arg8: memref<512x512xbf16, #tpu.memory_space<vmem>>, %arg9: memref<1x512xf32, #tpu.memory_space<vmem>>, %arg10: memref<512x512xbf16, #tpu.memory_space<vmem>>, %arg11: memref<1x512xf32, #tpu.memory_space<vmem>>, %arg12: memref<1x512xbf16, #tpu.memory_space<vmem>>, %arg13: memref<1x1xf32, #tpu.memory_space<vmem>>, %arg14: memref<128x1xf32, #tpu.memory_space<vmem>>) attributes {dimension_semantics = [#tpu.dimension_semantics<parallel>], iteration_bounds = array<i64: 2>, scalar_prefetch = 0 : i64, scratch_operands = 0 : i64, tpu.core_type = #tpu.core_type<tc>, window_params = [{transform_indices = @transform_0, window_bounds = array<i64: 128, 60>}, {pipeline_mode = #tpu.pipeline_mode<synchronous>, transform_indices = @transform_1, window_bounds = array<i64: 60, 512>}, {pipeline_mode = #tpu.pipeline_mode<synchronous>, transform_indices = @transform_2, window_bounds = array<i64: 1, 512>}, {pipeline_mode = #tpu.pipeline_mode<synchronous>, transform_indices = @transform_3, window_bounds = array<i64: 512, 512>}, {pipeline_mode = #tpu.pipeline_mode<synchronous>, transform_indices = @transform_4, window_bounds = array<i64: 1, 512>}, {pipeline_mode = #tpu.pipeline_mode<synchronous>, transform_indices = @transform_5, window_bounds = array<i64: 512, 512>}, {pipeline_mode = #tpu.pipeline_mode<synchronous>, transform_indices = @transform_6, window_bounds = array<i64: 1, 512>}, {pipeline_mode = #tpu.pipeline_mode<synchronous>, transform_indices = @transform_7, window_bounds = array<i64: 512, 512>}, {pipeline_mode = #tpu.pipeline_mode<synchronous>, transform_indices = @transform_8, window_bounds = array<i64: 1, 512>}, {pipeline_mode = #tpu.pipeline_mode<synchronous>, transform_indices = @transform_9, window_bounds = array<i64: 512, 512>}, {pipeline_mode = #tpu.pipeline_mode<synchronous>, transform_indices = @transform_10, window_bounds = array<i64: 1, 512>}, {pipeline_mode = #tpu.pipeline_mode<synchronous>, transform_indices = @transform_11, window_bounds = array<i64: 1, 512>}, {pipeline_mode = #tpu.pipeline_mode<synchronous>, transform_indices = @transform_12, window_bounds = array<i64: 1, 1>}, {transform_indices = @transform_13, window_bounds = array<i64: 128, 1>}]} {
    %c0 = arith.constant 0 : index
    %c0_0 = arith.constant 0 : index
    %0 = vector.load %arg1[%c0, %c0_0] : memref<128x60xf32, #tpu.memory_space<vmem>>, vector<128x60xf32>
    %1 = arith.truncf %0 : vector<128x60xf32> to vector<128x60xbf16>
    %c0_1 = arith.constant 0 : index
    %c0_2 = arith.constant 0 : index
    %2 = vector.load %arg2[%c0_1, %c0_2] : memref<60x512xbf16, #tpu.memory_space<vmem>>, vector<60x512xbf16>
    %cst = arith.constant dense<0.000000e+00> : vector<128x512xf32>
    %3 = tpu.matmul %1, %2, %cst {dimension_numbers = #tpu.dot_dimension_numbers<[1], [0], [0], [1], [0, 0, 1, 1], [], []>} : vector<128x60xbf16>, vector<60x512xbf16>, vector<128x512xf32> -> vector<128x512xf32>
    %c0_3 = arith.constant 0 : index
    %c0_4 = arith.constant 0 : index
    %4 = vector.load %arg3[%c0_3, %c0_4] : memref<1x512xf32, #tpu.memory_space<vmem>>, vector<1x512xf32>
    %5 = vector.broadcast %4 : vector<1x512xf32> to vector<128x512xf32>
    %6 = arith.addf %3, %5 : vector<128x512xf32>
    %7 = arith.truncf %6 : vector<128x512xf32> to vector<128x512xbf16>
    %c0_5 = arith.constant 0 : index
    %c0_6 = arith.constant 0 : index
    %8 = vector.load %arg4[%c0_5, %c0_6] : memref<512x512xbf16, #tpu.memory_space<vmem>>, vector<512x512xbf16>
    %cst_7 = arith.constant dense<0.000000e+00> : vector<128x512xf32>
    %9 = tpu.matmul %7, %8, %cst_7 {dimension_numbers = #tpu.dot_dimension_numbers<[1], [0], [0], [1], [0, 0, 1, 1], [], []>} : vector<128x512xbf16>, vector<512x512xbf16>, vector<128x512xf32> -> vector<128x512xf32>
    %c0_8 = arith.constant 0 : index
    %c0_9 = arith.constant 0 : index
    %10 = vector.load %arg5[%c0_8, %c0_9] : memref<1x512xf32, #tpu.memory_space<vmem>>, vector<1x512xf32>
    %11 = vector.broadcast %10 : vector<1x512xf32> to vector<128x512xf32>
    %12 = arith.addf %9, %11 : vector<128x512xf32>
    %cst_10 = arith.constant 0.000000e+00 : f32
    %13 = vector.broadcast %cst_10 : f32 to vector<128x512xf32>
    %14 = arith.maximumf %12, %13 : vector<128x512xf32>
    %15 = arith.truncf %14 : vector<128x512xf32> to vector<128x512xbf16>
    %c0_11 = arith.constant 0 : index
    %c0_12 = arith.constant 0 : index
    %16 = vector.load %arg6[%c0_11, %c0_12] : memref<512x512xbf16, #tpu.memory_space<vmem>>, vector<512x512xbf16>
    %cst_13 = arith.constant dense<0.000000e+00> : vector<128x512xf32>
    %17 = tpu.matmul %15, %16, %cst_13 {dimension_numbers = #tpu.dot_dimension_numbers<[1], [0], [0], [1], [0, 0, 1, 1], [], []>} : vector<128x512xbf16>, vector<512x512xbf16>, vector<128x512xf32> -> vector<128x512xf32>
    %c0_14 = arith.constant 0 : index
    %c0_15 = arith.constant 0 : index
    %18 = vector.load %arg7[%c0_14, %c0_15] : memref<1x512xf32, #tpu.memory_space<vmem>>, vector<1x512xf32>
    %19 = vector.broadcast %18 : vector<1x512xf32> to vector<128x512xf32>
    %20 = arith.addf %17, %19 : vector<128x512xf32>
    %cst_16 = arith.constant 0.000000e+00 : f32
    %21 = vector.broadcast %cst_16 : f32 to vector<128x512xf32>
    %22 = arith.maximumf %20, %21 : vector<128x512xf32>
    %23 = arith.truncf %22 : vector<128x512xf32> to vector<128x512xbf16>
    %c0_17 = arith.constant 0 : index
    %c0_18 = arith.constant 0 : index
    %24 = vector.load %arg8[%c0_17, %c0_18] : memref<512x512xbf16, #tpu.memory_space<vmem>>, vector<512x512xbf16>
    %cst_19 = arith.constant dense<0.000000e+00> : vector<128x512xf32>
    %25 = tpu.matmul %23, %24, %cst_19 {dimension_numbers = #tpu.dot_dimension_numbers<[1], [0], [0], [1], [0, 0, 1, 1], [], []>} : vector<128x512xbf16>, vector<512x512xbf16>, vector<128x512xf32> -> vector<128x512xf32>
    %c0_20 = arith.constant 0 : index
    %c0_21 = arith.constant 0 : index
    %26 = vector.load %arg9[%c0_20, %c0_21] : memref<1x512xf32, #tpu.memory_space<vmem>>, vector<1x512xf32>
    %27 = vector.broadcast %26 : vector<1x512xf32> to vector<128x512xf32>
    %28 = arith.addf %25, %27 : vector<128x512xf32>
    %cst_22 = arith.constant 0.000000e+00 : f32
    %29 = vector.broadcast %cst_22 : f32 to vector<128x512xf32>
    %30 = arith.maximumf %28, %29 : vector<128x512xf32>
    %31 = arith.truncf %30 : vector<128x512xf32> to vector<128x512xbf16>
    %c0_23 = arith.constant 0 : index
    %c0_24 = arith.constant 0 : index
    %32 = vector.load %arg10[%c0_23, %c0_24] : memref<512x512xbf16, #tpu.memory_space<vmem>>, vector<512x512xbf16>
    %cst_25 = arith.constant dense<0.000000e+00> : vector<128x512xf32>
    %33 = tpu.matmul %31, %32, %cst_25 {dimension_numbers = #tpu.dot_dimension_numbers<[1], [0], [0], [1], [0, 0, 1, 1], [], []>} : vector<128x512xbf16>, vector<512x512xbf16>, vector<128x512xf32> -> vector<128x512xf32>
    %c0_26 = arith.constant 0 : index
    %c0_27 = arith.constant 0 : index
    %34 = vector.load %arg11[%c0_26, %c0_27] : memref<1x512xf32, #tpu.memory_space<vmem>>, vector<1x512xf32>
    %35 = vector.broadcast %34 : vector<1x512xf32> to vector<128x512xf32>
    %36 = arith.addf %33, %35 : vector<128x512xf32>
    %cst_28 = arith.constant 0.000000e+00 : f32
    %37 = vector.broadcast %cst_28 : f32 to vector<128x512xf32>
    %38 = arith.maximumf %36, %37 : vector<128x512xf32>
    %c0_29 = arith.constant 0 : index
    %c0_30 = arith.constant 0 : index
    %39 = vector.load %arg12[%c0_29, %c0_30] : memref<1x512xbf16, #tpu.memory_space<vmem>>, vector<1x512xbf16>
    %40 = arith.extf %39 : vector<1x512xbf16> to vector<1x512xf32>
    %41 = vector.broadcast %40 : vector<1x512xf32> to vector<128x512xf32>
    %42 = arith.mulf %38, %41 : vector<128x512xf32>
    %cst_31 = arith.constant dense<0.000000e+00> : vector<128xf32>
    %43 = vector.multi_reduction <add>, %42, %cst_31 [1] : vector<128x512xf32> to vector<128xf32>
    %44 = vector.shape_cast %43 : vector<128xf32> to vector<128x1xf32>
    %c0_32 = arith.constant 0 : index
    %c0_33 = arith.constant 0 : index
    %45 = vector.load %arg13[%c0_32, %c0_33] : memref<1x1xf32, #tpu.memory_space<vmem>>, vector<1x1xf32>
    %46 = vector.broadcast %45 : vector<1x1xf32> to vector<128x1xf32>
    %47 = arith.addf %44, %46 : vector<128x1xf32>
    %c0_34 = arith.constant 0 : index
    %c0_35 = arith.constant 0 : index
    %48 = vector.load %arg14[%c0_34, %c0_35] : memref<128x1xf32, #tpu.memory_space<vmem>>, vector<128x1xf32>
    tpu.vector_store %arg14[%c0_34, %c0_35], %47 {strides = array<i32>} : memref<128x1xf32, #tpu.memory_space<vmem>>, vector<128x1xf32>,
    return
  }
  func.func @transform_0(%arg0: i32) -> (i32, i32) {
    %c0_i32 = arith.constant 0 : i32
    %c0_i32_0 = arith.constant 0 : i32
    return %arg0, %c0_i32 : i32, i32
  }
  func.func @transform_1(%arg0: i32) -> (i32, i32) {
    %c0_i32 = arith.constant 0 : i32
    %c0_i32_0 = arith.constant 0 : i32
    %c0_i32_1 = arith.constant 0 : i32
    return %c0_i32, %c0_i32_0 : i32, i32
  }
  func.func @transform_2(%arg0: i32) -> (i32, i32) {
    %c0_i32 = arith.constant 0 : i32
    %c0_i32_0 = arith.constant 0 : i32
    %c0_i32_1 = arith.constant 0 : i32
    return %c0_i32, %c0_i32_0 : i32, i32
  }
  func.func @transform_3(%arg0: i32) -> (i32, i32) {
    %c0_i32 = arith.constant 0 : i32
    %c0_i32_0 = arith.constant 0 : i32
    %c0_i32_1 = arith.constant 0 : i32
    return %c0_i32, %c0_i32_0 : i32, i32
  }
  func.func @transform_4(%arg0: i32) -> (i32, i32) {
    %c0_i32 = arith.constant 0 : i32
    %c0_i32_0 = arith.constant 0 : i32
    %c0_i32_1 = arith.constant 0 : i32
    return %c0_i32, %c0_i32_0 : i32, i32
  }
  func.func @transform_5(%arg0: i32) -> (i32, i32) {
    %c0_i32 = arith.constant 0 : i32
    %c0_i32_0 = arith.constant 0 : i32
    %c0_i32_1 = arith.constant 0 : i32
    return %c0_i32, %c0_i32_0 : i32, i32
  }
  func.func @transform_6(%arg0: i32) -> (i32, i32) {
    %c0_i32 = arith.constant 0 : i32
    %c0_i32_0 = arith.constant 0 : i32
    %c0_i32_1 = arith.constant 0 : i32
    return %c0_i32, %c0_i32_0 : i32, i32
  }
  func.func @transform_7(%arg0: i32) -> (i32, i32) {
    %c0_i32 = arith.constant 0 : i32
    %c0_i32_0 = arith.constant 0 : i32
    %c0_i32_1 = arith.constant 0 : i32
    return %c0_i32, %c0_i32_0 : i32, i32
  }
  func.func @transform_8(%arg0: i32) -> (i32, i32) {
    %c0_i32 = arith.constant 0 : i32
    %c0_i32_0 = arith.constant 0 : i32
    %c0_i32_1 = arith.constant 0 : i32
    return %c0_i32, %c0_i32_0 : i32, i32
  }
  func.func @transform_9(%arg0: i32) -> (i32, i32) {
    %c0_i32 = arith.constant 0 : i32
    %c0_i32_0 = arith.constant 0 : i32
    %c0_i32_1 = arith.constant 0 : i32
    return %c0_i32, %c0_i32_0 : i32, i32
  }
  func.func @transform_10(%arg0: i32) -> (i32, i32) {
    %c0_i32 = arith.constant 0 : i32
    %c0_i32_0 = arith.constant 0 : i32
    %c0_i32_1 = arith.constant 0 : i32
    return %c0_i32, %c0_i32_0 : i32, i32
  }
  func.func @transform_11(%arg0: i32) -> (i32, i32) {
    %c0_i32 = arith.constant 0 : i32
    %c0_i32_0 = arith.constant 0 : i32
    %c0_i32_1 = arith.constant 0 : i32
    return %c0_i32, %c0_i32_0 : i32, i32
  }
  func.func @transform_12(%arg0: i32) -> (i32, i32) {
    %c0_i32 = arith.constant 0 : i32
    %c0_i32_0 = arith.constant 0 : i32
    %c0_i32_1 = arith.constant 0 : i32
    return %c0_i32, %c0_i32_0 : i32, i32
  }
  func.func @transform_13(%arg0: i32) -> (i32, i32) {
    %c0_i32 = arith.constant 0 : i32
    %c0_i32_0 = arith.constant 0 : i32
    return %arg0, %c0_i32 : i32, i32
  }
}

</mosaic_0001>

<llo_original>
// kernel: tpu_custom_call.1
$region0: #{tpu_custom_call.1}
  #allocation0 [shape = 'u32[]', space=smem, size = 0x4, offset = 0x4, fixed_abs, tag = 'smem constant byte address 0x4 - core index']
  #allocation1 [shape = 'u32[144,128]{1,0:T(1,128)}', space=vmem, size = 0x12000, scoped, tag = 'internal scratch']
  #allocation2 [shape = 'f32[1,1]{1,0:T(1,128)S(1)}', space=vmem, size = 0x200, scoped, tag = 'scoped memory for tpu_custom_call.1']
  %s0 = inlined_call_operand.vmem [shape: f32[256,60], index: 0, kind: input, shape index: {}]
  %s1 = inlined_call_operand.vmem [shape: bf16[60,512], index: 1, kind: input, shape index: {}]
  %s2 = inlined_call_operand.vmem [shape: f32[1,512], index: 2, kind: input, shape index: {}]
  %s3 = inlined_call_operand.hbm [shape: bf16[512,512], index: 3, kind: input, shape index: {}]
  %s4 = inlined_call_operand.vmem [shape: f32[1,512], index: 4, kind: input, shape index: {}]
  %s5 = inlined_call_operand.hbm [shape: bf16[512,512], index: 5, kind: input, shape index: {}]
  %s6 = inlined_call_operand.vmem [shape: f32[1,512], index: 6, kind: input, shape index: {}]
  %s7 = inlined_call_operand.hbm [shape: bf16[512,512], index: 7, kind: input, shape index: {}]
  %s8 = inlined_call_operand.vmem [shape: f32[1,512], index: 8, kind: input, shape index: {}]
  %s9 = inlined_call_operand.hbm [shape: bf16[512,512], index: 9, kind: input, shape index: {}]
  %s10 = inlined_call_operand.vmem [shape: f32[1,512], index: 10, kind: input, shape index: {}]
  %s11 = inlined_call_operand.vmem [shape: bf16[1,512], index: 11, kind: input, shape index: {}]
  %s12 = inlined_call_operand.<no memory space> [shape: f32[1,1], index: 12, kind: input, shape index: {}]
  %s13 = inlined_call_operand.vmem [shape: f32[256,1], index: 13, kind: output, shape index: {}]
  %s14 = sld [smem:[#allocation0]]
  $region101: #{tpu_custom_call.1} parent=0
    _
  %s16 = ssub.s32 1, %s14
  %s17 = scalar_select 0, %s16, %s14
  %v18 = vstv %s12
  %19 = vst [vmem:[#allocation2] sm:$0x1] %v18
  $region1: #{tpu_custom_call.1} parent=0
    #allocation3 [shape = 'u8[524288]{0}', space=vmem, size = 0x80000, scoped, tag = 'input window, operand 3, single buffered']
    #allocation4 [shape = 's32[2]{0}', space=sflag, size = 0x8, scoped, tag = 'scoped memory for tpu_custom_call.1']
    #allocation5 [shape = 'u8[524288]{0}', space=vmem, size = 0x80000, scoped, tag = 'input window, operand 5, single buffered']
    #allocation6 [shape = 's32[1]{0}', space=sflag, size = 0x4, scoped, tag = 'scoped memory for tpu_custom_call.1']
    #allocation7 [shape = 'u8[524288]{0}', space=vmem, size = 0x80000, scoped, tag = 'input window, operand 7, single buffered']
    #allocation8 [shape = 'u8[524288]{0}', space=vmem, size = 0x80000, scoped, tag = 'input window, operand 9, single buffered']
    #allocation9 [shape = 's32[1]{0}', space=sflag, size = 0x4, scoped, tag = 'scoped memory for tpu_custom_call.1']
    %20 = vsyncpa [#allocation4], 0
    %21 = vsyncpa [#allocation6], 0
    %22 = vsyncpa [#allocation9], 0
    loop: start=0, step=1, limit=4
    $region2: #{tpu_custom_call.1} parent=1 // loop_pre_header
      _
    $region3: #{tpu_custom_call.1} parent=1 // loop_header
      %s24 = sphi 0, %s28
      %p25 = scmp.ge.s32.totalorder %s24, 4
      %s34 = sphi 0, %s36
      %s37 = sphi 0, %s34
      %s38 = sphi 0, %s37
      %s54 = sphi 0, %s38
      %s58 = sphi 0, %s58
      %s60 = sphi 0, %s58
      %s61 = sphi 0, %s60
      %s75 = sphi 0, %s61
      %s79 = sphi 0, %s79
      %s81 = sphi 0, %s79
      %s82 = sphi 0, %s81
      %s96 = sphi 0, %s82
      %s100 = sphi 0, %s100
      %s102 = sphi 0, %s100
      %s103 = sphi 0, %s102
      %s117 = sphi 0, %s103
      %s121 = sphi 0, %s121
      %s123 = sphi 0, %s121
      %s124 = sphi 0, %s123
      %s138 = sphi 0, %s124
      %s142 = sphi 0, %s142
      %s144 = sphi 0, %s142
      %s145 = sphi 0, %s144
      %s159 = sphi 0, %s145
      %s163 = sphi 0, %s163
      %s165 = sphi 0, %s163
      %s166 = sphi 0, %s165
      %s180 = sphi 0, %s166
      %s184 = sphi 0, %s184
      %s186 = sphi 0, %s184
      %s187 = sphi 0, %s186
      %s201 = sphi 0, %s187
      %s205 = sphi 0, %s205
      %s207 = sphi 0, %s205
      %s208 = sphi 0, %s207
      %s222 = sphi 0, %s208
      %s226 = sphi 0, %s226
      %s228 = sphi 0, %s226
      %s229 = sphi 0, %s228
      %s243 = sphi 0, %s229
      %s247 = sphi 0, %s247
      %s249 = sphi 0, %s247
      %s250 = sphi 0, %s249
      %s264 = sphi 0, %s250
      %s268 = sphi 0, %s268
      %s270 = sphi 0, %s268
      %s271 = sphi 0, %s270
      %s285 = sphi 0, %s271
      %s289 = sphi 0, %s289
      %s291 = sphi 0, %s289
      %s292 = sphi 0, %s291
      %s306 = sphi 0, %s292
      %s312 = sphi 0, %s314
      %s315 = sphi 0, %s312
      %s316 = sphi 0, %s315
      %s332 = sphi 0, %s316
    $region4: #{tpu_custom_call.1} parent=1 // loop_header_branch
      %27 = sbr.rel (%p25) target = $region8
    $region5: #{tpu_custom_call.1} parent=1 // loop_body
      %s29 = ssub.s32 %s24, 1
      %s30 = ssub.s32 %s24, 2
      %s31 = sadd.s32 %s24, 1
      %s32 = ssub.s32 %s24, %s31
      %p33 = scmp.eq.s32.totalorder %s32, 0
      %s35 = sadd.s32 %s34, 1
      %s36 = scalar_select %p33, %s34, %s35
      %p39 = pneg %p33
      %p40 = scmp.eq.s32.totalorder %s24, 1
      %p41 = por %p39, %p40
      %p42 = scmp.ne.s32.totalorder %s34, %s37
      %p43 = scmp.eq.s32.totalorder %s24, 0
      %p44 = por %p42, %p43
      %p45 = scmp.ne.s32.totalorder %s34, %s37
      %p46 = scmp.eq.s32.totalorder %s29, 1
      %p47 = por %p45, %p46
      %p48 = scmp.ne.s32.totalorder %s37, %s38
      %p49 = scmp.eq.s32.totalorder %s29, 0
      %p50 = por %p48, %p49
      %p51 = scmp.ne.s32.totalorder %s37, %s38
      %p52 = scmp.eq.s32.totalorder %s30, 1
      %p53 = por %p51, %p52
      %p55 = scmp.ne.s32.totalorder %s38, %s54
      %p56 = scmp.eq.s32.totalorder %s30, 0
      %p57 = por %p55, %p56
      %s59 = sadd.s32 %s58, 1
      %p62 = scmp.eq.s32.totalorder %s24, 1
      %p63 = scmp.ne.s32.totalorder %s58, %s60
      %p64 = scmp.eq.s32.totalorder %s24, 0
      %p65 = por %p63, %p64
      %p66 = scmp.ne.s32.totalorder %s58, %s60
      %p67 = scmp.eq.s32.totalorder %s29, 1
      %p68 = por %p66, %p67
      %p69 = scmp.ne.s32.totalorder %s60, %s61
      %p70 = scmp.eq.s32.totalorder %s29, 0
      %p71 = por %p69, %p70
      %p72 = scmp.ne.s32.totalorder %s60, %s61
      %p73 = scmp.eq.s32.totalorder %s30, 1
      %p74 = por %p72, %p73
      %p76 = scmp.ne.s32.totalorder %s61, %s75
      %p77 = scmp.eq.s32.totalorder %s30, 0
      %p78 = por %p76, %p77
      %s80 = sadd.s32 %s79, 1
      %p83 = scmp.eq.s32.totalorder %s24, 1
      %p84 = scmp.ne.s32.totalorder %s79, %s81
      %p85 = scmp.eq.s32.totalorder %s24, 0
      %p86 = por %p84, %p85
      %p87 = scmp.ne.s32.totalorder %s79, %s81
      %p88 = scmp.eq.s32.totalorder %s29, 1
      %p89 = por %p87, %p88
      %p90 = scmp.ne.s32.totalorder %s81, %s82
      %p91 = scmp.eq.s32.totalorder %s29, 0
      %p92 = por %p90, %p91
      %p93 = scmp.ne.s32.totalorder %s81, %s82
      %p94 = scmp.eq.s32.totalorder %s30, 1
      %p95 = por %p93, %p94
      %p97 = scmp.ne.s32.totalorder %s82, %s96
      %p98 = scmp.eq.s32.totalorder %s30, 0
      %p99 = por %p97, %p98
      %s101 = sadd.s32 %s100, 1
      %p104 = scmp.eq.s32.totalorder %s24, 1
      %p105 = scmp.ne.s32.totalorder %s100, %s102
      %p106 = scmp.eq.s32.totalorder %s24, 0
      %p107 = por %p105, %p106
      %p108 = scmp.ne.s32.totalorder %s100, %s102
      %p109 = scmp.eq.s32.totalorder %s29, 1
      %p110 = por %p108, %p109
      %p111 = scmp.ne.s32.totalorder %s102, %s103
      %p112 = scmp.eq.s32.totalorder %s29, 0
      %p113 = por %p111, %p112
      %p114 = scmp.ne.s32.totalorder %s102, %s103
      %p115 = scmp.eq.s32.totalorder %s30, 1
      %p116 = por %p114, %p115
      %p118 = scmp.ne.s32.totalorder %s103, %s117
      %p119 = scmp.eq.s32.totalorder %s30, 0
      %p120 = por %p118, %p119
      %s122 = sadd.s32 %s121, 1
      %p125 = scmp.eq.s32.totalorder %s24, 1
      %p126 = scmp.ne.s32.totalorder %s121, %s123
      %p127 = scmp.eq.s32.totalorder %s24, 0
      %p128 = por %p126, %p127
      %p129 = scmp.ne.s32.totalorder %s121, %s123
      %p130 = scmp.eq.s32.totalorder %s29, 1
      %p131 = por %p129, %p130
      %p132 = scmp.ne.s32.totalorder %s123, %s124
      %p133 = scmp.eq.s32.totalorder %s29, 0
      %p134 = por %p132, %p133
      %p135 = scmp.ne.s32.totalorder %s123, %s124
      %p136 = scmp.eq.s32.totalorder %s30, 1
      %p137 = por %p135, %p136
      %p139 = scmp.ne.s32.totalorder %s124, %s138
      %p140 = scmp.eq.s32.totalorder %s30, 0
      %p141 = por %p139, %p140
      %s143 = sadd.s32 %s142, 1
      %p146 = scmp.eq.s32.totalorder %s24, 1
      %p147 = scmp.ne.s32.totalorder %s142, %s144
      %p148 = scmp.eq.s32.totalorder %s24, 0
      %p149 = por %p147, %p148
      %p150 = scmp.ne.s32.totalorder %s142, %s144
      %p151 = scmp.eq.s32.totalorder %s29, 1
      %p152 = por %p150, %p151
      %p153 = scmp.ne.s32.totalorder %s144, %s145
      %p154 = scmp.eq.s32.totalorder %s29, 0
      %p155 = por %p153, %p154
      %p156 = scmp.ne.s32.totalorder %s144, %s145
      %p157 = scmp.eq.s32.totalorder %s30, 1
      %p158 = por %p156, %p157
      %p160 = scmp.ne.s32.totalorder %s145, %s159
      %p161 = scmp.eq.s32.totalorder %s30, 0
      %p162 = por %p160, %p161
      %s164 = sadd.s32 %s163, 1
      %p167 = scmp.eq.s32.totalorder %s24, 1
      %p168 = scmp.ne.s32.totalorder %s163, %s165
      %p169 = scmp.eq.s32.totalorder %s24, 0
      %p170 = por %p168, %p169
      %p171 = scmp.ne.s32.totalorder %s163, %s165
      %p172 = scmp.eq.s32.totalorder %s29, 1
      %p173 = por %p171, %p172
      %p174 = scmp.ne.s32.totalorder %s165, %s166
      %p175 = scmp.eq.s32.totalorder %s29, 0
      %p176 = por %p174, %p175
      %p177 = scmp.ne.s32.totalorder %s165, %s166
      %p178 = scmp.eq.s32.totalorder %s30, 1
      %p179 = por %p177, %p178
      %p181 = scmp.ne.s32.totalorder %s166, %s180
      %p182 = scmp.eq.s32.totalorder %s30, 0
      %p183 = por %p181, %p182
      %s185 = sadd.s32 %s184, 1
      %p188 = scmp.eq.s32.totalorder %s24, 1
      %p189 = scmp.ne.s32.totalorder %s184, %s186
      %p190 = scmp.eq.s32.totalorder %s24, 0
      %p191 = por %p189, %p190
      %p192 = scmp.ne.s32.totalorder %s184, %s186
      %p193 = scmp.eq.s32.totalorder %s29, 1
      %p194 = por %p192, %p193
      %p195 = scmp.ne.s32.totalorder %s186, %s187
      %p196 = scmp.eq.s32.totalorder %s29, 0
      %p197 = por %p195, %p196
      %p198 = scmp.ne.s32.totalorder %s186, %s187
      %p199 = scmp.eq.s32.totalorder %s30, 1
      %p200 = por %p198, %p199
      %p202 = scmp.ne.s32.totalorder %s187, %s201
      %p203 = scmp.eq.s32.totalorder %s30, 0
      %p204 = por %p202, %p203
      %s206 = sadd.s32 %s205, 1
      %p209 = scmp.eq.s32.totalorder %s24, 1
      %p210 = scmp.ne.s32.totalorder %s205, %s207
      %p211 = scmp.eq.s32.totalorder %s24, 0
      %p212 = por %p210, %p211
      %p213 = scmp.ne.s32.totalorder %s205, %s207
      %p214 = scmp.eq.s32.totalorder %s29, 1
      %p215 = por %p213, %p214
      %p216 = scmp.ne.s32.totalorder %s207, %s208
      %p217 = scmp.eq.s32.totalorder %s29, 0
      %p218 = por %p216, %p217
      %p219 = scmp.ne.s32.totalorder %s207, %s208
      %p220 = scmp.eq.s32.totalorder %s30, 1
      %p221 = por %p219, %p220
      %p223 = scmp.ne.s32.totalorder %s208, %s222
      %p224 = scmp.eq.s32.totalorder %s30, 0
      %p225 = por %p223, %p224
      %s227 = sadd.s32 %s226, 1
      %p230 = scmp.eq.s32.totalorder %s24, 1
      %p231 = scmp.ne.s32.totalorder %s226, %s228
      %p232 = scmp.eq.s32.totalorder %s24, 0
      %p233 = por %p231, %p232
      %p234 = scmp.ne.s32.totalorder %s226, %s228
      %p235 = scmp.eq.s32.totalorder %s29, 1
      %p236 = por %p234, %p235
      %p237 = scmp.ne.s32.totalorder %s228, %s229
      %p238 = scmp.eq.s32.totalorder %s29, 0
      %p239 = por %p237, %p238
      %p240 = scmp.ne.s32.totalorder %s228, %s229
      %p241 = scmp.eq.s32.totalorder %s30, 1
      %p242 = por %p240, %p241
      %p244 = scmp.ne.s32.totalorder %s229, %s243
      %p245 = scmp.eq.s32.totalorder %s30, 0
      %p246 = por %p244, %p245
      %s248 = sadd.s32 %s247, 1
      %p251 = scmp.eq.s32.totalorder %s24, 1
      %p252 = scmp.ne.s32.totalorder %s247, %s249
      %p253 = scmp.eq.s32.totalorder %s24, 0
      %p254 = por %p252, %p253
      %p255 = scmp.ne.s32.totalorder %s247, %s249
      %p256 = scmp.eq.s32.totalorder %s29, 1
      %p257 = por %p255, %p256
      %p258 = scmp.ne.s32.totalorder %s249, %s250
      %p259 = scmp.eq.s32.totalorder %s29, 0
      %p260 = por %p258, %p259
      %p261 = scmp.ne.s32.totalorder %s249, %s250
      %p262 = scmp.eq.s32.totalorder %s30, 1
      %p263 = por %p261, %p262
      %p265 = scmp.ne.s32.totalorder %s250, %s264
      %p266 = scmp.eq.s32.totalorder %s30, 0
      %p267 = por %p265, %p266
      %s269 = sadd.s32 %s268, 1
      %p272 = scmp.eq.s32.totalorder %s24, 1
      %p273 = scmp.ne.s32.totalorder %s268, %s270
      %p274 = scmp.eq.s32.totalorder %s24, 0
      %p275 = por %p273, %p274
      %p276 = scmp.ne.s32.totalorder %s268, %s270
      %p277 = scmp.eq.s32.totalorder %s29, 1
      %p278 = por %p276, %p277
      %p279 = scmp.ne.s32.totalorder %s270, %s271
      %p280 = scmp.eq.s32.totalorder %s29, 0
      %p281 = por %p279, %p280
      %p282 = scmp.ne.s32.totalorder %s270, %s271
      %p283 = scmp.eq.s32.totalorder %s30, 1
      %p284 = por %p282, %p283
      %p286 = scmp.ne.s32.totalorder %s271, %s285
      %p287 = scmp.eq.s32.totalorder %s30, 0
      %p288 = por %p286, %p287
      %s290 = sadd.s32 %s289, 1
      %p293 = scmp.eq.s32.totalorder %s24, 1
      %p294 = scmp.ne.s32.totalorder %s289, %s291
      %p295 = scmp.eq.s32.totalorder %s24, 0
      %p296 = por %p294, %p295
      %p297 = scmp.ne.s32.totalorder %s289, %s291
      %p298 = scmp.eq.s32.totalorder %s29, 1
      %p299 = por %p297, %p298
      %p300 = scmp.ne.s32.totalorder %s291, %s292
      %p301 = scmp.eq.s32.totalorder %s29, 0
      %p302 = por %p300, %p301
      %p303 = scmp.ne.s32.totalorder %s291, %s292
      %p304 = scmp.eq.s32.totalorder %s30, 1
      %p305 = por %p303, %p304
      %p307 = scmp.ne.s32.totalorder %s292, %s306
      %p308 = scmp.eq.s32.totalorder %s30, 0
      %p309 = por %p307, %p308
      %s310 = ssub.s32 %s24, %s31
      %p311 = scmp.eq.s32.totalorder %s310, 0
      %s313 = sadd.s32 %s312, 1
      %s314 = scalar_select %p311, %s312, %s313
      %p317 = pneg %p311
      %p318 = scmp.eq.s32.totalorder %s24, 1
      %p319 = por %p317, %p318
      %p320 = scmp.ne.s32.totalorder %s312, %s315
      %p321 = scmp.eq.s32.totalorder %s24, 0
      %p322 = por %p320, %p321
      %p323 = scmp.ne.s32.totalorder %s312, %s315
      %p324 = scmp.eq.s32.totalorder %s29, 1
      %p325 = por %p323, %p324
      %p326 = scmp.ne.s32.totalorder %s315, %s316
      %p327 = scmp.eq.s32.totalorder %s29, 0
      %p328 = por %p326, %p327
      %p329 = scmp.ne.s32.totalorder %s315, %s316
      %p330 = scmp.eq.s32.totalorder %s30, 1
      %p331 = por %p329, %p330
      %p333 = scmp.ne.s32.totalorder %s316, %s332
      %p334 = scmp.eq.s32.totalorder %s30, 0
      %p335 = por %p333, %p334
      %p336 = scmp.le.s32.totalorder 1, %s24
      %p337 = scmp.lt.s32.totalorder %s24, 3
      %p338 = pnand %p336, %p337
      %p339 = pneg %p338
      // Predicated region
      $region9: #{tpu_custom_call.1} parent=5 // pred_check
        _
      $region10: #{tpu_custom_call.1} parent=5 // pred_check_branch
        %341 = sbr.rel (%p338) target = $region12
      $region11: #{tpu_custom_call.1} parent=5 // pred_region
        %s342 = ssub.s32 %s24, 1
        // Predicated region
        $region13: #{tpu_custom_call.1} parent=11 // pred_check
          %p343 = pneg %p71
        $region14: #{tpu_custom_call.1} parent=11 // pred_check_branch
          %345 = sbr.rel (%p343) target = $region16
        $region15: #{tpu_custom_call.1} parent=11 // pred_region
          _
        $region16: #{tpu_custom_call.1} parent=11 // pred_fallthru
          _
        // Predicated region
        $region17: #{tpu_custom_call.1} parent=11 // pred_check
          %p346 = pneg %p92
        $region18: #{tpu_custom_call.1} parent=11 // pred_check_branch
          %348 = sbr.rel (%p346) target = $region20
        $region19: #{tpu_custom_call.1} parent=11 // pred_region
          _
        $region20: #{tpu_custom_call.1} parent=11 // pred_fallthru
          _
        // Predicated region
        $region21: #{tpu_custom_call.1} parent=11 // pred_check
          %p349 = pneg %p113
        $region22: #{tpu_custom_call.1} parent=11 // pred_check_branch
          %351 = sbr.rel (%p349) target = $region24
        $region23: #{tpu_custom_call.1} parent=11 // pred_region
          %s353 = ssub.s32 16384, 16384
          %354 = vsyncadd [#allocation4], %s353
          %s355 = sshll.u32 [#allocation3], 4
          %s356 = int_to_ptr.vmem [resolvable:$true] %s355
          %361 = dma.hbm_to_vmem [thread:$0]  %s3, 16384, %s356, [#allocation4], 256, 256, 16
        $region24: #{tpu_custom_call.1} parent=11 // pred_fallthru
          _
        // Predicated region
        $region25: #{tpu_custom_call.1} parent=11 // pred_check
          %p362 = pneg %p134
        $region26: #{tpu_custom_call.1} parent=11 // pred_check_branch
          %364 = sbr.rel (%p362) target = $region28
        $region27: #{tpu_custom_call.1} parent=11 // pred_region
          _
        $region28: #{tpu_custom_call.1} parent=11 // pred_fallthru
          _
        // Predicated region
        $region29: #{tpu_custom_call.1} parent=11 // pred_check
          %p365 = pneg %p155
        $region30: #{tpu_custom_call.1} parent=11 // pred_check_branch
          %367 = sbr.rel (%p365) target = $region32
        $region31: #{tpu_custom_call.1} parent=11 // pred_region
          %s369 = ssub.s32 16384, 16384
          %370 = vsyncadd [#allocation6], %s369
          %s371 = sshll.u32 [#allocation5], 4
          %s372 = int_to_ptr.vmem [resolvable:$true] %s371
          %377 = dma.hbm_to_vmem [thread:$0]  %s5, 16384, %s372, [#allocation6], 256, 256, 16
        $region32: #{tpu_custom_call.1} parent=11 // pred_fallthru
          _
        // Predicated region
        $region33: #{tpu_custom_call.1} parent=11 // pred_check
          %p378 = pneg %p176
        $region34: #{tpu_custom_call.1} parent=11 // pred_check_branch
          %380 = sbr.rel (%p378) target = $region36
        $region35: #{tpu_custom_call.1} parent=11 // pred_region
          _
        $region36: #{tpu_custom_call.1} parent=11 // pred_fallthru
          _
        // Predicated region
        $region37: #{tpu_custom_call.1} parent=11 // pred_check
          %p381 = pneg %p197
        $region38: #{tpu_custom_call.1} parent=11 // pred_check_branch
          %383 = sbr.rel (%p381) target = $region40
        $region39: #{tpu_custom_call.1} parent=11 // pred_region
          %s385 = ssub.s32 16384, 16384
          %386 = vsyncadd [#allocation6], %s385
          %s387 = sshll.u32 [#allocation7], 4
          %s388 = int_to_ptr.vmem [resolvable:$true] %s387
          %393 = dma.hbm_to_vmem [thread:$0]  %s7, 16384, %s388, [#allocation6], 256, 256, 16
        $region40: #{tpu_custom_call.1} parent=11 // pred_fallthru
          _
        // Predicated region
        $region41: #{tpu_custom_call.1} parent=11 // pred_check
          %p394 = pneg %p218
        $region42: #{tpu_custom_call.1} parent=11 // pred_check_branch
          %396 = sbr.rel (%p394) target = $region44
        $region43: #{tpu_custom_call.1} parent=11 // pred_region
          _
        $region44: #{tpu_custom_call.1} parent=11 // pred_fallthru
          _
        // Predicated region
        $region45: #{tpu_custom_call.1} parent=11 // pred_check
          %p397 = pneg %p239
        $region46: #{tpu_custom_call.1} parent=11 // pred_check_branch
          %399 = sbr.rel (%p397) target = $region48
        $region47: #{tpu_custom_call.1} parent=11 // pred_region
          %s401 = ssub.s32 16384, 16384
          %402 = vsyncadd [#allocation9], %s401
          %s403 = sshll.u32 [#allocation8], 4
          %s404 = int_to_ptr.vmem [resolvable:$true] %s403
          %409 = dma.hbm_to_vmem [thread:$0]  %s9, 16384, %s404, [#allocation9], 256, 256, 16
        $region48: #{tpu_custom_call.1} parent=11 // pred_fallthru
          _
        // Predicated region
        $region49: #{tpu_custom_call.1} parent=11 // pred_check
          %p410 = pneg %p260
        $region50: #{tpu_custom_call.1} parent=11 // pred_check_branch
          %412 = sbr.rel (%p410) target = $region52
        $region51: #{tpu_custom_call.1} parent=11 // pred_region
          _
        $region52: #{tpu_custom_call.1} parent=11 // pred_fallthru
          _
        // Predicated region
        $region53: #{tpu_custom_call.1} parent=11 // pred_check
          %p413 = pneg %p281
        $region54: #{tpu_custom_call.1} parent=11 // pred_check_branch
          %415 = sbr.rel (%p413) target = $region56
        $region55: #{tpu_custom_call.1} parent=11 // pred_region
          _
        $region56: #{tpu_custom_call.1} parent=11 // pred_fallthru
          _
        // Predicated region
        $region57: #{tpu_custom_call.1} parent=11 // pred_check
          %p416 = pneg %p302
        $region58: #{tpu_custom_call.1} parent=11 // pred_check_branch
          %418 = sbr.rel (%p416) target = $region60
        $region59: #{tpu_custom_call.1} parent=11 // pred_region
          _
        $region60: #{tpu_custom_call.1} parent=11 // pred_fallthru
          _
      $region12: #{tpu_custom_call.1} parent=5 // pred_fallthru
        _
      %p419 = scmp.lt.s32.totalorder %s24, 2
      // Predicated region
      $region61: #{tpu_custom_call.1} parent=5 // pred_check
        %p420 = pneg %p419
      $region62: #{tpu_custom_call.1} parent=5 // pred_check_branch
        %422 = sbr.rel (%p420) target = $region64
      $region63: #{tpu_custom_call.1} parent=5 // pred_region
        // Predicated region
        $region65: #{tpu_custom_call.1} parent=63 // pred_check
          %p423 = pneg %p44
        $region66: #{tpu_custom_call.1} parent=63 // pred_check_branch
          %425 = sbr.rel (%p423) target = $region68
        $region67: #{tpu_custom_call.1} parent=63 // pred_region
          %s426 = smul.u32 16, %s24
          %p427 = scmp.lt.s32.totalorder %s426, 31
          %s428 = scalar_select %p427, %s426, 31
          %s429 = smul.addr %s428, 8
          %s430 = scalar_lea.vmem %s0, %s429
          %s431 = smul.u32 16, %s24
        $region68: #{tpu_custom_call.1} parent=63 // pred_fallthru
          _
      $region64: #{tpu_custom_call.1} parent=5 // pred_fallthru
        _
      %p432 = scmp.le.s32.totalorder 1, %s24
      %p433 = scmp.lt.s32.totalorder %s24, 3
      %p434 = pnand %p432, %p433
      %p435 = pneg %p434
      // Predicated region
      $region69: #{tpu_custom_call.1} parent=5 // pred_check
        _
      $region70: #{tpu_custom_call.1} parent=5 // pred_check_branch
        %437 = sbr.rel (%p434) target = $region72
      $region71: #{tpu_custom_call.1} parent=5 // pred_region
        %s438 = ssub.s32 %s24, 1
        // Predicated region
        $region73: #{tpu_custom_call.1} parent=71 // pred_check
          %p439 = pneg %p113
        $region74: #{tpu_custom_call.1} parent=71 // pred_check_branch
          %441 = sbr.rel (%p439) target = $region76
        $region75: #{tpu_custom_call.1} parent=71 // pred_region
          %442 = dma.done [#allocation4], 16384
        $region76: #{tpu_custom_call.1} parent=71 // pred_fallthru
          _
        // Predicated region
        $region77: #{tpu_custom_call.1} parent=71 // pred_check
          %p443 = pneg %p155
        $region78: #{tpu_custom_call.1} parent=71 // pred_check_branch
          %445 = sbr.rel (%p443) target = $region80
        $region79: #{tpu_custom_call.1} parent=71 // pred_region
          %446 = dma.done [#allocation6], 16384
        $region80: #{tpu_custom_call.1} parent=71 // pred_fallthru
          _
        // Predicated region
        $region81: #{tpu_custom_call.1} parent=71 // pred_check
          %p447 = pneg %p197
        $region82: #{tpu_custom_call.1} parent=71 // pred_check_branch
          %449 = sbr.rel (%p447) target = $region84
        $region83: #{tpu_custom_call.1} parent=71 // pred_region
          %450 = dma.done [#allocation6], 16384
        $region84: #{tpu_custom_call.1} parent=71 // pred_fallthru
          _
        // Predicated region
        $region85: #{tpu_custom_call.1} parent=71 // pred_check
          %p451 = pneg %p239
        $region86: #{tpu_custom_call.1} parent=71 // pred_check_branch
          %453 = sbr.rel (%p451) target = $region88
        $region87: #{tpu_custom_call.1} parent=71 // pred_region
          %454 = dma.done [#allocation9], 16384
        $region88: #{tpu_custom_call.1} parent=71 // pred_fallthru
          _
        %s455 = smul.u32 16, %s29
        %p456 = scmp.lt.s32.totalorder %s455, 31
        %s457 = scalar_select %p456, %s455, 31
        %s458 = smul.addr %s457, 8
        %s459 = scalar_lea.vmem %s0, %s458
        %p460 = pneg %p50
        %p461 = pneg %p47
        %p462 = pneg %p71
        %p463 = pneg %p68
        %p464 = pneg %p92
        %p465 = pneg %p89
        %p466 = pneg %p113
        %p467 = pneg %p110
        %p468 = pneg %p134
        %p469 = pneg %p131
        %p470 = pneg %p155
        %p471 = pneg %p152
        %p472 = pneg %p176
        %p473 = pneg %p173
        %p474 = pneg %p197
        %p475 = pneg %p194
        %p476 = pneg %p218
        %p477 = pneg %p215
        %p478 = pneg %p239
        %p479 = pneg %p236
        %p480 = pneg %p260
        %p481 = pneg %p257
        %p482 = pneg %p281
        %p483 = pneg %p278
        %p484 = pneg %p302
        %p485 = pneg %p299
        %p486 = pneg %p328
        %p487 = pneg %p325
        %s488 = smul.u32 16, %s29
        %p489 = scmp.lt.s32.totalorder %s488, 31
        %s490 = scalar_select %p489, %s488, 31
        %s491 = smul.addr %s490, 8
        %s492 = scalar_lea.vmem %s13, %s491
        %s493 = smul.u32 16, %s29
        %p494 = scmp.lt.s32.totalorder %s493, 31
        %s495 = scalar_select %p494, %s493, 31
        %s496 = smul.addr %s495, 8
        %s497 = scalar_lea.vmem %s0, %s496
        %s498 = smul.u32 16, %s29
        %s499 = smul.u32 16, %s29
        %p500 = scmp.lt.s32.totalorder %s499, 31
        %s501 = scalar_select %p500, %s499, 31
        %s502 = smul.addr %s501, 8
        %s503 = scalar_lea.vmem %s13, %s502
        %s504 = smul.u32 16, %s29
        %v506 = vld [vmem:[%s497] sm:$0xff]
        %v507 = vld [vmem:[%s497 + $0x8] sm:$0xff]
        %v508 = vld [vmem:[%s497 + $0x10] sm:$0xff]
        %v509 = vld [vmem:[%s497 + $0x18] sm:$0xff]
        %v510 = vld [vmem:[%s497 + $0x20] sm:$0xff]
        %v511 = vld [vmem:[%s497 + $0x28] sm:$0xff]
        %v512 = vld [vmem:[%s497 + $0x30] sm:$0xff]
        %v513 = vld [vmem:[%s497 + $0x38] sm:$0xff]
        %v514 = vld [vmem:[%s497 + $0x40] sm:$0xff]
        %v515 = vld [vmem:[%s497 + $0x48] sm:$0xff]
        %v516 = vld [vmem:[%s497 + $0x50] sm:$0xff]
        %v517 = vld [vmem:[%s497 + $0x58] sm:$0xff]
        %v518 = vld [vmem:[%s497 + $0x60] sm:$0xff]
        %v519 = vld [vmem:[%s497 + $0x68] sm:$0xff]
        %v520 = vld [vmem:[%s497 + $0x70] sm:$0xff]
        %v521 = vld [vmem:[%s497 + $0x78] sm:$0xff]
        %v522 = vpack.c.bf16 %v507, %v506
        %v523 = vpack.c.bf16 %v509, %v508
        %v524 = vpack.c.bf16 %v511, %v510
        %v525 = vpack.c.bf16 %v513, %v512
        %v526 = vpack.c.bf16 %v515, %v514
        %v527 = vpack.c.bf16 %v517, %v516
        %v528 = vpack.c.bf16 %v519, %v518
        %v529 = vpack.c.bf16 %v521, %v520
        %v530 = vld [vmem:[%s1] sm:$0xff]
        %v531 = vld [vmem:[%s1 + $0x8] sm:$0xff]
        %v532 = vld [vmem:[%s1 + $0x10] sm:$0xff]
        %v533 = vld [vmem:[%s1 + $0x18] sm:$0xff]
        %v534 = vld [vmem:[%s1 + $0x20] sm:$0xff]
        %v535 = vld [vmem:[%s1 + $0x28] sm:$0xff]
        %v536 = vld [vmem:[%s1 + $0x30] sm:$0xff]
        %v537 = vld [vmem:[%s1 + $0x38] sm:$0xff]
        %v538 = vld [vmem:[%s1 + $0x40] sm:$0xff]
        %v539 = vld [vmem:[%s1 + $0x48] sm:$0xff]
        %v540 = vld [vmem:[%s1 + $0x50] sm:$0xff]
        %v541 = vld [vmem:[%s1 + $0x58] sm:$0xff]
        %v542 = vld [vmem:[%s1 + $0x60] sm:$0xff]
        %v543 = vld [vmem:[%s1 + $0x68] sm:$0xff]
        %v544 = vld [vmem:[%s1 + $0x70] sm:$0x33]
        %v545 = vld [vmem:[%s1 + $0x78] sm:$0x33]
        %v546 = vld [vmem:[%s2] sm:$0xf]
        %v548 = vlaneseq
        %v549 = vshrl.u32 %v548, 7
        %v550 = vsub.s32 0, %v549
        %v551 = vrot.slane %v546, %v550
        %v552 = vlaneseq
        %v553 = vshrl.u32 %v552, 7
        %v554 = vsub.s32 1, %v553
        %v555 = vrot.slane %v546, %v554
        %v556 = vlaneseq
        %v557 = vshrl.u32 %v556, 7
        %v558 = vsub.s32 2, %v557
        %v559 = vrot.slane %v546, %v558
        %v560 = vlaneseq
        %v561 = vshrl.u32 %v560, 7
        %v562 = vsub.s32 3, %v561
        %v563 = vrot.slane %v546, %v562
        %v584 = vunpack.c.l.b16 %v530
        %v585 = vunpack.c.h.b16 %v530
        %v586 = vunpack.c.l.b16 %v531
        %v587 = vunpack.c.h.b16 %v531
        %v588 = vunpack.c.l.b16 %v532
        %v589 = vunpack.c.h.b16 %v532
        %v590 = vunpack.c.l.b16 %v533
        %v591 = vunpack.c.h.b16 %v533
        %v592 = vunpack.c.l.b16 %v534
        %v593 = vunpack.c.h.b16 %v534
        %v594 = vunpack.c.l.b16 %v535
        %v595 = vunpack.c.h.b16 %v535
        %v596 = vunpack.c.l.b16 %v536
        %v597 = vunpack.c.h.b16 %v536
        %v598 = vunpack.c.l.b16 %v537
        %v599 = vunpack.c.h.b16 %v537
        %v600 = vunpack.c.l.b16 %v538
        %v601 = vunpack.c.h.b16 %v538
        %v602 = vunpack.c.l.b16 %v539
        %v603 = vunpack.c.h.b16 %v539
        %v604 = vunpack.c.l.b16 %v540
        %v605 = vunpack.c.h.b16 %v540
        %v606 = vunpack.c.l.b16 %v541
        %v607 = vunpack.c.h.b16 %v541
        %v608 = vunpack.c.l.b16 %v542
        %v609 = vunpack.c.h.b16 %v542
        %v610 = vunpack.c.l.b16 %v543
        %v611 = vunpack.c.h.b16 %v543
        %v612 = vunpack.c.l.b16 %v544
        %v613 = vunpack.c.h.b16 %v544
        %v614 = vunpack.c.l.b16 %v545
        %v615 = vunpack.c.h.b16 %v545
        %v616 = vpack.c.b16 %v588, %v584
        %v617 = vpack.c.b16 %v589, %v585
        %v618 = vpack.c.b16 %v590, %v586
        %v619 = vpack.c.b16 %v591, %v587
        %v620 = vpack.c.b16 %v596, %v592
        %v621 = vpack.c.b16 %v597, %v593
        %v622 = vpack.c.b16 %v598, %v594
        %v623 = vpack.c.b16 %v599, %v595
        %v624 = vpack.c.b16 %v604, %v600
        %v625 = vpack.c.b16 %v605, %v601
        %v626 = vpack.c.b16 %v606, %v602
        %v627 = vpack.c.b16 %v607, %v603
        %v628 = vpack.c.b16 %v612, %v608
        %v629 = vpack.c.b16 %v613, %v609
        %v630 = vpack.c.b16 %v614, %v610
        %v631 = vpack.c.b16 %v615, %v611
        %vm644 = vcmask 490496
        %v646 = vsel %vm644, %v522, 0
        %v649 = vsel %vm644, %v523, 0
        %v652 = vsel %vm644, %v524, 0
        %v655 = vsel %vm644, %v525, 0
        %v658 = vsel %vm644, %v526, 0
        %v661 = vsel %vm644, %v527, 0
        %v664 = vsel %vm644, %v528, 0
        %v667 = vsel %vm644, %v529, 0
        %vm669 = vcmask 1045504
        %v671 = vsel %vm669, %v628, 0
        %v674 = vsel %vm669, %v629, 0
        %v677 = vsel %vm669, %v630, 0
        %v680 = vsel %vm669, %v631, 0
        %682 = vmatprep.subr.bf16.mxu0 %v617
        %683 = vmatpush1.bf16.msra.mxu0 %v616
        %684 = vmatprep.subr.bf16.mxu0 %v621
        %685 = vmatpush1.bf16.msra.mxu0 %v620
        %686 = vmatprep.subr.bf16.mxu0 %v625
        %687 = vmatpush1.bf16.msra.mxu0 %v624
        %688 = vmatprep.subr.bf16.mxu0 %v674
        %689 = vmatpush1.bf16.msra.mxu0 %v671
        %690 = vmatprep.subr.bf16.mxu0 0
        %691 = vmatpush1.bf16.msra.mxu0 0
        %692 = vmatprep.subr.bf16.mxu0 0
        %693 = vmatpush1.bf16.msra.mxu0 0
        %694 = vmatprep.subr.bf16.mxu0 0
        %695 = vmatpush1.bf16.msra.mxu0 0
        %696 = vmatprep.subr.bf16.mxu0 0
        %697 = vmatpush1.bf16.msra.mxu0 0
        %698 = vmatprep.subr.bf16.mxu0 0
        %699 = vmatpush1.bf16.msra.mxu0 0
        %700 = vmatprep.subr.bf16.mxu0 0
        %701 = vmatpush1.bf16.msra.mxu0 0
        %702 = vmatprep.subr.bf16.mxu0 0
        %703 = vmatpush1.bf16.msra.mxu0 0
        %704 = vmatprep.subr.bf16.mxu0 0
        %705 = vmatpush1.bf16.msra.mxu0 0
        %706 = vmatprep.subr.bf16.mxu0 0
        %707 = vmatpush1.bf16.msra.mxu0 0
        %708 = vmatprep.subr.bf16.mxu0 0
        %709 = vmatpush1.bf16.msra.mxu0 0
        %710 = vmatprep.subr.bf16.mxu0 0
        %711 = vmatpush1.bf16.msra.mxu0 0
        %712 = vmatprep.subr.bf16.mxu0 0
        %713 = vmatpush1.bf16.msra.mxu0 0
        %714 = vmatprep.mubr.bf16.mxu0 0
        %715 = vmatmul.mubr.bf16.gmra.mrb[0].mxu0 %v646
        %v716 = vpop.f32.mrb[0].mxu0
        %v717 = vadd.f32 %v551, %v716
        %v718 = vpop.f32.mrb[0].mxu0
        %v719 = vadd.f32 %v555, %v718
        %v720 = vpop.f32.mrb[0].mxu0
        %v721 = vadd.f32 %v551, %v720
        %v722 = vpop.f32.mrb[0].mxu0
        %v723 = vadd.f32 %v555, %v722
        %724 = vmatprep.mubr.bf16.mxu0 0
        %725 = vmatmul.mubr.bf16.gmra.mrb[0].mxu0 %v649
        %v726 = vpop.f32.mrb[0].mxu0
        %v727 = vadd.f32 %v551, %v726
        %v728 = vpop.f32.mrb[0].mxu0
        %v729 = vadd.f32 %v555, %v728
        %v730 = vpop.f32.mrb[0].mxu0
        %v731 = vadd.f32 %v551, %v730
        %v732 = vpop.f32.mrb[0].mxu0
        %v733 = vadd.f32 %v555, %v732
        %734 = vmatprep.mubr.bf16.mxu0 0
        %735 = vmatmul.mubr.bf16.gmra.mrb[0].mxu0 %v652
        %v736 = vpop.f32.mrb[0].mxu0
        %v737 = vadd.f32 %v551, %v736
        %v738 = vpop.f32.mrb[0].mxu0
        %v739 = vadd.f32 %v555, %v738
        %v740 = vpop.f32.mrb[0].mxu0
        %v741 = vadd.f32 %v551, %v740
        %v742 = vpop.f32.mrb[0].mxu0
        %v743 = vadd.f32 %v555, %v742
        %744 = vmatprep.mubr.bf16.mxu0 0
        %745 = vmatmul.mubr.bf16.gmra.mrb[0].mxu0 %v655
        %v746 = vpop.f32.mrb[0].mxu0
        %v747 = vadd.f32 %v551, %v746
        %v748 = vpop.f32.mrb[0].mxu0
        %v749 = vadd.f32 %v555, %v748
        %v750 = vpop.f32.mrb[0].mxu0
        %v751 = vadd.f32 %v551, %v750
        %v752 = vpop.f32.mrb[0].mxu0
        %v753 = vadd.f32 %v555, %v752
        %754 = vmatprep.mubr.bf16.mxu0 0
        %755 = vmatmul.mubr.bf16.gmra.mrb[0].mxu0 %v658
        %v756 = vpop.f32.mrb[0].mxu0
        %v757 = vadd.f32 %v551, %v756
        %v758 = vpop.f32.mrb[0].mxu0
        %v759 = vadd.f32 %v555, %v758
        %v760 = vpop.f32.mrb[0].mxu0
        %v761 = vadd.f32 %v551, %v760
        %v762 = vpop.f32.mrb[0].mxu0
        %v763 = vadd.f32 %v555, %v762
        %764 = vmatprep.mubr.bf16.mxu0 0
        %765 = vmatmul.mubr.bf16.gmra.mrb[0].mxu0 %v661
        %v766 = vpop.f32.mrb[0].mxu0
        %v767 = vadd.f32 %v551, %v766
        %v768 = vpop.f32.mrb[0].mxu0
        %v769 = vadd.f32 %v555, %v768
        %v770 = vpop.f32.mrb[0].mxu0
        %v771 = vadd.f32 %v551, %v770
        %v772 = vpop.f32.mrb[0].mxu0
        %v773 = vadd.f32 %v555, %v772
        %774 = vmatprep.mubr.bf16.mxu0 0
        %775 = vmatmul.mubr.bf16.gmra.mrb[0].mxu0 %v664
        %v776 = vpop.f32.mrb[0].mxu0
        %v777 = vadd.f32 %v551, %v776
        %v778 = vpop.f32.mrb[0].mxu0
        %v779 = vadd.f32 %v555, %v778
        %v780 = vpop.f32.mrb[0].mxu0
        %v781 = vadd.f32 %v551, %v780
        %v782 = vpop.f32.mrb[0].mxu0
        %v783 = vadd.f32 %v555, %v782
        %784 = vmatprep.mubr.bf16.mxu0 0
        %785 = vmatmul.mubr.bf16.gmra.mrb[0].mxu0 %v667
        %v786 = vpop.f32.mrb[0].mxu0
        %v787 = vadd.f32 %v551, %v786
        %v788 = vpop.f32.mrb[0].mxu0
        %v789 = vadd.f32 %v555, %v788
        %v790 = vpop.f32.mrb[0].mxu0
        %v791 = vadd.f32 %v551, %v790
        %v792 = vpop.f32.mrb[0].mxu0
        %v793 = vadd.f32 %v555, %v792
        %794 = vdwg.mxu0
        %795 = vmatprep.subr.bf16.mxu0 %v619
        %796 = vmatpush1.bf16.msra.mxu0 %v618
        %797 = vmatprep.subr.bf16.mxu0 %v623
        %798 = vmatpush1.bf16.msra.mxu0 %v622
        %799 = vmatprep.subr.bf16.mxu0 %v627
        %800 = vmatpush1.bf16.msra.mxu0 %v626
        %801 = vmatprep.subr.bf16.mxu0 %v680
        %802 = vmatpush1.bf16.msra.mxu0 %v677
        %803 = vmatprep.subr.bf16.mxu0 0
        %804 = vmatpush1.bf16.msra.mxu0 0
        %805 = vmatprep.subr.bf16.mxu0 0
        %806 = vmatpush1.bf16.msra.mxu0 0
        %807 = vmatprep.subr.bf16.mxu0 0
        %808 = vmatpush1.bf16.msra.mxu0 0
        %809 = vmatprep.subr.bf16.mxu0 0
        %810 = vmatpush1.bf16.msra.mxu0 0
        %811 = vmatprep.subr.bf16.mxu0 0
        %812 = vmatpush1.bf16.msra.mxu0 0
        %813 = vmatprep.subr.bf16.mxu0 0
        %814 = vmatpush1.bf16.msra.mxu0 0
        %815 = vmatprep.subr.bf16.mxu0 0
        %816 = vmatpush1.bf16.msra.mxu0 0
        %817 = vmatprep.subr.bf16.mxu0 0
        %818 = vmatpush1.bf16.msra.mxu0 0
        %819 = vmatprep.subr.bf16.mxu0 0
        %820 = vmatpush1.bf16.msra.mxu0 0
        %821 = vmatprep.subr.bf16.mxu0 0
        %822 = vmatpush1.bf16.msra.mxu0 0
        %823 = vmatprep.subr.bf16.mxu0 0
        %824 = vmatpush1.bf16.msra.mxu0 0
        %825 = vmatprep.subr.bf16.mxu0 0
        %826 = vmatpush1.bf16.msra.mxu0 0
        %827 = vmatprep.mubr.bf16.mxu0 0
        %828 = vmatmul.mubr.bf16.gmra.mrb[0].mxu0 %v646
        %v829 = vpop.f32.mrb[0].mxu0
        %v830 = vadd.f32 %v559, %v829
        %v831 = vpop.f32.mrb[0].mxu0
        %v832 = vadd.f32 %v563, %v831
        %v833 = vpop.f32.mrb[0].mxu0
        %v834 = vadd.f32 %v559, %v833
        %v835 = vpop.f32.mrb[0].mxu0
        %v836 = vadd.f32 %v563, %v835
        %837 = vmatprep.mubr.bf16.mxu0 0
        %838 = vmatmul.mubr.bf16.gmra.mrb[0].mxu0 %v649
        %v839 = vpop.f32.mrb[0].mxu0
        %v840 = vadd.f32 %v559, %v839
        %v841 = vpop.f32.mrb[0].mxu0
        %v842 = vadd.f32 %v563, %v841
        %v843 = vpop.f32.mrb[0].mxu0
        %v844 = vadd.f32 %v559, %v843
        %v845 = vpop.f32.mrb[0].mxu0
        %v846 = vadd.f32 %v563, %v845
        %847 = vmatprep.mubr.bf16.mxu0 0
        %848 = vmatmul.mubr.bf16.gmra.mrb[0].mxu0 %v652
        %v849 = vpop.f32.mrb[0].mxu0
        %v850 = vadd.f32 %v559, %v849
        %v851 = vpop.f32.mrb[0].mxu0
        %v852 = vadd.f32 %v563, %v851
        %v853 = vpop.f32.mrb[0].mxu0
        %v854 = vadd.f32 %v559, %v853
        %v855 = vpop.f32.mrb[0].mxu0
        %v856 = vadd.f32 %v563, %v855
        %857 = vmatprep.mubr.bf16.mxu0 0
        %858 = vmatmul.mubr.bf16.gmra.mrb[0].mxu0 %v655
        %v859 = vpop.f32.mrb[0].mxu0
        %v860 = vadd.f32 %v559, %v859
        %v861 = vpop.f32.mrb[0].mxu0
        %v862 = vadd.f32 %v563, %v861
        %v863 = vpop.f32.mrb[0].mxu0
        %v864 = vadd.f32 %v559, %v863
        %v865 = vpop.f32.mrb[0].mxu0
        %v866 = vadd.f32 %v563, %v865
        %867 = vmatprep.mubr.bf16.mxu0 0
        %868 = vmatmul.mubr.bf16.gmra.mrb[0].mxu0 %v658
        %v869 = vpop.f32.mrb[0].mxu0
        %v870 = vadd.f32 %v559, %v869
        %v871 = vpop.f32.mrb[0].mxu0
        %v872 = vadd.f32 %v563, %v871
        %v873 = vpop.f32.mrb[0].mxu0
        %v874 = vadd.f32 %v559, %v873
        %v875 = vpop.f32.mrb[0].mxu0
        %v876 = vadd.f32 %v563, %v875
        %877 = vmatprep.mubr.bf16.mxu0 0
        %878 = vmatmul.mubr.bf16.gmra.mrb[0].mxu0 %v661
        %v879 = vpop.f32.mrb[0].mxu0
        %v880 = vadd.f32 %v559, %v879
        %v881 = vpop.f32.mrb[0].mxu0
        %v882 = vadd.f32 %v563, %v881
        %v883 = vpop.f32.mrb[0].mxu0
        %v884 = vadd.f32 %v559, %v883
        %v885 = vpop.f32.mrb[0].mxu0
        %v886 = vadd.f32 %v563, %v885
        %887 = vmatprep.mubr.bf16.mxu0 0
        %888 = vmatmul.mubr.bf16.gmra.mrb[0].mxu0 %v664
        %v889 = vpop.f32.mrb[0].mxu0
        %v890 = vadd.f32 %v559, %v889
        %v891 = vpop.f32.mrb[0].mxu0
        %v892 = vadd.f32 %v563, %v891
        %v893 = vpop.f32.mrb[0].mxu0
        %v894 = vadd.f32 %v559, %v893
        %v895 = vpop.f32.mrb[0].mxu0
        %v896 = vadd.f32 %v563, %v895
        %897 = vmatprep.mubr.bf16.mxu0 0
        %898 = vmatmul.mubr.bf16.gmra.mrb[0].mxu0 %v667
        %v899 = vpop.f32.mrb[0].mxu0
        %v900 = vadd.f32 %v559, %v899
        %v901 = vpop.f32.mrb[0].mxu0
        %v902 = vadd.f32 %v563, %v901
        %v903 = vpop.f32.mrb[0].mxu0
        %v904 = vadd.f32 %v559, %v903
        %v905 = vpop.f32.mrb[0].mxu0
        %v906 = vadd.f32 %v563, %v905
        %907 = vdwg.mxu0
        %v908 = vpack.c.bf16 %v721, %v717
        %v909 = vpack.c.bf16 %v723, %v719
        %v910 = vpack.c.bf16 %v834, %v830
        %v911 = vpack.c.bf16 %v836, %v832
        %v912 = vpack.c.bf16 %v731, %v727
        %v913 = vpack.c.bf16 %v733, %v729
        %v914 = vpack.c.bf16 %v844, %v840
        %v915 = vpack.c.bf16 %v846, %v842
        %v916 = vpack.c.bf16 %v741, %v737
        %v917 = vpack.c.bf16 %v743, %v739
        %v918 = vpack.c.bf16 %v854, %v850
        %v919 = vpack.c.bf16 %v856, %v852
        %v920 = vpack.c.bf16 %v751, %v747
        %v921 = vpack.c.bf16 %v753, %v749
        %v922 = vpack.c.bf16 %v864, %v860
        %v923 = vpack.c.bf16 %v866, %v862
        %v924 = vpack.c.bf16 %v761, %v757
        %v925 = vpack.c.bf16 %v763, %v759
        %v926 = vpack.c.bf16 %v874, %v870
        %v927 = vpack.c.bf16 %v876, %v872
        %v928 = vpack.c.bf16 %v771, %v767
        %v929 = vpack.c.bf16 %v773, %v769
        %v930 = vpack.c.bf16 %v884, %v880
        %v931 = vpack.c.bf16 %v886, %v882
        %v932 = vpack.c.bf16 %v781, %v777
        %v933 = vpack.c.bf16 %v783, %v779
        %v934 = vpack.c.bf16 %v894, %v890
        %v935 = vpack.c.bf16 %v896, %v892
        %v936 = vpack.c.bf16 %v791, %v787
        %v937 = vpack.c.bf16 %v793, %v789
        %v938 = vpack.c.bf16 %v904, %v900
        %v939 = vpack.c.bf16 %v906, %v902
        %v940 = vld [vmem:[#allocation3] sm:$0xff]
        %v941 = vld [vmem:[#allocation3 + $0x8] sm:$0xff]
        %v942 = vld [vmem:[#allocation3 + $0x10] sm:$0xff]
        %v943 = vld [vmem:[#allocation3 + $0x18] sm:$0xff]
        %v944 = vld [vmem:[#allocation3 + $0x20] sm:$0xff]
        %v945 = vld [vmem:[#allocation3 + $0x28] sm:$0xff]
        %v946 = vld [vmem:[#allocation3 + $0x30] sm:$0xff]
        %v947 = vld [vmem:[#allocation3 + $0x38] sm:$0xff]
        %v948 = vld [vmem:[#allocation3 + $0x40] sm:$0xff]
        %v949 = vld [vmem:[#allocation3 + $0x48] sm:$0xff]
        %v950 = vld [vmem:[#allocation3 + $0x50] sm:$0xff]
        %v951 = vld [vmem:[#allocation3 + $0x58] sm:$0xff]
        %v952 = vld [vmem:[#allocation3 + $0x60] sm:$0xff]
        %v953 = vld [vmem:[#allocation3 + $0x68] sm:$0xff]
        %v954 = vld [vmem:[#allocation3 + $0x70] sm:$0xff]
        %v955 = vld [vmem:[#allocation3 + $0x78] sm:$0xff]
        %v956 = vld [vmem:[#allocation3 + $0x80] sm:$0xff]
        %v957 = vld [vmem:[#allocation3 + $0x88] sm:$0xff]
        %v958 = vld [vmem:[#allocation3 + $0x90] sm:$0xff]
        %v959 = vld [vmem:[#allocation3 + $0x98] sm:$0xff]
        %v960 = vld [vmem:[#allocation3 + $0xa0] sm:$0xff]
        %v961 = vld [vmem:[#allocation3 + $0xa8] sm:$0xff]
        %v962 = vld [vmem:[#allocation3 + $0xb0] sm:$0xff]
        %v963 = vld [vmem:[#allocation3 + $0xb8] sm:$0xff]
        %v964 = vld [vmem:[#allocation3 + $0xc0] sm:$0xff]
        %v965 = vld [vmem:[#allocation3 + $0xc8] sm:$0xff]
        %v966 = vld [vmem:[#allocation3 + $0xd0] sm:$0xff]
        %v967 = vld [vmem:[#allocation3 + $0xd8] sm:$0xff]
        %v968 = vld [vmem:[#allocation3 + $0xe0] sm:$0xff]
        %v969 = vld [vmem:[#allocation3 + $0xe8] sm:$0xff]
        %v970 = vld [vmem:[#allocation3 + $0xf0] sm:$0xff]
        %v971 = vld [vmem:[#allocation3 + $0xf8] sm:$0xff]
        %v972 = vld [vmem:[#allocation3 + $0x100] sm:$0xff]
        %v973 = vld [vmem:[#allocation3 + $0x108] sm:$0xff]
        %v974 = vld [vmem:[#allocation3 + $0x110] sm:$0xff]
        %v975 = vld [vmem:[#allocation3 + $0x118] sm:$0xff]
        %v976 = vld [vmem:[#allocation3 + $0x120] sm:$0xff]
        %v977 = vld [vmem:[#allocation3 + $0x128] sm:$0xff]
        %v978 = vld [vmem:[#allocation3 + $0x130] sm:$0xff]
        %v979 = vld [vmem:[#allocation3 + $0x138] sm:$0xff]
        %v980 = vld [vmem:[#allocation3 + $0x140] sm:$0xff]
        %v981 = vld [vmem:[#allocation3 + $0x148] sm:$0xff]
        %v982 = vld [vmem:[#allocation3 + $0x150] sm:$0xff]
        %v983 = vld [vmem:[#allocation3 + $0x158] sm:$0xff]
        %v984 = vld [vmem:[#allocation3 + $0x160] sm:$0xff]
        %v985 = vld [vmem:[#allocation3 + $0x168] sm:$0xff]
        %v986 = vld [vmem:[#allocation3 + $0x170] sm:$0xff]
        %v987 = vld [vmem:[#allocation3 + $0x178] sm:$0xff]
        %v988 = vld [vmem:[#allocation3 + $0x180] sm:$0xff]
        %v989 = vld [vmem:[#allocation3 + $0x188] sm:$0xff]
        %v990 = vld [vmem:[#allocation3 + $0x190] sm:$0xff]
        %v991 = vld [vmem:[#allocation3 + $0x198] sm:$0xff]
        %v992 = vld [vmem:[#allocation3 + $0x1a0] sm:$0xff]
        %v993 = vld [vmem:[#allocation3 + $0x1a8] sm:$0xff]
        %v994 = vld [vmem:[#allocation3 + $0x1b0] sm:$0xff]
        %v995 = vld [vmem:[#allocation3 + $0x1b8] sm:$0xff]
        %v996 = vld [vmem:[#allocation3 + $0x1c0] sm:$0xff]
        %v997 = vld [vmem:[#allocation3 + $0x1c8] sm:$0xff]
        %v998 = vld [vmem:[#allocation3 + $0x1d0] sm:$0xff]
        %v999 = vld [vmem:[#allocation3 + $0x1d8] sm:$0xff]
        %v1000 = vld [vmem:[#allocation3 + $0x1e0] sm:$0xff]
        %v1001 = vld [vmem:[#allocation3 + $0x1e8] sm:$0xff]
        %v1002 = vld [vmem:[#allocation3 + $0x1f0] sm:$0xff]
        %v1003 = vld [vmem:[#allocation3 + $0x1f8] sm:$0xff]
        %v1004 = vld [vmem:[#allocation3 + $0x200] sm:$0xff]
        %v1005 = vld [vmem:[#allocation3 + $0x208] sm:$0xff]
        %v1006 = vld [vmem:[#allocation3 + $0x210] sm:$0xff]
        %v1007 = vld [vmem:[#allocation3 + $0x218] sm:$0xff]
        %v1008 = vld [vmem:[#allocation3 + $0x220] sm:$0xff]
        %v1009 = vld [vmem:[#allocation3 + $0x228] sm:$0xff]
        %v1010 = vld [vmem:[#allocation3 + $0x230] sm:$0xff]
        %v1011 = vld [vmem:[#allocation3 + $0x238] sm:$0xff]
        %v1012 = vld [vmem:[#allocation3 + $0x240] sm:$0xff]
        %v1013 = vld [vmem:[#allocation3 + $0x248] sm:$0xff]
        %v1014 = vld [vmem:[#allocation3 + $0x250] sm:$0xff]
        %v1015 = vld [vmem:[#allocation3 + $0x258] sm:$0xff]
        %v1016 = vld [vmem:[#allocation3 + $0x260] sm:$0xff]
        %v1017 = vld [vmem:[#allocation3 + $0x268] sm:$0xff]
        %v1018 = vld [vmem:[#allocation3 + $0x270] sm:$0xff]
        %v1019 = vld [vmem:[#allocation3 + $0x278] sm:$0xff]
        %v1020 = vld [vmem:[#allocation3 + $0x280] sm:$0xff]
        %v1021 = vld [vmem:[#allocation3 + $0x288] sm:$0xff]
        %v1022 = vld [vmem:[#allocation3 + $0x290] sm:$0xff]
        %v1023 = vld [vmem:[#allocation3 + $0x298] sm:$0xff]
        %v1024 = vld [vmem:[#allocation3 + $0x2a0] sm:$0xff]
        %v1025 = vld [vmem:[#allocation3 + $0x2a8] sm:$0xff]
        %v1026 = vld [vmem:[#allocation3 + $0x2b0] sm:$0xff]
        %v1027 = vld [vmem:[#allocation3 + $0x2b8] sm:$0xff]
        %v1028 = vld [vmem:[#allocation3 + $0x2c0] sm:$0xff]
        %v1029 = vld [vmem:[#allocation3 + $0x2c8] sm:$0xff]
        %v1030 = vld [vmem:[#allocation3 + $0x2d0] sm:$0xff]
        %v1031 = vld [vmem:[#allocation3 + $0x2d8] sm:$0xff]
        %v1032 = vld [vmem:[#allocation3 + $0x2e0] sm:$0xff]
        %v1033 = vld [vmem:[#allocation3 + $0x2e8] sm:$0xff]
        %v1034 = vld [vmem:[#allocation3 + $0x2f0] sm:$0xff]
        %v1035 = vld [vmem:[#allocation3 + $0x2f8] sm:$0xff]
        %v1036 = vld [vmem:[#allocation3 + $0x300] sm:$0xff]
        %v1037 = vld [vmem:[#allocation3 + $0x308] sm:$0xff]
        %v1038 = vld [vmem:[#allocation3 + $0x310] sm:$0xff]
        %v1039 = vld [vmem:[#allocation3 + $0x318] sm:$0xff]
        %v1040 = vld [vmem:[#allocation3 + $0x320] sm:$0xff]
        %v1041 = vld [vmem:[#allocation3 + $0x328] sm:$0xff]
        %v1042 = vld [vmem:[#allocation3 + $0x330] sm:$0xff]
        %v1043 = vld [vmem:[#allocation3 + $0x338] sm:$0xff]
        %v1044 = vld [vmem:[#allocation3 + $0x340] sm:$0xff]
        %v1045 = vld [vmem:[#allocation3 + $0x348] sm:$0xff]
        %v1046 = vld [vmem:[#allocation3 + $0x350] sm:$0xff]
        %v1047 = vld [vmem:[#allocation3 + $0x358] sm:$0xff]
        %v1048 = vld [vmem:[#allocation3 + $0x360] sm:$0xff]
        %v1049 = vld [vmem:[#allocation3 + $0x368] sm:$0xff]
        %v1050 = vld [vmem:[#allocation3 + $0x370] sm:$0xff]
        %v1051 = vld [vmem:[#allocation3 + $0x378] sm:$0xff]
        %v1052 = vld [vmem:[#allocation3 + $0x380] sm:$0xff]
        %v1053 = vld [vmem:[#allocation3 + $0x388] sm:$0xff]
        %v1054 = vld [vmem:[#allocation3 + $0x390] sm:$0xff]
        %v1055 = vld [vmem:[#allocation3 + $0x398] sm:$0xff]
        %v1056 = vld [vmem:[#allocation3 + $0x3a0] sm:$0xff]
        %v1057 = vld [vmem:[#allocation3 + $0x3a8] sm:$0xff]
        %v1058 = vld [vmem:[#allocation3 + $0x3b0] sm:$0xff]
        %v1059 = vld [vmem:[#allocation3 + $0x3b8] sm:$0xff]
        %v1060 = vld [vmem:[#allocation3 + $0x3c0] sm:$0xff]
        %v1061 = vld [vmem:[#allocation3 + $0x3c8] sm:$0xff]
        %v1062 = vld [vmem:[#allocation3 + $0x3d0] sm:$0xff]
        %v1063 = vld [vmem:[#allocation3 + $0x3d8] sm:$0xff]
        %v1064 = vld [vmem:[#allocation3 + $0x3e0] sm:$0xff]
        %v1065 = vld [vmem:[#allocation3 + $0x3e8] sm:$0xff]
        %v1066 = vld [vmem:[#allocation3 + $0x3f0] sm:$0xff]
        %v1067 = vld [vmem:[#allocation3 + $0x3f8] sm:$0xff]
        %v1068 = vld [vmem:[%s4] sm:$0xf]
        %v1070 = vlaneseq
        %v1071 = vshrl.u32 %v1070, 7
        %v1072 = vsub.s32 0, %v1071
        %v1073 = vrot.slane %v1068, %v1072
        %v1074 = vlaneseq
        %v1075 = vshrl.u32 %v1074, 7
        %v1076 = vsub.s32 1, %v1075
        %v1077 = vrot.slane %v1068, %v1076
        %v1078 = vlaneseq
        %v1079 = vshrl.u32 %v1078, 7
        %v1080 = vsub.s32 2, %v1079
        %v1081 = vrot.slane %v1068, %v1080
        %v1082 = vlaneseq
        %v1083 = vshrl.u32 %v1082, 7
        %v1084 = vsub.s32 3, %v1083
        %v1085 = vrot.slane %v1068, %v1084
        %v1218 = vunpack.c.l.b16 %v940
        %v1219 = vunpack.c.h.b16 %v940
        %v1220 = vunpack.c.l.b16 %v941
        %v1221 = vunpack.c.h.b16 %v941
        %v1222 = vunpack.c.l.b16 %v942
        %v1223 = vunpack.c.h.b16 %v942
        %v1224 = vunpack.c.l.b16 %v943
        %v1225 = vunpack.c.h.b16 %v943
        %v1226 = vunpack.c.l.b16 %v944
        %v1227 = vunpack.c.h.b16 %v944
        %v1228 = vunpack.c.l.b16 %v945
        %v1229 = vunpack.c.h.b16 %v945
        %v1230 = vunpack.c.l.b16 %v946
        %v1231 = vunpack.c.h.b16 %v946
        %v1232 = vunpack.c.l.b16 %v947
        %v1233 = vunpack.c.h.b16 %v947
        %v1234 = vunpack.c.l.b16 %v948
        %v1235 = vunpack.c.h.b16 %v948
        %v1236 = vunpack.c.l.b16 %v949
        %v1237 = vunpack.c.h.b16 %v949
        %v1238 = vunpack.c.l.b16 %v950
        %v1239 = vunpack.c.h.b16 %v950
        %v1240 = vunpack.c.l.b16 %v951
        %v1241 = vunpack.c.h.b16 %v951
        %v1242 = vunpack.c.l.b16 %v952
        %v1243 = vunpack.c.h.b16 %v952
        %v1244 = vunpack.c.l.b16 %v953
        %v1245 = vunpack.c.h.b16 %v953
        %v1246 = vunpack.c.l.b16 %v954
        %v1247 = vunpack.c.h.b16 %v954
        %v1248 = vunpack.c.l.b16 %v955
        %v1249 = vunpack.c.h.b16 %v955
        %v1250 = vunpack.c.l.b16 %v956
        %v1251 = vunpack.c.h.b16 %v956
        %v1252 = vunpack.c.l.b16 %v957
        %v1253 = vunpack.c.h.b16 %v957
        %v1254 = vunpack.c.l.b16 %v958
        %v1255 = vunpack.c.h.b16 %v958
        %v1256 = vunpack.c.l.b16 %v959
        %v1257 = vunpack.c.h.b16 %v959
        %v1258 = vunpack.c.l.b16 %v960
        %v1259 = vunpack.c.h.b16 %v960
        %v1260 = vunpack.c.l.b16 %v961
        %v1261 = vunpack.c.h.b16 %v961
        %v1262 = vunpack.c.l.b16 %v962
        %v1263 = vunpack.c.h.b16 %v962
        %v1264 = vunpack.c.l.b16 %v963
        %v1265 = vunpack.c.h.b16 %v963
        %v1266 = vunpack.c.l.b16 %v964
        %v1267 = vunpack.c.h.b16 %v964
        %v1268 = vunpack.c.l.b16 %v965
        %v1269 = vunpack.c.h.b16 %v965
        %v1270 = vunpack.c.l.b16 %v966
        %v1271 = vunpack.c.h.b16 %v966
        %v1272 = vunpack.c.l.b16 %v967
        %v1273 = vunpack.c.h.b16 %v967
        %v1274 = vunpack.c.l.b16 %v968
        %v1275 = vunpack.c.h.b16 %v968
        %v1276 = vunpack.c.l.b16 %v969
        %v1277 = vunpack.c.h.b16 %v969
        %v1278 = vunpack.c.l.b16 %v970
        %v1279 = vunpack.c.h.b16 %v970
        %v1280 = vunpack.c.l.b16 %v971
        %v1281 = vunpack.c.h.b16 %v971
        %v1282 = vunpack.c.l.b16 %v972
        %v1283 = vunpack.c.h.b16 %v972
        %v1284 = vunpack.c.l.b16 %v973
        %v1285 = vunpack.c.h.b16 %v973
        %v1286 = vunpack.c.l.b16 %v974
        %v1287 = vunpack.c.h.b16 %v974
        %v1288 = vunpack.c.l.b16 %v975
        %v1289 = vunpack.c.h.b16 %v975
        %v1290 = vunpack.c.l.b16 %v976
        %v1291 = vunpack.c.h.b16 %v976
        %v1292 = vunpack.c.l.b16 %v977
        %v1293 = vunpack.c.h.b16 %v977
        %v1294 = vunpack.c.l.b16 %v978
        %v1295 = vunpack.c.h.b16 %v978
        %v1296 = vunpack.c.l.b16 %v979
        %v1297 = vunpack.c.h.b16 %v979
        %v1298 = vunpack.c.l.b16 %v980
        %v1299 = vunpack.c.h.b16 %v980
        %v1300 = vunpack.c.l.b16 %v981
        %v1301 = vunpack.c.h.b16 %v981
        %v1302 = vunpack.c.l.b16 %v982
        %v1303 = vunpack.c.h.b16 %v982
        %v1304 = vunpack.c.l.b16 %v983
        %v1305 = vunpack.c.h.b16 %v983
        %v1306 = vunpack.c.l.b16 %v984
        %v1307 = vunpack.c.h.b16 %v984
        %v1308 = vunpack.c.l.b16 %v985
        %v1309 = vunpack.c.h.b16 %v985
        %v1310 = vunpack.c.l.b16 %v986
        %v1311 = vunpack.c.h.b16 %v986
        %v1312 = vunpack.c.l.b16 %v987
        %v1313 = vunpack.c.h.b16 %v987
        %v1314 = vunpack.c.l.b16 %v988
        %v1315 = vunpack.c.h.b16 %v988
        %v1316 = vunpack.c.l.b16 %v989
        %v1317 = vunpack.c.h.b16 %v989
        %v1318 = vunpack.c.l.b16 %v990
        %v1319 = vunpack.c.h.b16 %v990
        %v1320 = vunpack.c.l.b16 %v991
        %v1321 = vunpack.c.h.b16 %v991
        %v1322 = vunpack.c.l.b16 %v992
        %v1323 = vunpack.c.h.b16 %v992
        %v1324 = vunpack.c.l.b16 %v993
        %v1325 = vunpack.c.h.b16 %v993
        %v1326 = vunpack.c.l.b16 %v994
        %v1327 = vunpack.c.h.b16 %v994
        %v1328 = vunpack.c.l.b16 %v995
        %v1329 = vunpack.c.h.b16 %v995
        %v1330 = vunpack.c.l.b16 %v996
        %v1331 = vunpack.c.h.b16 %v996
        %v1332 = vunpack.c.l.b16 %v997
        %v1333 = vunpack.c.h.b16 %v997
        %v1334 = vunpack.c.l.b16 %v998
        %v1335 = vunpack.c.h.b16 %v998
        %v1336 = vunpack.c.l.b16 %v999
        %v1337 = vunpack.c.h.b16 %v999
        %v1338 = vunpack.c.l.b16 %v1000
        %v1339 = vunpack.c.h.b16 %v1000
        %v1340 = vunpack.c.l.b16 %v1001
        %v1341 = vunpack.c.h.b16 %v1001
        %v1342 = vunpack.c.l.b16 %v1002
        %v1343 = vunpack.c.h.b16 %v1002
        %v1344 = vunpack.c.l.b16 %v1003
        %v1345 = vunpack.c.h.b16 %v1003
        %v1346 = vunpack.c.l.b16 %v1004
        %v1347 = vunpack.c.h.b16 %v1004
        %v1348 = vunpack.c.l.b16 %v1005
        %v1349 = vunpack.c.h.b16 %v1005
        %v1350 = vunpack.c.l.b16 %v1006
        %v1351 = vunpack.c.h.b16 %v1006
        %v1352 = vunpack.c.l.b16 %v1007
        %v1353 = vunpack.c.h.b16 %v1007
        %v1354 = vunpack.c.l.b16 %v1008
        %v1355 = vunpack.c.h.b16 %v1008
        %v1356 = vunpack.c.l.b16 %v1009
        %v1357 = vunpack.c.h.b16 %v1009
        %v1358 = vunpack.c.l.b16 %v1010
        %v1359 = vunpack.c.h.b16 %v1010
        %v1360 = vunpack.c.l.b16 %v1011
        %v1361 = vunpack.c.h.b16 %v1011
        %v1362 = vunpack.c.l.b16 %v1012
        %v1363 = vunpack.c.h.b16 %v1012
        %v1364 = vunpack.c.l.b16 %v1013
        %v1365 = vunpack.c.h.b16 %v1013
        %v1366 = vunpack.c.l.b16 %v1014
        %v1367 = vunpack.c.h.b16 %v1014
        %v1368 = vunpack.c.l.b16 %v1015
        %v1369 = vunpack.c.h.b16 %v1015
        %v1370 = vunpack.c.l.b16 %v1016
        %v1371 = vunpack.c.h.b16 %v1016
        %v1372 = vunpack.c.l.b16 %v1017
        %v1373 = vunpack.c.h.b16 %v1017
        %v1374 = vunpack.c.l.b16 %v1018
        %v1375 = vunpack.c.h.b16 %v1018
        %v1376 = vunpack.c.l.b16 %v1019
        %v1377 = vunpack.c.h.b16 %v1019
        %v1378 = vunpack.c.l.b16 %v1020
        %v1379 = vunpack.c.h.b16 %v1020
        %v1380 = vunpack.c.l.b16 %v1021
        %v1381 = vunpack.c.h.b16 %v1021
        %v1382 = vunpack.c.l.b16 %v1022
        %v1383 = vunpack.c.h.b16 %v1022
        %v1384 = vunpack.c.l.b16 %v1023
        %v1385 = vunpack.c.h.b16 %v1023
        %v1386 = vunpack.c.l.b16 %v1024
        %v1387 = vunpack.c.h.b16 %v1024
        %v1388 = vunpack.c.l.b16 %v1025
        %v1389 = vunpack.c.h.b16 %v1025
        %v1390 = vunpack.c.l.b16 %v1026
        %v1391 = vunpack.c.h.b16 %v1026
        %v1392 = vunpack.c.l.b16 %v1027
        %v1393 = vunpack.c.h.b16 %v1027
        %v1394 = vunpack.c.l.b16 %v1028
        %v1395 = vunpack.c.h.b16 %v1028
        %v1396 = vunpack.c.l.b16 %v1029
        %v1397 = vunpack.c.h.b16 %v1029
        %v1398 = vunpack.c.l.b16 %v1030
        %v1399 = vunpack.c.h.b16 %v1030
        %v1400 = vunpack.c.l.b16 %v1031
        %v1401 = vunpack.c.h.b16 %v1031
        %v1402 = vunpack.c.l.b16 %v1032
        %v1403 = vunpack.c.h.b16 %v1032
        %v1404 = vunpack.c.l.b16 %v1033
        %v1405 = vunpack.c.h.b16 %v1033
        %v1406 = vunpack.c.l.b16 %v1034
        %v1407 = vunpack.c.h.b16 %v1034
        %v1408 = vunpack.c.l.b16 %v1035
        %v1409 = vunpack.c.h.b16 %v1035
        %v1410 = vunpack.c.l.b16 %v1036
        %v1411 = vunpack.c.h.b16 %v1036
        %v1412 = vunpack.c.l.b16 %v1037
        %v1413 = vunpack.c.h.b16 %v1037
        %v1414 = vunpack.c.l.b16 %v1038
        %v1415 = vunpack.c.h.b16 %v1038
        %v1416 = vunpack.c.l.b16 %v1039
        %v1417 = vunpack.c.h.b16 %v1039
        %v1418 = vunpack.c.l.b16 %v1040
        %v1419 = vunpack.c.h.b16 %v1040
        %v1420 = vunpack.c.l.b16 %v1041
        %v1421 = vunpack.c.h.b16 %v1041
        %v1422 = vunpack.c.l.b16 %v1042
        %v1423 = vunpack.c.h.b16 %v1042
        %v1424 = vunpack.c.l.b16 %v1043
        %v1425 = vunpack.c.h.b16 %v1043
        %v1426 = vunpack.c.l.b16 %v1044
        %v1427 = vunpack.c.h.b16 %v1044
        %v1428 = vunpack.c.l.b16 %v1045
        %v1429 = vunpack.c.h.b16 %v1045
        %v1430 = vunpack.c.l.b16 %v1046
        %v1431 = vunpack.c.h.b16 %v1046
        %v1432 = vunpack.c.l.b16 %v1047
        %v1433 = vunpack.c.h.b16 %v1047
        %v1434 = vunpack.c.l.b16 %v1048
        %v1435 = vunpack.c.h.b16 %v1048
        %v1436 = vunpack.c.l.b16 %v1049
        %v1437 = vunpack.c.h.b16 %v1049
        %v1438 = vunpack.c.l.b16 %v1050
        %v1439 = vunpack.c.h.b16 %v1050
        %v1440 = vunpack.c.l.b16 %v1051
        %v1441 = vunpack.c.h.b16 %v1051
        %v1442 = vunpack.c.l.b16 %v1052
        %v1443 = vunpack.c.h.b16 %v1052
        %v1444 = vunpack.c.l.b16 %v1053
        %v1445 = vunpack.c.h.b16 %v1053
        %v1446 = vunpack.c.l.b16 %v1054
        %v1447 = vunpack.c.h.b16 %v1054
        %v1448 = vunpack.c.l.b16 %v1055
        %v1449 = vunpack.c.h.b16 %v1055
        %v1450 = vunpack.c.l.b16 %v1056
        %v1451 = vunpack.c.h.b16 %v1056
        %v1452 = vunpack.c.l.b16 %v1057
        %v1453 = vunpack.c.h.b16 %v1057
        %v1454 = vunpack.c.l.b16 %v1058
        %v1455 = vunpack.c.h.b16 %v1058
        %v1456 = vunpack.c.l.b16 %v1059
        %v1457 = vunpack.c.h.b16 %v1059
        %v1458 = vunpack.c.l.b16 %v1060
        %v1459 = vunpack.c.h.b16 %v1060
        %v1460 = vunpack.c.l.b16 %v1061
        %v1461 = vunpack.c.h.b16 %v1061
        %v1462 = vunpack.c.l.b16 %v1062
        %v1463 = vunpack.c.h.b16 %v1062
        %v1464 = vunpack.c.l.b16 %v1063
        %v1465 = vunpack.c.h.b16 %v1063
        %v1466 = vunpack.c.l.b16 %v1064
        %v1467 = vunpack.c.h.b16 %v1064
        %v1468 = vunpack.c.l.b16 %v1065
        %v1469 = vunpack.c.h.b16 %v1065
        %v1470 = vunpack.c.l.b16 %v1066
        %v1471 = vunpack.c.h.b16 %v1066
        %v1472 = vunpack.c.l.b16 %v1067
        %v1473 = vunpack.c.h.b16 %v1067
        %v1474 = vpack.c.b16 %v1222, %v1218
        %v1475 = vpack.c.b16 %v1223, %v1219
        %v1476 = vpack.c.b16 %v1224, %v1220
        %v1477 = vpack.c.b16 %v1225, %v1221
        %v1478 = vpack.c.b16 %v1230, %v1226
        %v1479 = vpack.c.b16 %v1231, %v1227
        %v1480 = vpack.c.b16 %v1232, %v1228
        %v1481 = vpack.c.b16 %v1233, %v1229
        %v1482 = vpack.c.b16 %v1238, %v1234
        %v1483 = vpack.c.b16 %v1239, %v1235
        %v1484 = vpack.c.b16 %v1240, %v1236
        %v1485 = vpack.c.b16 %v1241, %v1237
        %v1486 = vpack.c.b16 %v1246, %v1242
        %v1487 = vpack.c.b16 %v1247, %v1243
        %v1488 = vpack.c.b16 %v1248, %v1244
        %v1489 = vpack.c.b16 %v1249, %v1245
        %v1490 = vpack.c.b16 %v1254, %v1250
        %v1491 = vpack.c.b16 %v1255, %v1251
        %v1492 = vpack.c.b16 %v1256, %v1252
        %v1493 = vpack.c.b16 %v1257, %v1253
        %v1494 = vpack.c.b16 %v1262, %v1258
        %v1495 = vpack.c.b16 %v1263, %v1259
        %v1496 = vpack.c.b16 %v1264, %v1260
        %v1497 = vpack.c.b16 %v1265, %v1261
        %v1498 = vpack.c.b16 %v1270, %v1266
        %v1499 = vpack.c.b16 %v1271, %v1267
        %v1500 = vpack.c.b16 %v1272, %v1268
        %v1501 = vpack.c.b16 %v1273, %v1269
        %v1502 = vpack.c.b16 %v1278, %v1274
        %v1503 = vpack.c.b16 %v1279, %v1275
        %v1504 = vpack.c.b16 %v1280, %v1276
        %v1505 = vpack.c.b16 %v1281, %v1277
        %v1506 = vpack.c.b16 %v1286, %v1282
        %v1507 = vpack.c.b16 %v1287, %v1283
        %v1508 = vpack.c.b16 %v1288, %v1284
        %v1509 = vpack.c.b16 %v1289, %v1285
        %v1510 = vpack.c.b16 %v1294, %v1290
        %v1511 = vpack.c.b16 %v1295, %v1291
        %v1512 = vpack.c.b16 %v1296, %v1292
        %v1513 = vpack.c.b16 %v1297, %v1293
        %v1514 = vpack.c.b16 %v1302, %v1298
        %v1515 = vpack.c.b16 %v1303, %v1299
        %v1516 = vpack.c.b16 %v1304, %v1300
        %v1517 = vpack.c.b16 %v1305, %v1301
        %v1518 = vpack.c.b16 %v1310, %v1306
        %v1519 = vpack.c.b16 %v1311, %v1307
        %v1520 = vpack.c.b16 %v1312, %v1308
        %v1521 = vpack.c.b16 %v1313, %v1309
        %v1522 = vpack.c.b16 %v1318, %v1314
        %v1523 = vpack.c.b16 %v1319, %v1315
        %v1524 = vpack.c.b16 %v1320, %v1316
        %v1525 = vpack.c.b16 %v1321, %v1317
        %v1526 = vpack.c.b16 %v1326, %v1322
        %v1527 = vpack.c.b16 %v1327, %v1323
        %v1528 = vpack.c.b16 %v1328, %v1324
        %v1529 = vpack.c.b16 %v1329, %v1325
        %v1530 = vpack.c.b16 %v1334, %v1330
        %v1531 = vpack.c.b16 %v1335, %v1331
        %v1532 = vpack.c.b16 %v1336, %v1332
        %v1533 = vpack.c.b16 %v1337, %v1333
        %v1534 = vpack.c.b16 %v1342, %v1338
        %v1535 = vpack.c.b16 %v1343, %v1339
        %v1536 = vpack.c.b16 %v1344, %v1340
        %v1537 = vpack.c.b16 %v1345, %v1341
        %v1538 = vpack.c.b16 %v1350, %v1346
        %v1539 = vpack.c.b16 %v1351, %v1347
        %v1540 = vpack.c.b16 %v1352, %v1348
        %v1541 = vpack.c.b16 %v1353, %v1349
        %v1542 = vpack.c.b16 %v1358, %v1354
        %v1543 = vpack.c.b16 %v1359, %v1355
        %v1544 = vpack.c.b16 %v1360, %v1356
        %v1545 = vpack.c.b16 %v1361, %v1357
        %v1546 = vpack.c.b16 %v1366, %v1362
        %v1547 = vpack.c.b16 %v1367, %v1363
        %v1548 = vpack.c.b16 %v1368, %v1364
        %v1549 = vpack.c.b16 %v1369, %v1365
        %v1550 = vpack.c.b16 %v1374, %v1370
        %v1551 = vpack.c.b16 %v1375, %v1371
        %v1552 = vpack.c.b16 %v1376, %v1372
        %v1553 = vpack.c.b16 %v1377, %v1373
        %v1554 = vpack.c.b16 %v1382, %v1378
        %v1555 = vpack.c.b16 %v1383, %v1379
        %v1556 = vpack.c.b16 %v1384, %v1380
        %v1557 = vpack.c.b16 %v1385, %v1381
        %v1558 = vpack.c.b16 %v1390, %v1386
        %v1559 = vpack.c.b16 %v1391, %v1387
        %v1560 = vpack.c.b16 %v1392, %v1388
        %v1561 = vpack.c.b16 %v1393, %v1389
        %v1562 = vpack.c.b16 %v1398, %v1394
        %v1563 = vpack.c.b16 %v1399, %v1395
        %v1564 = vpack.c.b16 %v1400, %v1396
        %v1565 = vpack.c.b16 %v1401, %v1397
        %v1566 = vpack.c.b16 %v1406, %v1402
        %v1567 = vpack.c.b16 %v1407, %v1403
        %v1568 = vpack.c.b16 %v1408, %v1404
        %v1569 = vpack.c.b16 %v1409, %v1405
        %v1570 = vpack.c.b16 %v1414, %v1410
        %v1571 = vpack.c.b16 %v1415, %v1411
        %v1572 = vpack.c.b16 %v1416, %v1412
        %v1573 = vpack.c.b16 %v1417, %v1413
        %v1574 = vpack.c.b16 %v1422, %v1418
        %v1575 = vpack.c.b16 %v1423, %v1419
        %v1576 = vpack.c.b16 %v1424, %v1420
        %v1577 = vpack.c.b16 %v1425, %v1421
        %v1578 = vpack.c.b16 %v1430, %v1426
        %v1579 = vpack.c.b16 %v1431, %v1427
        %v1580 = vpack.c.b16 %v1432, %v1428
        %v1581 = vpack.c.b16 %v1433, %v1429
        %v1582 = vpack.c.b16 %v1438, %v1434
        %v1583 = vpack.c.b16 %v1439, %v1435
        %v1584 = vpack.c.b16 %v1440, %v1436
        %v1585 = vpack.c.b16 %v1441, %v1437
        %v1586 = vpack.c.b16 %v1446, %v1442
        %v1587 = vpack.c.b16 %v1447, %v1443
        %v1588 = vpack.c.b16 %v1448, %v1444
        %v1589 = vpack.c.b16 %v1449, %v1445
        %v1590 = vpack.c.b16 %v1454, %v1450
        %v1591 = vpack.c.b16 %v1455, %v1451
        %v1592 = vpack.c.b16 %v1456, %v1452
        %v1593 = vpack.c.b16 %v1457, %v1453
        %v1594 = vpack.c.b16 %v1462, %v1458
        %v1595 = vpack.c.b16 %v1463, %v1459
        %v1596 = vpack.c.b16 %v1464, %v1460
        %v1597 = vpack.c.b16 %v1465, %v1461
        %v1598 = vpack.c.b16 %v1470, %v1466
        %v1599 = vpack.c.b16 %v1471, %v1467
        %v1600 = vpack.c.b16 %v1472, %v1468
        %v1601 = vpack.c.b16 %v1473, %v1469
        %1730 = vmatprep.subr.bf16.mxu0 %v1475
        %1731 = vmatpush1.bf16.msra.mxu0 %v1474
        %1732 = vmatprep.subr.bf16.mxu0 %v1479
        %1733 = vmatpush1.bf16.msra.mxu0 %v1478
        %1734 = vmatprep.subr.bf16.mxu0 %v1483
        %1735 = vmatpush1.bf16.msra.mxu0 %v1482
        %1736 = vmatprep.subr.bf16.mxu0 %v1487
        %1737 = vmatpush1.bf16.msra.mxu0 %v1486
        %1738 = vmatprep.subr.bf16.mxu0 %v1491
        %1739 = vmatpush1.bf16.msra.mxu0 %v1490
        %1740 = vmatprep.subr.bf16.mxu0 %v1495
        %1741 = vmatpush1.bf16.msra.mxu0 %v1494
        %1742 = vmatprep.subr.bf16.mxu0 %v1499
        %1743 = vmatpush1.bf16.msra.mxu0 %v1498
        %1744 = vmatprep.subr.bf16.mxu0 %v1503
        %1745 = vmatpush1.bf16.msra.mxu0 %v1502
        %1746 = vmatprep.subr.bf16.mxu0 %v1507
        %1747 = vmatpush1.bf16.msra.mxu0 %v1506
        %1748 = vmatprep.subr.bf16.mxu0 %v1511
        %1749 = vmatpush1.bf16.msra.mxu0 %v1510
        %1750 = vmatprep.subr.bf16.mxu0 %v1515
        %1751 = vmatpush1.bf16.msra.mxu0 %v1514
        %1752 = vmatprep.subr.bf16.mxu0 %v1519
        %1753 = vmatpush1.bf16.msra.mxu0 %v1518
        %1754 = vmatprep.subr.bf16.mxu0 %v1523
        %1755 = vmatpush1.bf16.msra.mxu0 %v1522
        %1756 = vmatprep.subr.bf16.mxu0 %v1527
        %1757 = vmatpush1.bf16.msra.mxu0 %v1526
        %1758 = vmatprep.subr.bf16.mxu0 %v1531
        %1759 = vmatpush1.bf16.msra.mxu0 %v1530
        %1760 = vmatprep.subr.bf16.mxu0 %v1535
        %1761 = vmatpush1.bf16.msra.mxu0 %v1534
        %1762 = vmatprep.mubr.bf16.mxu0 %v909
        %1763 = vmatmul.mubr.bf16.gmra.mrb[0].mxu0 %v908
        %v1764 = vpop.f32.mrb[0].mxu0
        %v1765 = vadd.f32 %v1073, %v1764
        %v1766 = vpop.f32.mrb[0].mxu0
        %v1767 = vadd.f32 %v1077, %v1766
        %v1768 = vpop.f32.mrb[0].mxu0
        %v1769 = vadd.f32 %v1073, %v1768
        %v1770 = vpop.f32.mrb[0].mxu0
        %v1771 = vadd.f32 %v1077, %v1770
        %1772 = vmatprep.mubr.bf16.mxu0 %v913
        %1773 = vmatmul.mubr.bf16.gmra.mrb[0].mxu0 %v912
        %v1774 = vpop.f32.mrb[0].mxu0
        %v1775 = vadd.f32 %v1073, %v1774
        %v1776 = vpop.f32.mrb[0].mxu0
        %v1777 = vadd.f32 %v1077, %v1776
        %v1778 = vpop.f32.mrb[0].mxu0
        %v1779 = vadd.f32 %v1073, %v1778
        %v1780 = vpop.f32.mrb[0].mxu0
        %v1781 = vadd.f32 %v1077, %v1780
        %1782 = vmatprep.mubr.bf16.mxu0 %v917
        %1783 = vmatmul.mubr.bf16.gmra.mrb[0].mxu0 %v916
        %v1784 = vpop.f32.mrb[0].mxu0
        %v1785 = vadd.f32 %v1073, %v1784
        %v1786 = vpop.f32.mrb[0].mxu0
        %v1787 = vadd.f32 %v1077, %v1786
        %v1788 = vpop.f32.mrb[0].mxu0
        %v1789 = vadd.f32 %v1073, %v1788
        %v1790 = vpop.f32.mrb[0].mxu0
        %v1791 = vadd.f32 %v1077, %v1790
        %1792 = vmatprep.mubr.bf16.mxu0 %v921
        %1793 = vmatmul.mubr.bf16.gmra.mrb[0].mxu0 %v920
        %v1794 = vpop.f32.mrb[0].mxu0
        %v1795 = vadd.f32 %v1073, %v1794
        %v1796 = vpop.f32.mrb[0].mxu0
        %v1797 = vadd.f32 %v1077, %v1796
        %v1798 = vpop.f32.mrb[0].mxu0
        %v1799 = vadd.f32 %v1073, %v1798
        %v1800 = vpop.f32.mrb[0].mxu0
        %v1801 = vadd.f32 %v1077, %v1800
        %1802 = vmatprep.mubr.bf16.mxu0 %v925
        %1803 = vmatmul.mubr.bf16.gmra.mrb[0].mxu0 %v924
        %v1804 = vpop.f32.mrb[0].mxu0
        %v1805 = vadd.f32 %v1073, %v1804
        %v1806 = vpop.f32.mrb[0].mxu0
        %v1807 = vadd.f32 %v1077, %v1806
        %v1808 = vpop.f32.mrb[0].mxu0
        %v1809 = vadd.f32 %v1073, %v1808
        %v1810 = vpop.f32.mrb[0].mxu0
        %v1811 = vadd.f32 %v1077, %v1810
        %1812 = vmatprep.mubr.bf16.mxu0 %v929
        %1813 = vmatmul.mubr.bf16.gmra.mrb[0].mxu0 %v928
        %v1814 = vpop.f32.mrb[0].mxu0
        %v1815 = vadd.f32 %v1073, %v1814
        %v1816 = vpop.f32.mrb[0].mxu0
        %v1817 = vadd.f32 %v1077, %v1816
        %v1818 = vpop.f32.mrb[0].mxu0
        %v1819 = vadd.f32 %v1073, %v1818
        %v1820 = vpop.f32.mrb[0].mxu0
        %v1821 = vadd.f32 %v1077, %v1820
        %1822 = vmatprep.mubr.bf16.mxu0 %v933
        %1823 = vmatmul.mubr.bf16.gmra.mrb[0].mxu0 %v932
        %v1824 = vpop.f32.mrb[0].mxu0
        %v1825 = vadd.f32 %v1073, %v1824
        %v1826 = vpop.f32.mrb[0].mxu0
        %v1827 = vadd.f32 %v1077, %v1826
        %v1828 = vpop.f32.mrb[0].mxu0
        %v1829 = vadd.f32 %v1073, %v1828
        %v1830 = vpop.f32.mrb[0].mxu0
        %v1831 = vadd.f32 %v1077, %v1830
        %1832 = vmatprep.mubr.bf16.mxu0 %v937
        %1833 = vmatmul.mubr.bf16.gmra.mrb[0].mxu0 %v936
        %v1834 = vpop.f32.mrb[0].mxu0
        %v1835 = vadd.f32 %v1073, %v1834
        %v1836 = vpop.f32.mrb[0].mxu0
        %v1837 = vadd.f32 %v1077, %v1836
        %v1838 = vpop.f32.mrb[0].mxu0
        %v1839 = vadd.f32 %v1073, %v1838
        %v1840 = vpop.f32.mrb[0].mxu0
        %v1841 = vadd.f32 %v1077, %v1840
        %1842 = vdwg.mxu0
        %1843 = vmatprep.subr.bf16.mxu0 %v1539
        %1844 = vmatpush1.bf16.msra.mxu0 %v1538
        %1845 = vmatprep.subr.bf16.mxu0 %v1543
        %1846 = vmatpush1.bf16.msra.mxu0 %v1542
        %1847 = vmatprep.subr.bf16.mxu0 %v1547
        %1848 = vmatpush1.bf16.msra.mxu0 %v1546
        %1849 = vmatprep.subr.bf16.mxu0 %v1551
        %1850 = vmatpush1.bf16.msra.mxu0 %v1550
        %1851 = vmatprep.subr.bf16.mxu0 %v1555
        %1852 = vmatpush1.bf16.msra.mxu0 %v1554
        %1853 = vmatprep.subr.bf16.mxu0 %v1559
        %1854 = vmatpush1.bf16.msra.mxu0 %v1558
        %1855 = vmatprep.subr.bf16.mxu0 %v1563
        %1856 = vmatpush1.bf16.msra.mxu0 %v1562
        %1857 = vmatprep.subr.bf16.mxu0 %v1567
        %1858 = vmatpush1.bf16.msra.mxu0 %v1566
        %1859 = vmatprep.subr.bf16.mxu0 %v1571
        %1860 = vmatpush1.bf16.msra.mxu0 %v1570
        %1861 = vmatprep.subr.bf16.mxu0 %v1575
        %1862 = vmatpush1.bf16.msra.mxu0 %v1574
        %1863 = vmatprep.subr.bf16.mxu0 %v1579
        %1864 = vmatpush1.bf16.msra.mxu0 %v1578
        %1865 = vmatprep.subr.bf16.mxu0 %v1583
        %1866 = vmatpush1.bf16.msra.mxu0 %v1582
        %1867 = vmatprep.subr.bf16.mxu0 %v1587
        %1868 = vmatpush1.bf16.msra.mxu0 %v1586
        %1869 = vmatprep.subr.bf16.mxu0 %v1591
        %1870 = vmatpush1.bf16.msra.mxu0 %v1590
        %1871 = vmatprep.subr.bf16.mxu0 %v1595
        %1872 = vmatpush1.bf16.msra.mxu0 %v1594
        %1873 = vmatprep.subr.bf16.mxu0 %v1599
        %1874 = vmatpush1.bf16.msra.mxu0 %v1598
        %1875 = vmatprep.mubr.bf16.mxu0 %v911
        %1876 = vmatmul.mubr.bf16.gmra.mrb[0].mxu0 %v910
        %v1877 = vpop.f32.mrb[0].mxu0
        %v1878 = vadd.f32 %v1765, %v1877
        %v1879 = vpop.f32.mrb[0].mxu0
        %v1880 = vadd.f32 %v1767, %v1879
        %v1881 = vpop.f32.mrb[0].mxu0
        %v1882 = vadd.f32 %v1769, %v1881
        %v1883 = vpop.f32.mrb[0].mxu0
        %v1884 = vadd.f32 %v1771, %v1883
        %1885 = vmatprep.mubr.bf16.mxu0 %v915
        %1886 = vmatmul.mubr.bf16.gmra.mrb[0].mxu0 %v914
        %v1887 = vpop.f32.mrb[0].mxu0
        %v1888 = vadd.f32 %v1775, %v1887
        %v1889 = vpop.f32.mrb[0].mxu0
        %v1890 = vadd.f32 %v1777, %v1889
        %v1891 = vpop.f32.mrb[0].mxu0
        %v1892 = vadd.f32 %v1779, %v1891
        %v1893 = vpop.f32.mrb[0].mxu0
        %v1894 = vadd.f32 %v1781, %v1893
        %1895 = vmatprep.mubr.bf16.mxu0 %v919
        %1896 = vmatmul.mubr.bf16.gmra.mrb[0].mxu0 %v918
        %v1897 = vpop.f32.mrb[0].mxu0
        %v1898 = vadd.f32 %v1785, %v1897
        %v1899 = vpop.f32.mrb[0].mxu0
        %v1900 = vadd.f32 %v1787, %v1899
        %v1901 = vpop.f32.mrb[0].mxu0
        %v1902 = vadd.f32 %v1789, %v1901
        %v1903 = vpop.f32.mrb[0].mxu0
        %v1904 = vadd.f32 %v1791, %v1903
        %1905 = vmatprep.mubr.bf16.mxu0 %v923
        %1906 = vmatmul.mubr.bf16.gmra.mrb[0].mxu0 %v922
        %v1907 = vpop.f32.mrb[0].mxu0
        %v1908 = vadd.f32 %v1795, %v1907
        %v1909 = vpop.f32.mrb[0].mxu0
        %v1910 = vadd.f32 %v1797, %v1909
        %v1911 = vpop.f32.mrb[0].mxu0
        %v1912 = vadd.f32 %v1799, %v1911
        %v1913 = vpop.f32.mrb[0].mxu0
        %v1914 = vadd.f32 %v1801, %v1913
        %1915 = vmatprep.mubr.bf16.mxu0 %v927
        %1916 = vmatmul.mubr.bf16.gmra.mrb[0].mxu0 %v926
        %v1917 = vpop.f32.mrb[0].mxu0
        %v1918 = vadd.f32 %v1805, %v1917
        %v1919 = vpop.f32.mrb[0].mxu0
        %v1920 = vadd.f32 %v1807, %v1919
        %v1921 = vpop.f32.mrb[0].mxu0
        %v1922 = vadd.f32 %v1809, %v1921
        %v1923 = vpop.f32.mrb[0].mxu0
        %v1924 = vadd.f32 %v1811, %v1923
        %1925 = vmatprep.mubr.bf16.mxu0 %v931
        %1926 = vmatmul.mubr.bf16.gmra.mrb[0].mxu0 %v930
        %v1927 = vpop.f32.mrb[0].mxu0
        %v1928 = vadd.f32 %v1815, %v1927
        %v1929 = vpop.f32.mrb[0].mxu0
        %v1930 = vadd.f32 %v1817, %v1929
        %v1931 = vpop.f32.mrb[0].mxu0
        %v1932 = vadd.f32 %v1819, %v1931
        %v1933 = vpop.f32.mrb[0].mxu0
        %v1934 = vadd.f32 %v1821, %v1933
        %1935 = vmatprep.mubr.bf16.mxu0 %v935
        %1936 = vmatmul.mubr.bf16.gmra.mrb[0].mxu0 %v934
        %v1937 = vpop.f32.mrb[0].mxu0
        %v1938 = vadd.f32 %v1825, %v1937
        %v1939 = vpop.f32.mrb[0].mxu0
        %v1940 = vadd.f32 %v1827, %v1939
        %v1941 = vpop.f32.mrb[0].mxu0
        %v1942 = vadd.f32 %v1829, %v1941
        %v1943 = vpop.f32.mrb[0].mxu0
        %v1944 = vadd.f32 %v1831, %v1943
        %1945 = vmatprep.mubr.bf16.mxu0 %v939
        %1946 = vmatmul.mubr.bf16.gmra.mrb[0].mxu0 %v938
        %v1947 = vpop.f32.mrb[0].mxu0
        %v1948 = vadd.f32 %v1835, %v1947
        %v1949 = vpop.f32.mrb[0].mxu0
        %v1950 = vadd.f32 %v1837, %v1949
        %v1951 = vpop.f32.mrb[0].mxu0
        %v1952 = vadd.f32 %v1839, %v1951
        %v1953 = vpop.f32.mrb[0].mxu0
        %v1954 = vadd.f32 %v1841, %v1953
        %1955 = vdwg.mxu0
        %1956 = vmatprep.subr.bf16.mxu0 %v1477
        %1957 = vmatpush1.bf16.msra.mxu0 %v1476
        %1958 = vmatprep.subr.bf16.mxu0 %v1481
        %1959 = vmatpush1.bf16.msra.mxu0 %v1480
        %1960 = vmatprep.subr.bf16.mxu0 %v1485
        %1961 = vmatpush1.bf16.msra.mxu0 %v1484
        %1962 = vmatprep.subr.bf16.mxu0 %v1489
        %1963 = vmatpush1.bf16.msra.mxu0 %v1488
        %1964 = vmatprep.subr.bf16.mxu0 %v1493
        %1965 = vmatpush1.bf16.msra.mxu0 %v1492
        %1966 = vmatprep.subr.bf16.mxu0 %v1497
        %1967 = vmatpush1.bf16.msra.mxu0 %v1496
        %1968 = vmatprep.subr.bf16.mxu0 %v1501
        %1969 = vmatpush1.bf16.msra.mxu0 %v1500
        %1970 = vmatprep.subr.bf16.mxu0 %v1505
        %1971 = vmatpush1.bf16.msra.mxu0 %v1504
        %1972 = vmatprep.subr.bf16.mxu0 %v1509
        %1973 = vmatpush1.bf16.msra.mxu0 %v1508
        %1974 = vmatprep.subr.bf16.mxu0 %v1513
        %1975 = vmatpush1.bf16.msra.mxu0 %v1512
        %1976 = vmatprep.subr.bf16.mxu0 %v1517
        %1977 = vmatpush1.bf16.msra.mxu0 %v1516
        %1978 = vmatprep.subr.bf16.mxu0 %v1521
        %1979 = vmatpush1.bf16.msra.mxu0 %v1520
        %1980 = vmatprep.subr.bf16.mxu0 %v1525
        %1981 = vmatpush1.bf16.msra.mxu0 %v1524
        %1982 = vmatprep.subr.bf16.mxu0 %v1529
        %1983 = vmatpush1.bf16.msra.mxu0 %v1528
        %1984 = vmatprep.subr.bf16.mxu0 %v1533
        %1985 = vmatpush1.bf16.msra.mxu0 %v1532
        %1986 = vmatprep.subr.bf16.mxu0 %v1537
        %1987 = vmatpush1.bf16.msra.mxu0 %v1536
        %1988 = vmatprep.mubr.bf16.mxu0 %v909
        %1989 = vmatmul.mubr.bf16.gmra.mrb[0].mxu0 %v908
        %v1990 = vpop.f32.mrb[0].mxu0
        %v1991 = vadd.f32 %v1081, %v1990
        %v1992 = vpop.f32.mrb[0].mxu0
        %v1993 = vadd.f32 %v1085, %v1992
        %v1994 = vpop.f32.mrb[0].mxu0
        %v1995 = vadd.f32 %v1081, %v1994
        %v1996 = vpop.f32.mrb[0].mxu0
        %v1997 = vadd.f32 %v1085, %v1996
        %1998 = vmatprep.mubr.bf16.mxu0 %v913
        %1999 = vmatmul.mubr.bf16.gmra.mrb[0].mxu0 %v912
        %v2000 = vpop.f32.mrb[0].mxu0
        %v2001 = vadd.f32 %v1081, %v2000
        %v2002 = vpop.f32.mrb[0].mxu0
        %v2003 = vadd.f32 %v1085, %v2002
        %v2004 = vpop.f32.mrb[0].mxu0
        %v2005 = vadd.f32 %v1081, %v2004
        %v2006 = vpop.f32.mrb[0].mxu0
        %v2007 = vadd.f32 %v1085, %v2006
        %2008 = vmatprep.mubr.bf16.mxu0 %v917
        %2009 = vmatmul.mubr.bf16.gmra.mrb[0].mxu0 %v916
        %v2010 = vpop.f32.mrb[0].mxu0
        %v2011 = vadd.f32 %v1081, %v2010
        %v2012 = vpop.f32.mrb[0].mxu0
        %v2013 = vadd.f32 %v1085, %v2012
        %v2014 = vpop.f32.mrb[0].mxu0
        %v2015 = vadd.f32 %v1081, %v2014
        %v2016 = vpop.f32.mrb[0].mxu0
        %v2017 = vadd.f32 %v1085, %v2016
        %2018 = vmatprep.mubr.bf16.mxu0 %v921
        %2019 = vmatmul.mubr.bf16.gmra.mrb[0].mxu0 %v920
        %v2020 = vpop.f32.mrb[0].mxu0
        %v2021 = vadd.f32 %v1081, %v2020
        %v2022 = vpop.f32.mrb[0].mxu0
        %v2023 = vadd.f32 %v1085, %v2022
        %v2024 = vpop.f32.mrb[0].mxu0
        %v2025 = vadd.f32 %v1081, %v2024
        %v2026 = vpop.f32.mrb[0].mxu0
        %v2027 = vadd.f32 %v1085, %v2026
        %2028 = vmatprep.mubr.bf16.mxu0 %v925
        %2029 = vmatmul.mubr.bf16.gmra.mrb[0].mxu0 %v924
        %v2030 = vpop.f32.mrb[0].mxu0
        %v2031 = vadd.f32 %v1081, %v2030
        %v2032 = vpop.f32.mrb[0].mxu0
        %v2033 = vadd.f32 %v1085, %v2032
        %v2034 = vpop.f32.mrb[0].mxu0
        %v2035 = vadd.f32 %v1081, %v2034
        %v2036 = vpop.f32.mrb[0].mxu0
        %v2037 = vadd.f32 %v1085, %v2036
        %2038 = vmatprep.mubr.bf16.mxu0 %v929
        %2039 = vmatmul.mubr.bf16.gmra.mrb[0].mxu0 %v928
        %v2040 = vpop.f32.mrb[0].mxu0
        %v2041 = vadd.f32 %v1081, %v2040
        %v2042 = vpop.f32.mrb[0].mxu0
        %v2043 = vadd.f32 %v1085, %v2042
        %v2044 = vpop.f32.mrb[0].mxu0
        %v2045 = vadd.f32 %v1081, %v2044
        %v2046 = vpop.f32.mrb[0].mxu0
        %v2047 = vadd.f32 %v1085, %v2046
        %2048 = vmatprep.mubr.bf16.mxu0 %v933
        %2049 = vmatmul.mubr.bf16.gmra.mrb[0].mxu0 %v932
        %v2050 = vpop.f32.mrb[0].mxu0
        %v2051 = vadd.f32 %v1081, %v2050
        %v2052 = vpop.f32.mrb[0].mxu0
        %v2053 = vadd.f32 %v1085, %v2052
        %v2054 = vpop.f32.mrb[0].mxu0
        %v2055 = vadd.f32 %v1081, %v2054
        %v2056 = vpop.f32.mrb[0].mxu0
        %v2057 = vadd.f32 %v1085, %v2056
        %2058 = vmatprep.mubr.bf16.mxu0 %v937
        %2059 = vmatmul.mubr.bf16.gmra.mrb[0].mxu0 %v936
        %v2060 = vpop.f32.mrb[0].mxu0
        %v2061 = vadd.f32 %v1081, %v2060
        %v2062 = vpop.f32.mrb[0].mxu0
        %v2063 = vadd.f32 %v1085, %v2062
        %v2064 = vpop.f32.mrb[0].mxu0
        %v2065 = vadd.f32 %v1081, %v2064
        %v2066 = vpop.f32.mrb[0].mxu0
        %v2067 = vadd.f32 %v1085, %v2066
        %2068 = vdwg.mxu0
        %2069 = vmatprep.subr.bf16.mxu0 %v1541
        %2070 = vmatpush1.bf16.msra.mxu0 %v1540
        %2071 = vmatprep.subr.bf16.mxu0 %v1545
        %2072 = vmatpush1.bf16.msra.mxu0 %v1544
        %2073 = vmatprep.subr.bf16.mxu0 %v1549
        %2074 = vmatpush1.bf16.msra.mxu0 %v1548
        %2075 = vmatprep.subr.bf16.mxu0 %v1553
        %2076 = vmatpush1.bf16.msra.mxu0 %v1552
        %2077 = vmatprep.subr.bf16.mxu0 %v1557
        %2078 = vmatpush1.bf16.msra.mxu0 %v1556
        %2079 = vmatprep.subr.bf16.mxu0 %v1561
        %2080 = vmatpush1.bf16.msra.mxu0 %v1560
        %2081 = vmatprep.subr.bf16.mxu0 %v1565
        %2082 = vmatpush1.bf16.msra.mxu0 %v1564
        %2083 = vmatprep.subr.bf16.mxu0 %v1569
        %2084 = vmatpush1.bf16.msra.mxu0 %v1568
        %2085 = vmatprep.subr.bf16.mxu0 %v1573
        %2086 = vmatpush1.bf16.msra.mxu0 %v1572
        %2087 = vmatprep.subr.bf16.mxu0 %v1577
        %2088 = vmatpush1.bf16.msra.mxu0 %v1576
        %2089 = vmatprep.subr.bf16.mxu0 %v1581
        %2090 = vmatpush1.bf16.msra.mxu0 %v1580
        %2091 = vmatprep.subr.bf16.mxu0 %v1585
        %2092 = vmatpush1.bf16.msra.mxu0 %v1584
        %2093 = vmatprep.subr.bf16.mxu0 %v1589
        %2094 = vmatpush1.bf16.msra.mxu0 %v1588
        %2095 = vmatprep.subr.bf16.mxu0 %v1593
        %2096 = vmatpush1.bf16.msra.mxu0 %v1592
        %2097 = vmatprep.subr.bf16.mxu0 %v1597
        %2098 = vmatpush1.bf16.msra.mxu0 %v1596
        %2099 = vmatprep.subr.bf16.mxu0 %v1601
        %2100 = vmatpush1.bf16.msra.mxu0 %v1600
        %2101 = vmatprep.mubr.bf16.mxu0 %v911
        %2102 = vmatmul.mubr.bf16.gmra.mrb[0].mxu0 %v910
        %v2103 = vpop.f32.mrb[0].mxu0
        %v2104 = vadd.f32 %v1991, %v2103
        %v2105 = vpop.f32.mrb[0].mxu0
        %v2106 = vadd.f32 %v1993, %v2105
        %v2107 = vpop.f32.mrb[0].mxu0
        %v2108 = vadd.f32 %v1995, %v2107
        %v2109 = vpop.f32.mrb[0].mxu0
        %v2110 = vadd.f32 %v1997, %v2109
        %2111 = vmatprep.mubr.bf16.mxu0 %v915
        %2112 = vmatmul.mubr.bf16.gmra.mrb[0].mxu0 %v914
        %v2113 = vpop.f32.mrb[0].mxu0
        %v2114 = vadd.f32 %v2001, %v2113
        %v2115 = vpop.f32.mrb[0].mxu0
        %v2116 = vadd.f32 %v2003, %v2115
        %v2117 = vpop.f32.mrb[0].mxu0
        %v2118 = vadd.f32 %v2005, %v2117
        %v2119 = vpop.f32.mrb[0].mxu0
        %v2120 = vadd.f32 %v2007, %v2119
        %2121 = vmatprep.mubr.bf16.mxu0 %v919
        %2122 = vmatmul.mubr.bf16.gmra.mrb[0].mxu0 %v918
        %v2123 = vpop.f32.mrb[0].mxu0
        %v2124 = vadd.f32 %v2011, %v2123
        %v2125 = vpop.f32.mrb[0].mxu0
        %v2126 = vadd.f32 %v2013, %v2125
        %v2127 = vpop.f32.mrb[0].mxu0
        %v2128 = vadd.f32 %v2015, %v2127
        %v2129 = vpop.f32.mrb[0].mxu0
        %v2130 = vadd.f32 %v2017, %v2129
        %2131 = vmatprep.mubr.bf16.mxu0 %v923
        %2132 = vmatmul.mubr.bf16.gmra.mrb[0].mxu0 %v922
        %v2133 = vpop.f32.mrb[0].mxu0
        %v2134 = vadd.f32 %v2021, %v2133
        %v2135 = vpop.f32.mrb[0].mxu0
        %v2136 = vadd.f32 %v2023, %v2135
        %v2137 = vpop.f32.mrb[0].mxu0
        %v2138 = vadd.f32 %v2025, %v2137
        %v2139 = vpop.f32.mrb[0].mxu0
        %v2140 = vadd.f32 %v2027, %v2139
        %2141 = vmatprep.mubr.bf16.mxu0 %v927
        %2142 = vmatmul.mubr.bf16.gmra.mrb[0].mxu0 %v926
        %v2143 = vpop.f32.mrb[0].mxu0
        %v2144 = vadd.f32 %v2031, %v2143
        %v2145 = vpop.f32.mrb[0].mxu0
        %v2146 = vadd.f32 %v2033, %v2145
        %v2147 = vpop.f32.mrb[0].mxu0
        %v2148 = vadd.f32 %v2035, %v2147
        %v2149 = vpop.f32.mrb[0].mxu0
        %v2150 = vadd.f32 %v2037, %v2149
        %2151 = vmatprep.mubr.bf16.mxu0 %v931
        %2152 = vmatmul.mubr.bf16.gmra.mrb[0].mxu0 %v930
        %v2153 = vpop.f32.mrb[0].mxu0
        %v2154 = vadd.f32 %v2041, %v2153
        %v2155 = vpop.f32.mrb[0].mxu0
        %v2156 = vadd.f32 %v2043, %v2155
        %v2157 = vpop.f32.mrb[0].mxu0
        %v2158 = vadd.f32 %v2045, %v2157
        %v2159 = vpop.f32.mrb[0].mxu0
        %v2160 = vadd.f32 %v2047, %v2159
        %2161 = vmatprep.mubr.bf16.mxu0 %v935
        %2162 = vmatmul.mubr.bf16.gmra.mrb[0].mxu0 %v934
        %v2163 = vpop.f32.mrb[0].mxu0
        %v2164 = vadd.f32 %v2051, %v2163
        %v2165 = vpop.f32.mrb[0].mxu0
        %v2166 = vadd.f32 %v2053, %v2165
        %v2167 = vpop.f32.mrb[0].mxu0
        %v2168 = vadd.f32 %v2055, %v2167
        %v2169 = vpop.f32.mrb[0].mxu0
        %v2170 = vadd.f32 %v2057, %v2169
        %2171 = vmatprep.mubr.bf16.mxu0 %v939
        %2172 = vmatmul.mubr.bf16.gmra.mrb[0].mxu0 %v938
        %v2173 = vpop.f32.mrb[0].mxu0
        %v2174 = vadd.f32 %v2061, %v2173
        %v2175 = vpop.f32.mrb[0].mxu0
        %v2176 = vadd.f32 %v2063, %v2175
        %v2177 = vpop.f32.mrb[0].mxu0
        %v2178 = vadd.f32 %v2065, %v2177
        %v2179 = vpop.f32.mrb[0].mxu0
        %v2180 = vadd.f32 %v2067, %v2179
        %2181 = vdwg.mxu0
        %v2182 = vmax.f32 %v1878, 0.0
        %v2183 = vmax.f32 %v1880, 0.0
        %v2184 = vmax.f32 %v2104, 0.0
        %v2185 = vmax.f32 %v2106, 0.0
        %v2186 = vmax.f32 %v1882, 0.0
        %v2187 = vmax.f32 %v1884, 0.0
        %v2188 = vmax.f32 %v2108, 0.0
        %v2189 = vmax.f32 %v2110, 0.0
        %v2190 = vmax.f32 %v1888, 0.0
        %v2191 = vmax.f32 %v1890, 0.0
        %v2192 = vmax.f32 %v2114, 0.0
        %v2193 = vmax.f32 %v2116, 0.0
        %v2194 = vmax.f32 %v1892, 0.0
        %v2195 = vmax.f32 %v1894, 0.0
        %v2196 = vmax.f32 %v2118, 0.0
        %v2197 = vmax.f32 %v2120, 0.0
        %v2198 = vmax.f32 %v1898, 0.0
        %v2199 = vmax.f32 %v1900, 0.0
        %v2200 = vmax.f32 %v2124, 0.0
        %v2201 = vmax.f32 %v2126, 0.0
        %v2202 = vmax.f32 %v1902, 0.0
        %v2203 = vmax.f32 %v1904, 0.0
        %v2204 = vmax.f32 %v2128, 0.0
        %v2205 = vmax.f32 %v2130, 0.0
        %v2206 = vmax.f32 %v1908, 0.0
        %v2207 = vmax.f32 %v1910, 0.0
        %v2208 = vmax.f32 %v2134, 0.0
        %v2209 = vmax.f32 %v2136, 0.0
        %v2210 = vmax.f32 %v1912, 0.0
        %v2211 = vmax.f32 %v1914, 0.0
        %v2212 = vmax.f32 %v2138, 0.0
        %v2213 = vmax.f32 %v2140, 0.0
        %v2214 = vmax.f32 %v1918, 0.0
        %v2215 = vmax.f32 %v1920, 0.0
        %v2216 = vmax.f32 %v2144, 0.0
        %v2217 = vmax.f32 %v2146, 0.0
        %v2218 = vmax.f32 %v1922, 0.0
        %v2219 = vmax.f32 %v1924, 0.0
        %v2220 = vmax.f32 %v2148, 0.0
        %v2221 = vmax.f32 %v2150, 0.0
        %v2222 = vmax.f32 %v1928, 0.0
        %v2223 = vmax.f32 %v1930, 0.0
        %v2224 = vmax.f32 %v2154, 0.0
        %v2225 = vmax.f32 %v2156, 0.0
        %v2226 = vmax.f32 %v1932, 0.0
        %v2227 = vmax.f32 %v1934, 0.0
        %v2228 = vmax.f32 %v2158, 0.0
        %v2229 = vmax.f32 %v2160, 0.0
        %v2230 = vmax.f32 %v1938, 0.0
        %v2231 = vmax.f32 %v1940, 0.0
        %v2232 = vmax.f32 %v2164, 0.0
        %v2233 = vmax.f32 %v2166, 0.0
        %v2234 = vmax.f32 %v1942, 0.0
        %v2235 = vmax.f32 %v1944, 0.0
        %v2236 = vmax.f32 %v2168, 0.0
        %v2237 = vmax.f32 %v2170, 0.0
        %v2238 = vmax.f32 %v1948, 0.0
        %v2239 = vmax.f32 %v1950, 0.0
        %v2240 = vmax.f32 %v2174, 0.0
        %v2241 = vmax.f32 %v2176, 0.0
        %v2242 = vmax.f32 %v1952, 0.0
        %v2243 = vmax.f32 %v1954, 0.0
        %v2244 = vmax.f32 %v2178, 0.0
        %v2245 = vmax.f32 %v2180, 0.0
        %v2246 = vpack.c.bf16 %v2186, %v2182
        %v2247 = vpack.c.bf16 %v2187, %v2183
        %v2248 = vpack.c.bf16 %v2188, %v2184
        %v2249 = vpack.c.bf16 %v2189, %v2185
        %v2250 = vpack.c.bf16 %v2194, %v2190
        %v2251 = vpack.c.bf16 %v2195, %v2191
        %v2252 = vpack.c.bf16 %v2196, %v2192
        %v2253 = vpack.c.bf16 %v2197, %v2193
        %v2254 = vpack.c.bf16 %v2202, %v2198
        %v2255 = vpack.c.bf16 %v2203, %v2199
        %v2256 = vpack.c.bf16 %v2204, %v2200
        %v2257 = vpack.c.bf16 %v2205, %v2201
        %v2258 = vpack.c.bf16 %v2210, %v2206
        %v2259 = vpack.c.bf16 %v2211, %v2207
        %v2260 = vpack.c.bf16 %v2212, %v2208
        %v2261 = vpack.c.bf16 %v2213, %v2209
        %v2262 = vpack.c.bf16 %v2218, %v2214
        %v2263 = vpack.c.bf16 %v2219, %v2215
        %v2264 = vpack.c.bf16 %v2220, %v2216
        %v2265 = vpack.c.bf16 %v2221, %v2217
        %v2266 = vpack.c.bf16 %v2226, %v2222
        %v2267 = vpack.c.bf16 %v2227, %v2223
        %v2268 = vpack.c.bf16 %v2228, %v2224
        %v2269 = vpack.c.bf16 %v2229, %v2225
        %v2270 = vpack.c.bf16 %v2234, %v2230
        %v2271 = vpack.c.bf16 %v2235, %v2231
        %v2272 = vpack.c.bf16 %v2236, %v2232
        %v2273 = vpack.c.bf16 %v2237, %v2233
        %v2274 = vpack.c.bf16 %v2242, %v2238
        %v2275 = vpack.c.bf16 %v2243, %v2239
        %v2276 = vpack.c.bf16 %v2244, %v2240
        %v2277 = vpack.c.bf16 %v2245, %v2241
        %v2278 = vld [vmem:[#allocation5] sm:$0xff]
        %v2279 = vld [vmem:[#allocation5 + $0x8] sm:$0xff]
        %v2280 = vld [vmem:[#allocation5 + $0x10] sm:$0xff]
        %v2281 = vld [vmem:[#allocation5 + $0x18] sm:$0xff]
        %v2282 = vld [vmem:[#allocation5 + $0x20] sm:$0xff]
        %v2283 = vld [vmem:[#allocation5 + $0x28] sm:$0xff]
        %v2284 = vld [vmem:[#allocation5 + $0x30] sm:$0xff]
        %v2285 = vld [vmem:[#allocation5 + $0x38] sm:$0xff]
        %v2286 = vld [vmem:[#allocation5 + $0x40] sm:$0xff]
        %v2287 = vld [vmem:[#allocation5 + $0x48] sm:$0xff]
        %v2288 = vld [vmem:[#allocation5 + $0x50] sm:$0xff]
        %v2289 = vld [vmem:[#allocation5 + $0x58] sm:$0xff]
        %v2290 = vld [vmem:[#allocation5 + $0x60] sm:$0xff]
        %v2291 = vld [vmem:[#allocation5 + $0x68] sm:$0xff]
        %v2292 = vld [vmem:[#allocation5 + $0x70] sm:$0xff]
        %v2293 = vld [vmem:[#allocation5 + $0x78] sm:$0xff]
        %v2294 = vld [vmem:[#allocation5 + $0x80] sm:$0xff]
        %v2295 = vld [vmem:[#allocation5 + $0x88] sm:$0xff]
        %v2296 = vld [vmem:[#allocation5 + $0x90] sm:$0xff]
        %v2297 = vld [vmem:[#allocation5 + $0x98] sm:$0xff]
        %v2298 = vld [vmem:[#allocation5 + $0xa0] sm:$0xff]
        %v2299 = vld [vmem:[#allocation5 + $0xa8] sm:$0xff]
        %v2300 = vld [vmem:[#allocation5 + $0xb0] sm:$0xff]
        %v2301 = vld [vmem:[#allocation5 + $0xb8] sm:$0xff]
        %v2302 = vld [vmem:[#allocation5 + $0xc0] sm:$0xff]
        %v2303 = vld [vmem:[#allocation5 + $0xc8] sm:$0xff]
        %v2304 = vld [vmem:[#allocation5 + $0xd0] sm:$0xff]
        %v2305 = vld [vmem:[#allocation5 + $0xd8] sm:$0xff]
        %v2306 = vld [vmem:[#allocation5 + $0xe0] sm:$0xff]
        %v2307 = vld [vmem:[#allocation5 + $0xe8] sm:$0xff]
        %v2308 = vld [vmem:[#allocation5 + $0xf0] sm:$0xff]
        %v2309 = vld [vmem:[#allocation5 + $0xf8] sm:$0xff]
        %v2310 = vld [vmem:[#allocation5 + $0x100] sm:$0xff]
        %v2311 = vld [vmem:[#allocation5 + $0x108] sm:$0xff]
        %v2312 = vld [vmem:[#allocation5 + $0x110] sm:$0xff]
        %v2313 = vld [vmem:[#allocation5 + $0x118] sm:$0xff]
        %v2314 = vld [vmem:[#allocation5 + $0x120] sm:$0xff]
        %v2315 = vld [vmem:[#allocation5 + $0x128] sm:$0xff]
        %v2316 = vld [vmem:[#allocation5 + $0x130] sm:$0xff]
        %v2317 = vld [vmem:[#allocation5 + $0x138] sm:$0xff]
        %v2318 = vld [vmem:[#allocation5 + $0x140] sm:$0xff]
        %v2319 = vld [vmem:[#allocation5 + $0x148] sm:$0xff]
        %v2320 = vld [vmem:[#allocation5 + $0x150] sm:$0xff]
        %v2321 = vld [vmem:[#allocation5 + $0x158] sm:$0xff]
        %v2322 = vld [vmem:[#allocation5 + $0x160] sm:$0xff]
        %v2323 = vld [vmem:[#allocation5 + $0x168] sm:$0xff]
        %v2324 = vld [vmem:[#allocation5 + $0x170] sm:$0xff]
        %v2325 = vld [vmem:[#allocation5 + $0x178] sm:$0xff]
        %v2326 = vld [vmem:[#allocation5 + $0x180] sm:$0xff]
        %v2327 = vld [vmem:[#allocation5 + $0x188] sm:$0xff]
        %v2328 = vld [vmem:[#allocation5 + $0x190] sm:$0xff]
        %v2329 = vld [vmem:[#allocation5 + $0x198] sm:$0xff]
        %v2330 = vld [vmem:[#allocation5 + $0x1a0] sm:$0xff]
        %v2331 = vld [vmem:[#allocation5 + $0x1a8] sm:$0xff]
        %v2332 = vld [vmem:[#allocation5 + $0x1b0] sm:$0xff]
        %v2333 = vld [vmem:[#allocation5 + $0x1b8] sm:$0xff]
        %v2334 = vld [vmem:[#allocation5 + $0x1c0] sm:$0xff]
        %v2335 = vld [vmem:[#allocation5 + $0x1c8] sm:$0xff]
        %v2336 = vld [vmem:[#allocation5 + $0x1d0] sm:$0xff]
        %v2337 = vld [vmem:[#allocation5 + $0x1d8] sm:$0xff]
        %v2338 = vld [vmem:[#allocation5 + $0x1e0] sm:$0xff]
        %v2339 = vld [vmem:[#allocation5 + $0x1e8] sm:$0xff]
        %v2340 = vld [vmem:[#allocation5 + $0x1f0] sm:$0xff]
        %v2341 = vld [vmem:[#allocation5 + $0x1f8] sm:$0xff]
        %v2342 = vld [vmem:[#allocation5 + $0x200] sm:$0xff]
        %v2343 = vld [vmem:[#allocation5 + $0x208] sm:$0xff]
        %v2344 = vld [vmem:[#allocation5 + $0x210] sm:$0xff]
        %v2345 = vld [vmem:[#allocation5 + $0x218] sm:$0xff]
        %v2346 = vld [vmem:[#allocation5 + $0x220] sm:$0xff]
        %v2347 = vld [vmem:[#allocation5 + $0x228] sm:$0xff]
        %v2348 = vld [vmem:[#allocation5 + $0x230] sm:$0xff]
        %v2349 = vld [vmem:[#allocation5 + $0x238] sm:$0xff]
        %v2350 = vld [vmem:[#allocation5 + $0x240] sm:$0xff]
        %v2351 = vld [vmem:[#allocation5 + $0x248] sm:$0xff]
        %v2352 = vld [vmem:[#allocation5 + $0x250] sm:$0xff]
        %v2353 = vld [vmem:[#allocation5 + $0x258] sm:$0xff]
        %v2354 = vld [vmem:[#allocation5 + $0x260] sm:$0xff]
        %v2355 = vld [vmem:[#allocation5 + $0x268] sm:$0xff]
        %v2356 = vld [vmem:[#allocation5 + $0x270] sm:$0xff]
        %v2357 = vld [vmem:[#allocation5 + $0x278] sm:$0xff]
        %v2358 = vld [vmem:[#allocation5 + $0x280] sm:$0xff]
        %v2359 = vld [vmem:[#allocation5 + $0x288] sm:$0xff]
        %v2360 = vld [vmem:[#allocation5 + $0x290] sm:$0xff]
        %v2361 = vld [vmem:[#allocation5 + $0x298] sm:$0xff]
        %v2362 = vld [vmem:[#allocation5 + $0x2a0] sm:$0xff]
        %v2363 = vld [vmem:[#allocation5 + $0x2a8] sm:$0xff]
        %v2364 = vld [vmem:[#allocation5 + $0x2b0] sm:$0xff]
        %v2365 = vld [vmem:[#allocation5 + $0x2b8] sm:$0xff]
        %v2366 = vld [vmem:[#allocation5 + $0x2c0] sm:$0xff]
        %v2367 = vld [vmem:[#allocation5 + $0x2c8] sm:$0xff]
        %v2368 = vld [vmem:[#allocation5 + $0x2d0] sm:$0xff]
        %v2369 = vld [vmem:[#allocation5 + $0x2d8] sm:$0xff]
        %v2370 = vld [vmem:[#allocation5 + $0x2e0] sm:$0xff]
        %v2371 = vld [vmem:[#allocation5 + $0x2e8] sm:$0xff]
        %v2372 = vld [vmem:[#allocation5 + $0x2f0] sm:$0xff]
        %v2373 = vld [vmem:[#allocation5 + $0x2f8] sm:$0xff]
        %v2374 = vld [vmem:[#allocation5 + $0x300] sm:$0xff]
        %v2375 = vld [vmem:[#allocation5 + $0x308] sm:$0xff]
        %v2376 = vld [vmem:[#allocation5 + $0x310] sm:$0xff]
        %v2377 = vld [vmem:[#allocation5 + $0x318] sm:$0xff]
        %v2378 = vld [vmem:[#allocation5 + $0x320] sm:$0xff]
        %v2379 = vld [vmem:[#allocation5 + $0x328] sm:$0xff]
        %v2380 = vld [vmem:[#allocation5 + $0x330] sm:$0xff]
        %v2381 = vld [vmem:[#allocation5 + $0x338] sm:$0xff]
        %v2382 = vld [vmem:[#allocation5 + $0x340] sm:$0xff]
        %v2383 = vld [vmem:[#allocation5 + $0x348] sm:$0xff]
        %v2384 = vld [vmem:[#allocation5 + $0x350] sm:$0xff]
        %v2385 = vld [vmem:[#allocation5 + $0x358] sm:$0xff]
        %v2386 = vld [vmem:[#allocation5 + $0x360] sm:$0xff]
        %v2387 = vld [vmem:[#allocation5 + $0x368] sm:$0xff]
        %v2388 = vld [vmem:[#allocation5 + $0x370] sm:$0xff]
        %v2389 = vld [vmem:[#allocation5 + $0x378] sm:$0xff]
        %v2390 = vld [vmem:[#allocation5 + $0x380] sm:$0xff]
        %v2391 = vld [vmem:[#allocation5 + $0x388] sm:$0xff]
        %v2392 = vld [vmem:[#allocation5 + $0x390] sm:$0xff]
        %v2393 = vld [vmem:[#allocation5 + $0x398] sm:$0xff]
        %v2394 = vld [vmem:[#allocation5 + $0x3a0] sm:$0xff]
        %v2395 = vld [vmem:[#allocation5 + $0x3a8] sm:$0xff]
        %v2396 = vld [vmem:[#allocation5 + $0x3b0] sm:$0xff]
        %v2397 = vld [vmem:[#allocation5 + $0x3b8] sm:$0xff]
        %v2398 = vld [vmem:[#allocation5 + $0x3c0] sm:$0xff]
        %v2399 = vld [vmem:[#allocation5 + $0x3c8] sm:$0xff]
        %v2400 = vld [vmem:[#allocation5 + $0x3d0] sm:$0xff]
        %v2401 = vld [vmem:[#allocation5 + $0x3d8] sm:$0xff]
        %v2402 = vld [vmem:[#allocation5 + $0x3e0] sm:$0xff]
        %v2403 = vld [vmem:[#allocation5 + $0x3e8] sm:$0xff]
        %v2404 = vld [vmem:[#allocation5 + $0x3f0] sm:$0xff]
        %v2405 = vld [vmem:[#allocation5 + $0x3f8] sm:$0xff]
        %v2406 = vld [vmem:[%s6] sm:$0xf]
        %v2408 = vlaneseq
        %v2409 = vshrl.u32 %v2408, 7
        %v2410 = vsub.s32 0, %v2409
        %v2411 = vrot.slane %v2406, %v2410
        %v2412 = vlaneseq
        %v2413 = vshrl.u32 %v2412, 7
        %v2414 = vsub.s32 1, %v2413
        %v2415 = vrot.slane %v2406, %v2414
        %v2416 = vlaneseq
        %v2417 = vshrl.u32 %v2416, 7
        %v2418 = vsub.s32 2, %v2417
        %v2419 = vrot.slane %v2406, %v2418
        %v2420 = vlaneseq
        %v2421 = vshrl.u32 %v2420, 7
        %v2422 = vsub.s32 3, %v2421
        %v2423 = vrot.slane %v2406, %v2422
        %v2556 = vunpack.c.l.b16 %v2278
        %v2557 = vunpack.c.h.b16 %v2278
        %v2558 = vunpack.c.l.b16 %v2279
        %v2559 = vunpack.c.h.b16 %v2279
        %v2560 = vunpack.c.l.b16 %v2280
        %v2561 = vunpack.c.h.b16 %v2280
        %v2562 = vunpack.c.l.b16 %v2281
        %v2563 = vunpack.c.h.b16 %v2281
        %v2564 = vunpack.c.l.b16 %v2282
        %v2565 = vunpack.c.h.b16 %v2282
        %v2566 = vunpack.c.l.b16 %v2283
        %v2567 = vunpack.c.h.b16 %v2283
        %v2568 = vunpack.c.l.b16 %v2284
        %v2569 = vunpack.c.h.b16 %v2284
        %v2570 = vunpack.c.l.b16 %v2285
        %v2571 = vunpack.c.h.b16 %v2285
        %v2572 = vunpack.c.l.b16 %v2286
        %v2573 = vunpack.c.h.b16 %v2286
        %v2574 = vunpack.c.l.b16 %v2287
        %v2575 = vunpack.c.h.b16 %v2287
        %v2576 = vunpack.c.l.b16 %v2288
        %v2577 = vunpack.c.h.b16 %v2288
        %v2578 = vunpack.c.l.b16 %v2289
        %v2579 = vunpack.c.h.b16 %v2289
        %v2580 = vunpack.c.l.b16 %v2290
        %v2581 = vunpack.c.h.b16 %v2290
        %v2582 = vunpack.c.l.b16 %v2291
        %v2583 = vunpack.c.h.b16 %v2291
        %v2584 = vunpack.c.l.b16 %v2292
        %v2585 = vunpack.c.h.b16 %v2292
        %v2586 = vunpack.c.l.b16 %v2293
        %v2587 = vunpack.c.h.b16 %v2293
        %v2588 = vunpack.c.l.b16 %v2294
        %v2589 = vunpack.c.h.b16 %v2294
        %v2590 = vunpack.c.l.b16 %v2295
        %v2591 = vunpack.c.h.b16 %v2295
        %v2592 = vunpack.c.l.b16 %v2296
        %v2593 = vunpack.c.h.b16 %v2296
        %v2594 = vunpack.c.l.b16 %v2297
        %v2595 = vunpack.c.h.b16 %v2297
        %v2596 = vunpack.c.l.b16 %v2298
        %v2597 = vunpack.c.h.b16 %v2298
        %v2598 = vunpack.c.l.b16 %v2299
        %v2599 = vunpack.c.h.b16 %v2299
        %v2600 = vunpack.c.l.b16 %v2300
        %v2601 = vunpack.c.h.b16 %v2300
        %v2602 = vunpack.c.l.b16 %v2301
        %v2603 = vunpack.c.h.b16 %v2301
        %v2604 = vunpack.c.l.b16 %v2302
        %v2605 = vunpack.c.h.b16 %v2302
        %v2606 = vunpack.c.l.b16 %v2303
        %v2607 = vunpack.c.h.b16 %v2303
        %v2608 = vunpack.c.l.b16 %v2304
        %v2609 = vunpack.c.h.b16 %v2304
        %v2610 = vunpack.c.l.b16 %v2305
        %v2611 = vunpack.c.h.b16 %v2305
        %v2612 = vunpack.c.l.b16 %v2306
        %v2613 = vunpack.c.h.b16 %v2306
        %v2614 = vunpack.c.l.b16 %v2307
        %v2615 = vunpack.c.h.b16 %v2307
        %v2616 = vunpack.c.l.b16 %v2308
        %v2617 = vunpack.c.h.b16 %v2308
        %v2618 = vunpack.c.l.b16 %v2309
        %v2619 = vunpack.c.h.b16 %v2309
        %v2620 = vunpack.c.l.b16 %v2310
        %v2621 = vunpack.c.h.b16 %v2310
        %v2622 = vunpack.c.l.b16 %v2311
        %v2623 = vunpack.c.h.b16 %v2311
        %v2624 = vunpack.c.l.b16 %v2312
        %v2625 = vunpack.c.h.b16 %v2312
        %v2626 = vunpack.c.l.b16 %v2313
        %v2627 = vunpack.c.h.b16 %v2313
        %v2628 = vunpack.c.l.b16 %v2314
        %v2629 = vunpack.c.h.b16 %v2314
        %v2630 = vunpack.c.l.b16 %v2315
        %v2631 = vunpack.c.h.b16 %v2315
        %v2632 = vunpack.c.l.b16 %v2316
        %v2633 = vunpack.c.h.b16 %v2316
        %v2634 = vunpack.c.l.b16 %v2317
        %v2635 = vunpack.c.h.b16 %v2317
        %v2636 = vunpack.c.l.b16 %v2318
        %v2637 = vunpack.c.h.b16 %v2318
        %v2638 = vunpack.c.l.b16 %v2319
        %v2639 = vunpack.c.h.b16 %v2319
        %v2640 = vunpack.c.l.b16 %v2320
        %v2641 = vunpack.c.h.b16 %v2320
        %v2642 = vunpack.c.l.b16 %v2321
        %v2643 = vunpack.c.h.b16 %v2321
        %v2644 = vunpack.c.l.b16 %v2322
        %v2645 = vunpack.c.h.b16 %v2322
        %v2646 = vunpack.c.l.b16 %v2323
        %v2647 = vunpack.c.h.b16 %v2323
        %v2648 = vunpack.c.l.b16 %v2324
        %v2649 = vunpack.c.h.b16 %v2324
        %v2650 = vunpack.c.l.b16 %v2325
        %v2651 = vunpack.c.h.b16 %v2325
        %v2652 = vunpack.c.l.b16 %v2326
        %v2653 = vunpack.c.h.b16 %v2326
        %v2654 = vunpack.c.l.b16 %v2327
        %v2655 = vunpack.c.h.b16 %v2327
        %v2656 = vunpack.c.l.b16 %v2328
        %v2657 = vunpack.c.h.b16 %v2328
        %v2658 = vunpack.c.l.b16 %v2329
        %v2659 = vunpack.c.h.b16 %v2329
        %v2660 = vunpack.c.l.b16 %v2330
        %v2661 = vunpack.c.h.b16 %v2330
        %v2662 = vunpack.c.l.b16 %v2331
        %v2663 = vunpack.c.h.b16 %v2331
        %v2664 = vunpack.c.l.b16 %v2332
        %v2665 = vunpack.c.h.b16 %v2332
        %v2666 = vunpack.c.l.b16 %v2333
        %v2667 = vunpack.c.h.b16 %v2333
        %v2668 = vunpack.c.l.b16 %v2334
        %v2669 = vunpack.c.h.b16 %v2334
        %v2670 = vunpack.c.l.b16 %v2335
        %v2671 = vunpack.c.h.b16 %v2335
        %v2672 = vunpack.c.l.b16 %v2336
        %v2673 = vunpack.c.h.b16 %v2336
        %v2674 = vunpack.c.l.b16 %v2337
        %v2675 = vunpack.c.h.b16 %v2337
        %v2676 = vunpack.c.l.b16 %v2338
        %v2677 = vunpack.c.h.b16 %v2338
        %v2678 = vunpack.c.l.b16 %v2339
        %v2679 = vunpack.c.h.b16 %v2339
        %v2680 = vunpack.c.l.b16 %v2340
        %v2681 = vunpack.c.h.b16 %v2340
        %v2682 = vunpack.c.l.b16 %v2341
        %v2683 = vunpack.c.h.b16 %v2341
        %v2684 = vunpack.c.l.b16 %v2342
        %v2685 = vunpack.c.h.b16 %v2342
        %v2686 = vunpack.c.l.b16 %v2343
        %v2687 = vunpack.c.h.b16 %v2343
        %v2688 = vunpack.c.l.b16 %v2344
        %v2689 = vunpack.c.h.b16 %v2344
        %v2690 = vunpack.c.l.b16 %v2345
        %v2691 = vunpack.c.h.b16 %v2345
        %v2692 = vunpack.c.l.b16 %v2346
        %v2693 = vunpack.c.h.b16 %v2346
        %v2694 = vunpack.c.l.b16 %v2347
        %v2695 = vunpack.c.h.b16 %v2347
        %v2696 = vunpack.c.l.b16 %v2348
        %v2697 = vunpack.c.h.b16 %v2348
        %v2698 = vunpack.c.l.b16 %v2349
        %v2699 = vunpack.c.h.b16 %v2349
        %v2700 = vunpack.c.l.b16 %v2350
        %v2701 = vunpack.c.h.b16 %v2350
        %v2702 = vunpack.c.l.b16 %v2351
        %v2703 = vunpack.c.h.b16 %v2351
        %v2704 = vunpack.c.l.b16 %v2352
        %v2705 = vunpack.c.h.b16 %v2352
        %v2706 = vunpack.c.l.b16 %v2353
        %v2707 = vunpack.c.h.b16 %v2353
        %v2708 = vunpack.c.l.b16 %v2354
        %v2709 = vunpack.c.h.b16 %v2354
        %v2710 = vunpack.c.l.b16 %v2355
        %v2711 = vunpack.c.h.b16 %v2355
        %v2712 = vunpack.c.l.b16 %v2356
        %v2713 = vunpack.c.h.b16 %v2356
        %v2714 = vunpack.c.l.b16 %v2357
        %v2715 = vunpack.c.h.b16 %v2357
        %v2716 = vunpack.c.l.b16 %v2358
        %v2717 = vunpack.c.h.b16 %v2358
        %v2718 = vunpack.c.l.b16 %v2359
        %v2719 = vunpack.c.h.b16 %v2359
        %v2720 = vunpack.c.l.b16 %v2360
        %v2721 = vunpack.c.h.b16 %v2360
        %v2722 = vunpack.c.l.b16 %v2361
        %v2723 = vunpack.c.h.b16 %v2361
        %v2724 = vunpack.c.l.b16 %v2362
        %v2725 = vunpack.c.h.b16 %v2362
        %v2726 = vunpack.c.l.b16 %v2363
        %v2727 = vunpack.c.h.b16 %v2363
        %v2728 = vunpack.c.l.b16 %v2364
        %v2729 = vunpack.c.h.b16 %v2364
        %v2730 = vunpack.c.l.b16 %v2365
        %v2731 = vunpack.c.h.b16 %v2365
        %v2732 = vunpack.c.l.b16 %v2366
        %v2733 = vunpack.c.h.b16 %v2366
        %v2734 = vunpack.c.l.b16 %v2367
        %v2735 = vunpack.c.h.b16 %v2367
        %v2736 = vunpack.c.l.b16 %v2368
        %v2737 = vunpack.c.h.b16 %v2368
        %v2738 = vunpack.c.l.b16 %v2369
        %v2739 = vunpack.c.h.b16 %v2369
        %v2740 = vunpack.c.l.b16 %v2370
        %v2741 = vunpack.c.h.b16 %v2370
        %v2742 = vunpack.c.l.b16 %v2371
        %v2743 = vunpack.c.h.b16 %v2371
        %v2744 = vunpack.c.l.b16 %v2372
        %v2745 = vunpack.c.h.b16 %v2372
        %v2746 = vunpack.c.l.b16 %v2373
        %v2747 = vunpack.c.h.b16 %v2373
        %v2748 = vunpack.c.l.b16 %v2374
        %v2749 = vunpack.c.h.b16 %v2374
        %v2750 = vunpack.c.l.b16 %v2375
        %v2751 = vunpack.c.h.b16 %v2375
        %v2752 = vunpack.c.l.b16 %v2376
        %v2753 = vunpack.c.h.b16 %v2376
        %v2754 = vunpack.c.l.b16 %v2377
        %v2755 = vunpack.c.h.b16 %v2377
        %v2756 = vunpack.c.l.b16 %v2378
        %v2757 = vunpack.c.h.b16 %v2378
        %v2758 = vunpack.c.l.b16 %v2379
        %v2759 = vunpack.c.h.b16 %v2379
        %v2760 = vunpack.c.l.b16 %v2380
        %v2761 = vunpack.c.h.b16 %v2380
        %v2762 = vunpack.c.l.b16 %v2381
        %v2763 = vunpack.c.h.b16 %v2381
        %v2764 = vunpack.c.l.b16 %v2382
        %v2765 = vunpack.c.h.b16 %v2382
        %v2766 = vunpack.c.l.b16 %v2383
        %v2767 = vunpack.c.h.b16 %v2383
        %v2768 = vunpack.c.l.b16 %v2384
        %v2769 = vunpack.c.h.b16 %v2384
        %v2770 = vunpack.c.l.b16 %v2385
        %v2771 = vunpack.c.h.b16 %v2385
        %v2772 = vunpack.c.l.b16 %v2386
        %v2773 = vunpack.c.h.b16 %v2386
        %v2774 = vunpack.c.l.b16 %v2387
        %v2775 = vunpack.c.h.b16 %v2387
        %v2776 = vunpack.c.l.b16 %v2388
        %v2777 = vunpack.c.h.b16 %v2388
        %v2778 = vunpack.c.l.b16 %v2389
        %v2779 = vunpack.c.h.b16 %v2389
        %v2780 = vunpack.c.l.b16 %v2390
        %v2781 = vunpack.c.h.b16 %v2390
        %v2782 = vunpack.c.l.b16 %v2391
        %v2783 = vunpack.c.h.b16 %v2391
        %v2784 = vunpack.c.l.b16 %v2392
        %v2785 = vunpack.c.h.b16 %v2392
        %v2786 = vunpack.c.l.b16 %v2393
        %v2787 = vunpack.c.h.b16 %v2393
        %v2788 = vunpack.c.l.b16 %v2394
        %v2789 = vunpack.c.h.b16 %v2394
        %v2790 = vunpack.c.l.b16 %v2395
        %v2791 = vunpack.c.h.b16 %v2395
        %v2792 = vunpack.c.l.b16 %v2396
        %v2793 = vunpack.c.h.b16 %v2396
        %v2794 = vunpack.c.l.b16 %v2397
        %v2795 = vunpack.c.h.b16 %v2397
        %v2796 = vunpack.c.l.b16 %v2398
        %v2797 = vunpack.c.h.b16 %v2398
        %v2798 = vunpack.c.l.b16 %v2399
        %v2799 = vunpack.c.h.b16 %v2399
        %v2800 = vunpack.c.l.b16 %v2400
        %v2801 = vunpack.c.h.b16 %v2400
        %v2802 = vunpack.c.l.b16 %v2401
        %v2803 = vunpack.c.h.b16 %v2401
        %v2804 = vunpack.c.l.b16 %v2402
        %v2805 = vunpack.c.h.b16 %v2402
        %v2806 = vunpack.c.l.b16 %v2403
        %v2807 = vunpack.c.h.b16 %v2403
        %v2808 = vunpack.c.l.b16 %v2404
        %v2809 = vunpack.c.h.b16 %v2404
        %v2810 = vunpack.c.l.b16 %v2405
        %v2811 = vunpack.c.h.b16 %v2405
        %v2812 = vpack.c.b16 %v2560, %v2556
        %v2813 = vpack.c.b16 %v2561, %v2557
        %v2814 = vpack.c.b16 %v2562, %v2558
        %v2815 = vpack.c.b16 %v2563, %v2559
        %v2816 = vpack.c.b16 %v2568, %v2564
        %v2817 = vpack.c.b16 %v2569, %v2565
        %v2818 = vpack.c.b16 %v2570, %v2566
        %v2819 = vpack.c.b16 %v2571, %v2567
        %v2820 = vpack.c.b16 %v2576, %v2572
        %v2821 = vpack.c.b16 %v2577, %v2573
        %v2822 = vpack.c.b16 %v2578, %v2574
        %v2823 = vpack.c.b16 %v2579, %v2575
        %v2824 = vpack.c.b16 %v2584, %v2580
        %v2825 = vpack.c.b16 %v2585, %v2581
        %v2826 = vpack.c.b16 %v2586, %v2582
        %v2827 = vpack.c.b16 %v2587, %v2583
        %v2828 = vpack.c.b16 %v2592, %v2588
        %v2829 = vpack.c.b16 %v2593, %v2589
        %v2830 = vpack.c.b16 %v2594, %v2590
        %v2831 = vpack.c.b16 %v2595, %v2591
        %v2832 = vpack.c.b16 %v2600, %v2596
        %v2833 = vpack.c.b16 %v2601, %v2597
        %v2834 = vpack.c.b16 %v2602, %v2598
        %v2835 = vpack.c.b16 %v2603, %v2599
        %v2836 = vpack.c.b16 %v2608, %v2604
        %v2837 = vpack.c.b16 %v2609, %v2605
        %v2838 = vpack.c.b16 %v2610, %v2606
        %v2839 = vpack.c.b16 %v2611, %v2607
        %v2840 = vpack.c.b16 %v2616, %v2612
        %v2841 = vpack.c.b16 %v2617, %v2613
        %v2842 = vpack.c.b16 %v2618, %v2614
        %v2843 = vpack.c.b16 %v2619, %v2615
        %v2844 = vpack.c.b16 %v2624, %v2620
        %v2845 = vpack.c.b16 %v2625, %v2621
        %v2846 = vpack.c.b16 %v2626, %v2622
        %v2847 = vpack.c.b16 %v2627, %v2623
        %v2848 = vpack.c.b16 %v2632, %v2628
        %v2849 = vpack.c.b16 %v2633, %v2629
        %v2850 = vpack.c.b16 %v2634, %v2630
        %v2851 = vpack.c.b16 %v2635, %v2631
        %v2852 = vpack.c.b16 %v2640, %v2636
        %v2853 = vpack.c.b16 %v2641, %v2637
        %v2854 = vpack.c.b16 %v2642, %v2638
        %v2855 = vpack.c.b16 %v2643, %v2639
        %v2856 = vpack.c.b16 %v2648, %v2644
        %v2857 = vpack.c.b16 %v2649, %v2645
        %v2858 = vpack.c.b16 %v2650, %v2646
        %v2859 = vpack.c.b16 %v2651, %v2647
        %v2860 = vpack.c.b16 %v2656, %v2652
        %v2861 = vpack.c.b16 %v2657, %v2653
        %v2862 = vpack.c.b16 %v2658, %v2654
        %v2863 = vpack.c.b16 %v2659, %v2655
        %v2864 = vpack.c.b16 %v2664, %v2660
        %v2865 = vpack.c.b16 %v2665, %v2661
        %v2866 = vpack.c.b16 %v2666, %v2662
        %v2867 = vpack.c.b16 %v2667, %v2663
        %v2868 = vpack.c.b16 %v2672, %v2668
        %v2869 = vpack.c.b16 %v2673, %v2669
        %v2870 = vpack.c.b16 %v2674, %v2670
        %v2871 = vpack.c.b16 %v2675, %v2671
        %v2872 = vpack.c.b16 %v2680, %v2676
        %v2873 = vpack.c.b16 %v2681, %v2677
        %v2874 = vpack.c.b16 %v2682, %v2678
        %v2875 = vpack.c.b16 %v2683, %v2679
        %v2876 = vpack.c.b16 %v2688, %v2684
        %v2877 = vpack.c.b16 %v2689, %v2685
        %v2878 = vpack.c.b16 %v2690, %v2686
        %v2879 = vpack.c.b16 %v2691, %v2687
        %v2880 = vpack.c.b16 %v2696, %v2692
        %v2881 = vpack.c.b16 %v2697, %v2693
        %v2882 = vpack.c.b16 %v2698, %v2694
        %v2883 = vpack.c.b16 %v2699, %v2695
        %v2884 = vpack.c.b16 %v2704, %v2700
        %v2885 = vpack.c.b16 %v2705, %v2701
        %v2886 = vpack.c.b16 %v2706, %v2702
        %v2887 = vpack.c.b16 %v2707, %v2703
        %v2888 = vpack.c.b16 %v2712, %v2708
        %v2889 = vpack.c.b16 %v2713, %v2709
        %v2890 = vpack.c.b16 %v2714, %v2710
        %v2891 = vpack.c.b16 %v2715, %v2711
        %v2892 = vpack.c.b16 %v2720, %v2716
        %v2893 = vpack.c.b16 %v2721, %v2717
        %v2894 = vpack.c.b16 %v2722, %v2718
        %v2895 = vpack.c.b16 %v2723, %v2719
        %v2896 = vpack.c.b16 %v2728, %v2724
        %v2897 = vpack.c.b16 %v2729, %v2725
        %v2898 = vpack.c.b16 %v2730, %v2726
        %v2899 = vpack.c.b16 %v2731, %v2727
        %v2900 = vpack.c.b16 %v2736, %v2732
        %v2901 = vpack.c.b16 %v2737, %v2733
        %v2902 = vpack.c.b16 %v2738, %v2734
        %v2903 = vpack.c.b16 %v2739, %v2735
        %v2904 = vpack.c.b16 %v2744, %v2740
        %v2905 = vpack.c.b16 %v2745, %v2741
        %v2906 = vpack.c.b16 %v2746, %v2742
        %v2907 = vpack.c.b16 %v2747, %v2743
        %v2908 = vpack.c.b16 %v2752, %v2748
        %v2909 = vpack.c.b16 %v2753, %v2749
        %v2910 = vpack.c.b16 %v2754, %v2750
        %v2911 = vpack.c.b16 %v2755, %v2751
        %v2912 = vpack.c.b16 %v2760, %v2756
        %v2913 = vpack.c.b16 %v2761, %v2757
        %v2914 = vpack.c.b16 %v2762, %v2758
        %v2915 = vpack.c.b16 %v2763, %v2759
        %v2916 = vpack.c.b16 %v2768, %v2764
        %v2917 = vpack.c.b16 %v2769, %v2765
        %v2918 = vpack.c.b16 %v2770, %v2766
        %v2919 = vpack.c.b16 %v2771, %v2767
        %v2920 = vpack.c.b16 %v2776, %v2772
        %v2921 = vpack.c.b16 %v2777, %v2773
        %v2922 = vpack.c.b16 %v2778, %v2774
        %v2923 = vpack.c.b16 %v2779, %v2775
        %v2924 = vpack.c.b16 %v2784, %v2780
        %v2925 = vpack.c.b16 %v2785, %v2781
        %v2926 = vpack.c.b16 %v2786, %v2782
        %v2927 = vpack.c.b16 %v2787, %v2783
        %v2928 = vpack.c.b16 %v2792, %v2788
        %v2929 = vpack.c.b16 %v2793, %v2789
        %v2930 = vpack.c.b16 %v2794, %v2790
        %v2931 = vpack.c.b16 %v2795, %v2791
        %v2932 = vpack.c.b16 %v2800, %v2796
        %v2933 = vpack.c.b16 %v2801, %v2797
        %v2934 = vpack.c.b16 %v2802, %v2798
        %v2935 = vpack.c.b16 %v2803, %v2799
        %v2936 = vpack.c.b16 %v2808, %v2804
        %v2937 = vpack.c.b16 %v2809, %v2805
        %v2938 = vpack.c.b16 %v2810, %v2806
        %v2939 = vpack.c.b16 %v2811, %v2807
        %3068 = vmatprep.subr.bf16.mxu0 %v2813
        %3069 = vmatpush1.bf16.msra.mxu0 %v2812
        %3070 = vmatprep.subr.bf16.mxu0 %v2817
        %3071 = vmatpush1.bf16.msra.mxu0 %v2816
        %3072 = vmatprep.subr.bf16.mxu0 %v2821
        %3073 = vmatpush1.bf16.msra.mxu0 %v2820
        %3074 = vmatprep.subr.bf16.mxu0 %v2825
        %3075 = vmatpush1.bf16.msra.mxu0 %v2824
        %3076 = vmatprep.subr.bf16.mxu0 %v2829
        %3077 = vmatpush1.bf16.msra.mxu0 %v2828
        %3078 = vmatprep.subr.bf16.mxu0 %v2833
        %3079 = vmatpush1.bf16.msra.mxu0 %v2832
        %3080 = vmatprep.subr.bf16.mxu0 %v2837
        %3081 = vmatpush1.bf16.msra.mxu0 %v2836
        %3082 = vmatprep.subr.bf16.mxu0 %v2841
        %3083 = vmatpush1.bf16.msra.mxu0 %v2840
        %3084 = vmatprep.subr.bf16.mxu0 %v2845
        %3085 = vmatpush1.bf16.msra.mxu0 %v2844
        %3086 = vmatprep.subr.bf16.mxu0 %v2849
        %3087 = vmatpush1.bf16.msra.mxu0 %v2848
        %3088 = vmatprep.subr.bf16.mxu0 %v2853
        %3089 = vmatpush1.bf16.msra.mxu0 %v2852
        %3090 = vmatprep.subr.bf16.mxu0 %v2857
        %3091 = vmatpush1.bf16.msra.mxu0 %v2856
        %3092 = vmatprep.subr.bf16.mxu0 %v2861
        %3093 = vmatpush1.bf16.msra.mxu0 %v2860
        %3094 = vmatprep.subr.bf16.mxu0 %v2865
        %3095 = vmatpush1.bf16.msra.mxu0 %v2864
        %3096 = vmatprep.subr.bf16.mxu0 %v2869
        %3097 = vmatpush1.bf16.msra.mxu0 %v2868
        %3098 = vmatprep.subr.bf16.mxu0 %v2873
        %3099 = vmatpush1.bf16.msra.mxu0 %v2872
        %3100 = vmatprep.mubr.bf16.mxu0 %v2247
        %3101 = vmatmul.mubr.bf16.gmra.mrb[0].mxu0 %v2246
        %v3102 = vpop.f32.mrb[0].mxu0
        %v3103 = vadd.f32 %v2411, %v3102
        %v3104 = vpop.f32.mrb[0].mxu0
        %v3105 = vadd.f32 %v2415, %v3104
        %v3106 = vpop.f32.mrb[0].mxu0
        %v3107 = vadd.f32 %v2411, %v3106
        %v3108 = vpop.f32.mrb[0].mxu0
        %v3109 = vadd.f32 %v2415, %v3108
        %3110 = vmatprep.mubr.bf16.mxu0 %v2251
        %3111 = vmatmul.mubr.bf16.gmra.mrb[0].mxu0 %v2250
        %v3112 = vpop.f32.mrb[0].mxu0
        %v3113 = vadd.f32 %v2411, %v3112
        %v3114 = vpop.f32.mrb[0].mxu0
        %v3115 = vadd.f32 %v2415, %v3114
        %v3116 = vpop.f32.mrb[0].mxu0
        %v3117 = vadd.f32 %v2411, %v3116
        %v3118 = vpop.f32.mrb[0].mxu0
        %v3119 = vadd.f32 %v2415, %v3118
        %3120 = vmatprep.mubr.bf16.mxu0 %v2255
        %3121 = vmatmul.mubr.bf16.gmra.mrb[0].mxu0 %v2254
        %v3122 = vpop.f32.mrb[0].mxu0
        %v3123 = vadd.f32 %v2411, %v3122
        %v3124 = vpop.f32.mrb[0].mxu0
        %v3125 = vadd.f32 %v2415, %v3124
        %v3126 = vpop.f32.mrb[0].mxu0
        %v3127 = vadd.f32 %v2411, %v3126
        %v3128 = vpop.f32.mrb[0].mxu0
        %v3129 = vadd.f32 %v2415, %v3128
        %3130 = vmatprep.mubr.bf16.mxu0 %v2259
        %3131 = vmatmul.mubr.bf16.gmra.mrb[0].mxu0 %v2258
        %v3132 = vpop.f32.mrb[0].mxu0
        %v3133 = vadd.f32 %v2411, %v3132
        %v3134 = vpop.f32.mrb[0].mxu0
        %v3135 = vadd.f32 %v2415, %v3134
        %v3136 = vpop.f32.mrb[0].mxu0
        %v3137 = vadd.f32 %v2411, %v3136
        %v3138 = vpop.f32.mrb[0].mxu0
        %v3139 = vadd.f32 %v2415, %v3138
        %3140 = vmatprep.mubr.bf16.mxu0 %v2263
        %3141 = vmatmul.mubr.bf16.gmra.mrb[0].mxu0 %v2262
        %v3142 = vpop.f32.mrb[0].mxu0
        %v3143 = vadd.f32 %v2411, %v3142
        %v3144 = vpop.f32.mrb[0].mxu0
        %v3145 = vadd.f32 %v2415, %v3144
        %v3146 = vpop.f32.mrb[0].mxu0
        %v3147 = vadd.f32 %v2411, %v3146
        %v3148 = vpop.f32.mrb[0].mxu0
        %v3149 = vadd.f32 %v2415, %v3148
        %3150 = vmatprep.mubr.bf16.mxu0 %v2267
        %3151 = vmatmul.mubr.bf16.gmra.mrb[0].mxu0 %v2266
        %v3152 = vpop.f32.mrb[0].mxu0
        %v3153 = vadd.f32 %v2411, %v3152
        %v3154 = vpop.f32.mrb[0].mxu0
        %v3155 = vadd.f32 %v2415, %v3154
        %v3156 = vpop.f32.mrb[0].mxu0
        %v3157 = vadd.f32 %v2411, %v3156
        %v3158 = vpop.f32.mrb[0].mxu0
        %v3159 = vadd.f32 %v2415, %v3158
        %3160 = vmatprep.mubr.bf16.mxu0 %v2271
        %3161 = vmatmul.mubr.bf16.gmra.mrb[0].mxu0 %v2270
        %v3162 = vpop.f32.mrb[0].mxu0
        %v3163 = vadd.f32 %v2411, %v3162
        %v3164 = vpop.f32.mrb[0].mxu0
        %v3165 = vadd.f32 %v2415, %v3164
        %v3166 = vpop.f32.mrb[0].mxu0
        %v3167 = vadd.f32 %v2411, %v3166
        %v3168 = vpop.f32.mrb[0].mxu0
        %v3169 = vadd.f32 %v2415, %v3168
        %3170 = vmatprep.mubr.bf16.mxu0 %v2275
        %3171 = vmatmul.mubr.bf16.gmra.mrb[0].mxu0 %v2274
        %v3172 = vpop.f32.mrb[0].mxu0
        %v3173 = vadd.f32 %v2411, %v3172
        %v3174 = vpop.f32.mrb[0].mxu0
        %v3175 = vadd.f32 %v2415, %v3174
        %v3176 = vpop.f32.mrb[0].mxu0
        %v3177 = vadd.f32 %v2411, %v3176
        %v3178 = vpop.f32.mrb[0].mxu0
        %v3179 = vadd.f32 %v2415, %v3178
        %3180 = vdwg.mxu0
        %3181 = vmatprep.subr.bf16.mxu0 %v2877
        %3182 = vmatpush1.bf16.msra.mxu0 %v2876
        %3183 = vmatprep.subr.bf16.mxu0 %v2881
        %3184 = vmatpush1.bf16.msra.mxu0 %v2880
        %3185 = vmatprep.subr.bf16.mxu0 %v2885
        %3186 = vmatpush1.bf16.msra.mxu0 %v2884
        %3187 = vmatprep.subr.bf16.mxu0 %v2889
        %3188 = vmatpush1.bf16.msra.mxu0 %v2888
        %3189 = vmatprep.subr.bf16.mxu0 %v2893
        %3190 = vmatpush1.bf16.msra.mxu0 %v2892
        %3191 = vmatprep.subr.bf16.mxu0 %v2897
        %3192 = vmatpush1.bf16.msra.mxu0 %v2896
        %3193 = vmatprep.subr.bf16.mxu0 %v2901
        %3194 = vmatpush1.bf16.msra.mxu0 %v2900
        %3195 = vmatprep.subr.bf16.mxu0 %v2905
        %3196 = vmatpush1.bf16.msra.mxu0 %v2904
        %3197 = vmatprep.subr.bf16.mxu0 %v2909
        %3198 = vmatpush1.bf16.msra.mxu0 %v2908
        %3199 = vmatprep.subr.bf16.mxu0 %v2913
        %3200 = vmatpush1.bf16.msra.mxu0 %v2912
        %3201 = vmatprep.subr.bf16.mxu0 %v2917
        %3202 = vmatpush1.bf16.msra.mxu0 %v2916
        %3203 = vmatprep.subr.bf16.mxu0 %v2921
        %3204 = vmatpush1.bf16.msra.mxu0 %v2920
        %3205 = vmatprep.subr.bf16.mxu0 %v2925
        %3206 = vmatpush1.bf16.msra.mxu0 %v2924
        %3207 = vmatprep.subr.bf16.mxu0 %v2929
        %3208 = vmatpush1.bf16.msra.mxu0 %v2928
        %3209 = vmatprep.subr.bf16.mxu0 %v2933
        %3210 = vmatpush1.bf16.msra.mxu0 %v2932
        %3211 = vmatprep.subr.bf16.mxu0 %v2937
        %3212 = vmatpush1.bf16.msra.mxu0 %v2936
        %3213 = vmatprep.mubr.bf16.mxu0 %v2249
        %3214 = vmatmul.mubr.bf16.gmra.mrb[0].mxu0 %v2248
        %v3215 = vpop.f32.mrb[0].mxu0
        %v3216 = vadd.f32 %v3103, %v3215
        %v3217 = vpop.f32.mrb[0].mxu0
        %v3218 = vadd.f32 %v3105, %v3217
        %v3219 = vpop.f32.mrb[0].mxu0
        %v3220 = vadd.f32 %v3107, %v3219
        %v3221 = vpop.f32.mrb[0].mxu0
        %v3222 = vadd.f32 %v3109, %v3221
        %3223 = vmatprep.mubr.bf16.mxu0 %v2253
        %3224 = vmatmul.mubr.bf16.gmra.mrb[0].mxu0 %v2252
        %v3225 = vpop.f32.mrb[0].mxu0
        %v3226 = vadd.f32 %v3113, %v3225
        %v3227 = vpop.f32.mrb[0].mxu0
        %v3228 = vadd.f32 %v3115, %v3227
        %v3229 = vpop.f32.mrb[0].mxu0
        %v3230 = vadd.f32 %v3117, %v3229
        %v3231 = vpop.f32.mrb[0].mxu0
        %v3232 = vadd.f32 %v3119, %v3231
        %3233 = vmatprep.mubr.bf16.mxu0 %v2257
        %3234 = vmatmul.mubr.bf16.gmra.mrb[0].mxu0 %v2256
        %v3235 = vpop.f32.mrb[0].mxu0
        %v3236 = vadd.f32 %v3123, %v3235
        %v3237 = vpop.f32.mrb[0].mxu0
        %v3238 = vadd.f32 %v3125, %v3237
        %v3239 = vpop.f32.mrb[0].mxu0
        %v3240 = vadd.f32 %v3127, %v3239
        %v3241 = vpop.f32.mrb[0].mxu0
        %v3242 = vadd.f32 %v3129, %v3241
        %3243 = vmatprep.mubr.bf16.mxu0 %v2261
        %3244 = vmatmul.mubr.bf16.gmra.mrb[0].mxu0 %v2260
        %v3245 = vpop.f32.mrb[0].mxu0
        %v3246 = vadd.f32 %v3133, %v3245
        %v3247 = vpop.f32.mrb[0].mxu0
        %v3248 = vadd.f32 %v3135, %v3247
        %v3249 = vpop.f32.mrb[0].mxu0
        %v3250 = vadd.f32 %v3137, %v3249
        %v3251 = vpop.f32.mrb[0].mxu0
        %v3252 = vadd.f32 %v3139, %v3251
        %3253 = vmatprep.mubr.bf16.mxu0 %v2265
        %3254 = vmatmul.mubr.bf16.gmra.mrb[0].mxu0 %v2264
        %v3255 = vpop.f32.mrb[0].mxu0
        %v3256 = vadd.f32 %v3143, %v3255
        %v3257 = vpop.f32.mrb[0].mxu0
        %v3258 = vadd.f32 %v3145, %v3257
        %v3259 = vpop.f32.mrb[0].mxu0
        %v3260 = vadd.f32 %v3147, %v3259
        %v3261 = vpop.f32.mrb[0].mxu0
        %v3262 = vadd.f32 %v3149, %v3261
        %3263 = vmatprep.mubr.bf16.mxu0 %v2269
        %3264 = vmatmul.mubr.bf16.gmra.mrb[0].mxu0 %v2268
        %v3265 = vpop.f32.mrb[0].mxu0
        %v3266 = vadd.f32 %v3153, %v3265
        %v3267 = vpop.f32.mrb[0].mxu0
        %v3268 = vadd.f32 %v3155, %v3267
        %v3269 = vpop.f32.mrb[0].mxu0
        %v3270 = vadd.f32 %v3157, %v3269
        %v3271 = vpop.f32.mrb[0].mxu0
        %v3272 = vadd.f32 %v3159, %v3271
        %3273 = vmatprep.mubr.bf16.mxu0 %v2273
        %3274 = vmatmul.mubr.bf16.gmra.mrb[0].mxu0 %v2272
        %v3275 = vpop.f32.mrb[0].mxu0
        %v3276 = vadd.f32 %v3163, %v3275
        %v3277 = vpop.f32.mrb[0].mxu0
        %v3278 = vadd.f32 %v3165, %v3277
        %v3279 = vpop.f32.mrb[0].mxu0
        %v3280 = vadd.f32 %v3167, %v3279
        %v3281 = vpop.f32.mrb[0].mxu0
        %v3282 = vadd.f32 %v3169, %v3281
        %3283 = vmatprep.mubr.bf16.mxu0 %v2277
        %3284 = vmatmul.mubr.bf16.gmra.mrb[0].mxu0 %v2276
        %v3285 = vpop.f32.mrb[0].mxu0
        %v3286 = vadd.f32 %v3173, %v3285
        %v3287 = vpop.f32.mrb[0].mxu0
        %v3288 = vadd.f32 %v3175, %v3287
        %v3289 = vpop.f32.mrb[0].mxu0
        %v3290 = vadd.f32 %v3177, %v3289
        %v3291 = vpop.f32.mrb[0].mxu0
        %v3292 = vadd.f32 %v3179, %v3291
        %3293 = vdwg.mxu0
        %3294 = vmatprep.subr.bf16.mxu0 %v2815
        %3295 = vmatpush1.bf16.msra.mxu0 %v2814
        %3296 = vmatprep.subr.bf16.mxu0 %v2819
        %3297 = vmatpush1.bf16.msra.mxu0 %v2818
        %3298 = vmatprep.subr.bf16.mxu0 %v2823
        %3299 = vmatpush1.bf16.msra.mxu0 %v2822
        %3300 = vmatprep.subr.bf16.mxu0 %v2827
        %3301 = vmatpush1.bf16.msra.mxu0 %v2826
        %3302 = vmatprep.subr.bf16.mxu0 %v2831
        %3303 = vmatpush1.bf16.msra.mxu0 %v2830
        %3304 = vmatprep.subr.bf16.mxu0 %v2835
        %3305 = vmatpush1.bf16.msra.mxu0 %v2834
        %3306 = vmatprep.subr.bf16.mxu0 %v2839
        %3307 = vmatpush1.bf16.msra.mxu0 %v2838
        %3308 = vmatprep.subr.bf16.mxu0 %v2843
        %3309 = vmatpush1.bf16.msra.mxu0 %v2842
        %3310 = vmatprep.subr.bf16.mxu0 %v2847
        %3311 = vmatpush1.bf16.msra.mxu0 %v2846
        %3312 = vmatprep.subr.bf16.mxu0 %v2851
        %3313 = vmatpush1.bf16.msra.mxu0 %v2850
        %3314 = vmatprep.subr.bf16.mxu0 %v2855
        %3315 = vmatpush1.bf16.msra.mxu0 %v2854
        %3316 = vmatprep.subr.bf16.mxu0 %v2859
        %3317 = vmatpush1.bf16.msra.mxu0 %v2858
        %3318 = vmatprep.subr.bf16.mxu0 %v2863
        %3319 = vmatpush1.bf16.msra.mxu0 %v2862
        %3320 = vmatprep.subr.bf16.mxu0 %v2867
        %3321 = vmatpush1.bf16.msra.mxu0 %v2866
        %3322 = vmatprep.subr.bf16.mxu0 %v2871
        %3323 = vmatpush1.bf16.msra.mxu0 %v2870
        %3324 = vmatprep.subr.bf16.mxu0 %v2875
        %3325 = vmatpush1.bf16.msra.mxu0 %v2874
        %3326 = vmatprep.mubr.bf16.mxu0 %v2247
        %3327 = vmatmul.mubr.bf16.gmra.mrb[0].mxu0 %v2246
        %v3328 = vpop.f32.mrb[0].mxu0
        %v3329 = vadd.f32 %v2419, %v3328
        %v3330 = vpop.f32.mrb[0].mxu0
        %v3331 = vadd.f32 %v2423, %v3330
        %v3332 = vpop.f32.mrb[0].mxu0
        %v3333 = vadd.f32 %v2419, %v3332
        %v3334 = vpop.f32.mrb[0].mxu0
        %v3335 = vadd.f32 %v2423, %v3334
        %3336 = vmatprep.mubr.bf16.mxu0 %v2251
        %3337 = vmatmul.mubr.bf16.gmra.mrb[0].mxu0 %v2250
        %v3338 = vpop.f32.mrb[0].mxu0
        %v3339 = vadd.f32 %v2419, %v3338
        %v3340 = vpop.f32.mrb[0].mxu0
        %v3341 = vadd.f32 %v2423, %v3340
        %v3342 = vpop.f32.mrb[0].mxu0
        %v3343 = vadd.f32 %v2419, %v3342
        %v3344 = vpop.f32.mrb[0].mxu0
        %v3345 = vadd.f32 %v2423, %v3344
        %3346 = vmatprep.mubr.bf16.mxu0 %v2255
        %3347 = vmatmul.mubr.bf16.gmra.mrb[0].mxu0 %v2254
        %v3348 = vpop.f32.mrb[0].mxu0
        %v3349 = vadd.f32 %v2419, %v3348
        %v3350 = vpop.f32.mrb[0].mxu0
        %v3351 = vadd.f32 %v2423, %v3350
        %v3352 = vpop.f32.mrb[0].mxu0
        %v3353 = vadd.f32 %v2419, %v3352
        %v3354 = vpop.f32.mrb[0].mxu0
        %v3355 = vadd.f32 %v2423, %v3354
        %3356 = vmatprep.mubr.bf16.mxu0 %v2259
        %3357 = vmatmul.mubr.bf16.gmra.mrb[0].mxu0 %v2258
        %v3358 = vpop.f32.mrb[0].mxu0
        %v3359 = vadd.f32 %v2419, %v3358
        %v3360 = vpop.f32.mrb[0].mxu0
        %v3361 = vadd.f32 %v2423, %v3360
        %v3362 = vpop.f32.mrb[0].mxu0
        %v3363 = vadd.f32 %v2419, %v3362
        %v3364 = vpop.f32.mrb[0].mxu0
        %v3365 = vadd.f32 %v2423, %v3364
        %3366 = vmatprep.mubr.bf16.mxu0 %v2263
        %3367 = vmatmul.mubr.bf16.gmra.mrb[0].mxu0 %v2262
        %v3368 = vpop.f32.mrb[0].mxu0
        %v3369 = vadd.f32 %v2419, %v3368
        %v3370 = vpop.f32.mrb[0].mxu0
        %v3371 = vadd.f32 %v2423, %v3370
        %v3372 = vpop.f32.mrb[0].mxu0
        %v3373 = vadd.f32 %v2419, %v3372
        %v3374 = vpop.f32.mrb[0].mxu0
        %v3375 = vadd.f32 %v2423, %v3374
        %3376 = vmatprep.mubr.bf16.mxu0 %v2267
        %3377 = vmatmul.mubr.bf16.gmra.mrb[0].mxu0 %v2266
        %v3378 = vpop.f32.mrb[0].mxu0
        %v3379 = vadd.f32 %v2419, %v3378
        %v3380 = vpop.f32.mrb[0].mxu0
        %v3381 = vadd.f32 %v2423, %v3380
        %v3382 = vpop.f32.mrb[0].mxu0
        %v3383 = vadd.f32 %v2419, %v3382
        %v3384 = vpop.f32.mrb[0].mxu0
        %v3385 = vadd.f32 %v2423, %v3384
        %3386 = vmatprep.mubr.bf16.mxu0 %v2271
        %3387 = vmatmul.mubr.bf16.gmra.mrb[0].mxu0 %v2270
        %v3388 = vpop.f32.mrb[0].mxu0
        %v3389 = vadd.f32 %v2419, %v3388
        %v3390 = vpop.f32.mrb[0].mxu0
        %v3391 = vadd.f32 %v2423, %v3390
        %v3392 = vpop.f32.mrb[0].mxu0
        %v3393 = vadd.f32 %v2419, %v3392
        %v3394 = vpop.f32.mrb[0].mxu0
        %v3395 = vadd.f32 %v2423, %v3394
        %3396 = vmatprep.mubr.bf16.mxu0 %v2275
        %3397 = vmatmul.mubr.bf16.gmra.mrb[0].mxu0 %v2274
        %v3398 = vpop.f32.mrb[0].mxu0
        %v3399 = vadd.f32 %v2419, %v3398
        %v3400 = vpop.f32.mrb[0].mxu0
        %v3401 = vadd.f32 %v2423, %v3400
        %v3402 = vpop.f32.mrb[0].mxu0
        %v3403 = vadd.f32 %v2419, %v3402
        %v3404 = vpop.f32.mrb[0].mxu0
        %v3405 = vadd.f32 %v2423, %v3404
        %3406 = vdwg.mxu0
        %3407 = vmatprep.subr.bf16.mxu0 %v2879
        %3408 = vmatpush1.bf16.msra.mxu0 %v2878
        %3409 = vmatprep.subr.bf16.mxu0 %v2883
        %3410 = vmatpush1.bf16.msra.mxu0 %v2882
        %3411 = vmatprep.subr.bf16.mxu0 %v2887
        %3412 = vmatpush1.bf16.msra.mxu0 %v2886
        %3413 = vmatprep.subr.bf16.mxu0 %v2891
        %3414 = vmatpush1.bf16.msra.mxu0 %v2890
        %3415 = vmatprep.subr.bf16.mxu0 %v2895
        %3416 = vmatpush1.bf16.msra.mxu0 %v2894
        %3417 = vmatprep.subr.bf16.mxu0 %v2899
        %3418 = vmatpush1.bf16.msra.mxu0 %v2898
        %3419 = vmatprep.subr.bf16.mxu0 %v2903
        %3420 = vmatpush1.bf16.msra.mxu0 %v2902
        %3421 = vmatprep.subr.bf16.mxu0 %v2907
        %3422 = vmatpush1.bf16.msra.mxu0 %v2906
        %3423 = vmatprep.subr.bf16.mxu0 %v2911
        %3424 = vmatpush1.bf16.msra.mxu0 %v2910
        %3425 = vmatprep.subr.bf16.mxu0 %v2915
        %3426 = vmatpush1.bf16.msra.mxu0 %v2914
        %3427 = vmatprep.subr.bf16.mxu0 %v2919
        %3428 = vmatpush1.bf16.msra.mxu0 %v2918
        %3429 = vmatprep.subr.bf16.mxu0 %v2923
        %3430 = vmatpush1.bf16.msra.mxu0 %v2922
        %3431 = vmatprep.subr.bf16.mxu0 %v2927
        %3432 = vmatpush1.bf16.msra.mxu0 %v2926
        %3433 = vmatprep.subr.bf16.mxu0 %v2931
        %3434 = vmatpush1.bf16.msra.mxu0 %v2930
        %3435 = vmatprep.subr.bf16.mxu0 %v2935
        %3436 = vmatpush1.bf16.msra.mxu0 %v2934
        %3437 = vmatprep.subr.bf16.mxu0 %v2939
        %3438 = vmatpush1.bf16.msra.mxu0 %v2938
        %3439 = vmatprep.mubr.bf16.mxu0 %v2249
        %3440 = vmatmul.mubr.bf16.gmra.mrb[0].mxu0 %v2248
        %v3441 = vpop.f32.mrb[0].mxu0
        %v3442 = vadd.f32 %v3329, %v3441
        %v3443 = vpop.f32.mrb[0].mxu0
        %v3444 = vadd.f32 %v3331, %v3443
        %v3445 = vpop.f32.mrb[0].mxu0
        %v3446 = vadd.f32 %v3333, %v3445
        %v3447 = vpop.f32.mrb[0].mxu0
        %v3448 = vadd.f32 %v3335, %v3447
        %3449 = vmatprep.mubr.bf16.mxu0 %v2253
        %3450 = vmatmul.mubr.bf16.gmra.mrb[0].mxu0 %v2252
        %v3451 = vpop.f32.mrb[0].mxu0
        %v3452 = vadd.f32 %v3339, %v3451
        %v3453 = vpop.f32.mrb[0].mxu0
        %v3454 = vadd.f32 %v3341, %v3453
        %v3455 = vpop.f32.mrb[0].mxu0
        %v3456 = vadd.f32 %v3343, %v3455
        %v3457 = vpop.f32.mrb[0].mxu0
        %v3458 = vadd.f32 %v3345, %v3457
        %3459 = vmatprep.mubr.bf16.mxu0 %v2257
        %3460 = vmatmul.mubr.bf16.gmra.mrb[0].mxu0 %v2256
        %v3461 = vpop.f32.mrb[0].mxu0
        %v3462 = vadd.f32 %v3349, %v3461
        %v3463 = vpop.f32.mrb[0].mxu0
        %v3464 = vadd.f32 %v3351, %v3463
        %v3465 = vpop.f32.mrb[0].mxu0
        %v3466 = vadd.f32 %v3353, %v3465
        %v3467 = vpop.f32.mrb[0].mxu0
        %v3468 = vadd.f32 %v3355, %v3467
        %3469 = vmatprep.mubr.bf16.mxu0 %v2261
        %3470 = vmatmul.mubr.bf16.gmra.mrb[0].mxu0 %v2260
        %v3471 = vpop.f32.mrb[0].mxu0
        %v3472 = vadd.f32 %v3359, %v3471
        %v3473 = vpop.f32.mrb[0].mxu0
        %v3474 = vadd.f32 %v3361, %v3473
        %v3475 = vpop.f32.mrb[0].mxu0
        %v3476 = vadd.f32 %v3363, %v3475
        %v3477 = vpop.f32.mrb[0].mxu0
        %v3478 = vadd.f32 %v3365, %v3477
        %3479 = vmatprep.mubr.bf16.mxu0 %v2265
        %3480 = vmatmul.mubr.bf16.gmra.mrb[0].mxu0 %v2264
        %v3481 = vpop.f32.mrb[0].mxu0
        %v3482 = vadd.f32 %v3369, %v3481
        %v3483 = vpop.f32.mrb[0].mxu0
        %v3484 = vadd.f32 %v3371, %v3483
        %v3485 = vpop.f32.mrb[0].mxu0
        %v3486 = vadd.f32 %v3373, %v3485
        %v3487 = vpop.f32.mrb[0].mxu0
        %v3488 = vadd.f32 %v3375, %v3487
        %3489 = vmatprep.mubr.bf16.mxu0 %v2269
        %3490 = vmatmul.mubr.bf16.gmra.mrb[0].mxu0 %v2268
        %v3491 = vpop.f32.mrb[0].mxu0
        %v3492 = vadd.f32 %v3379, %v3491
        %v3493 = vpop.f32.mrb[0].mxu0
        %v3494 = vadd.f32 %v3381, %v3493
        %v3495 = vpop.f32.mrb[0].mxu0
        %v3496 = vadd.f32 %v3383, %v3495
        %v3497 = vpop.f32.mrb[0].mxu0
        %v3498 = vadd.f32 %v3385, %v3497
        %3499 = vmatprep.mubr.bf16.mxu0 %v2273
        %3500 = vmatmul.mubr.bf16.gmra.mrb[0].mxu0 %v2272
        %v3501 = vpop.f32.mrb[0].mxu0
        %v3502 = vadd.f32 %v3389, %v3501
        %v3503 = vpop.f32.mrb[0].mxu0
        %v3504 = vadd.f32 %v3391, %v3503
        %v3505 = vpop.f32.mrb[0].mxu0
        %v3506 = vadd.f32 %v3393, %v3505
        %v3507 = vpop.f32.mrb[0].mxu0
        %v3508 = vadd.f32 %v3395, %v3507
        %3509 = vmatprep.mubr.bf16.mxu0 %v2277
        %3510 = vmatmul.mubr.bf16.gmra.mrb[0].mxu0 %v2276
        %v3511 = vpop.f32.mrb[0].mxu0
        %v3512 = vadd.f32 %v3399, %v3511
        %v3513 = vpop.f32.mrb[0].mxu0
        %v3514 = vadd.f32 %v3401, %v3513
        %v3515 = vpop.f32.mrb[0].mxu0
        %v3516 = vadd.f32 %v3403, %v3515
        %v3517 = vpop.f32.mrb[0].mxu0
        %v3518 = vadd.f32 %v3405, %v3517
        %3519 = vdwg.mxu0
        %v3520 = vmax.f32 %v3216, 0.0
        %v3521 = vmax.f32 %v3218, 0.0
        %v3522 = vmax.f32 %v3442, 0.0
        %v3523 = vmax.f32 %v3444, 0.0
        %v3524 = vmax.f32 %v3220, 0.0
        %v3525 = vmax.f32 %v3222, 0.0
        %v3526 = vmax.f32 %v3446, 0.0
        %v3527 = vmax.f32 %v3448, 0.0
        %v3528 = vmax.f32 %v3226, 0.0
        %v3529 = vmax.f32 %v3228, 0.0
        %v3530 = vmax.f32 %v3452, 0.0
        %v3531 = vmax.f32 %v3454, 0.0
        %v3532 = vmax.f32 %v3230, 0.0
        %v3533 = vmax.f32 %v3232, 0.0
        %v3534 = vmax.f32 %v3456, 0.0
        %v3535 = vmax.f32 %v3458, 0.0
        %v3536 = vmax.f32 %v3236, 0.0
        %v3537 = vmax.f32 %v3238, 0.0
        %v3538 = vmax.f32 %v3462, 0.0
        %v3539 = vmax.f32 %v3464, 0.0
        %v3540 = vmax.f32 %v3240, 0.0
        %v3541 = vmax.f32 %v3242, 0.0
        %v3542 = vmax.f32 %v3466, 0.0
        %v3543 = vmax.f32 %v3468, 0.0
        %v3544 = vmax.f32 %v3246, 0.0
        %v3545 = vmax.f32 %v3248, 0.0
        %v3546 = vmax.f32 %v3472, 0.0
        %v3547 = vmax.f32 %v3474, 0.0
        %v3548 = vmax.f32 %v3250, 0.0
        %v3549 = vmax.f32 %v3252, 0.0
        %v3550 = vmax.f32 %v3476, 0.0
        %v3551 = vmax.f32 %v3478, 0.0
        %v3552 = vmax.f32 %v3256, 0.0
        %v3553 = vmax.f32 %v3258, 0.0
        %v3554 = vmax.f32 %v3482, 0.0
        %v3555 = vmax.f32 %v3484, 0.0
        %v3556 = vmax.f32 %v3260, 0.0
        %v3557 = vmax.f32 %v3262, 0.0
        %v3558 = vmax.f32 %v3486, 0.0
        %v3559 = vmax.f32 %v3488, 0.0
        %v3560 = vmax.f32 %v3266, 0.0
        %v3561 = vmax.f32 %v3268, 0.0
        %v3562 = vmax.f32 %v3492, 0.0
        %v3563 = vmax.f32 %v3494, 0.0
        %v3564 = vmax.f32 %v3270, 0.0
        %v3565 = vmax.f32 %v3272, 0.0
        %v3566 = vmax.f32 %v3496, 0.0
        %v3567 = vmax.f32 %v3498, 0.0
        %v3568 = vmax.f32 %v3276, 0.0
        %v3569 = vmax.f32 %v3278, 0.0
        %v3570 = vmax.f32 %v3502, 0.0
        %v3571 = vmax.f32 %v3504, 0.0
        %v3572 = vmax.f32 %v3280, 0.0
        %v3573 = vmax.f32 %v3282, 0.0
        %v3574 = vmax.f32 %v3506, 0.0
        %v3575 = vmax.f32 %v3508, 0.0
        %v3576 = vmax.f32 %v3286, 0.0
        %v3577 = vmax.f32 %v3288, 0.0
        %v3578 = vmax.f32 %v3512, 0.0
        %v3579 = vmax.f32 %v3514, 0.0
        %v3580 = vmax.f32 %v3290, 0.0
        %v3581 = vmax.f32 %v3292, 0.0
        %v3582 = vmax.f32 %v3516, 0.0
        %v3583 = vmax.f32 %v3518, 0.0
        %v3584 = vpack.c.bf16 %v3524, %v3520
        %v3585 = vpack.c.bf16 %v3525, %v3521
        %v3586 = vpack.c.bf16 %v3526, %v3522
        %v3587 = vpack.c.bf16 %v3527, %v3523
        %v3588 = vpack.c.bf16 %v3532, %v3528
        %v3589 = vpack.c.bf16 %v3533, %v3529
        %v3590 = vpack.c.bf16 %v3534, %v3530
        %v3591 = vpack.c.bf16 %v3535, %v3531
        %v3592 = vpack.c.bf16 %v3540, %v3536
        %v3593 = vpack.c.bf16 %v3541, %v3537
        %v3594 = vpack.c.bf16 %v3542, %v3538
        %v3595 = vpack.c.bf16 %v3543, %v3539
        %v3596 = vpack.c.bf16 %v3548, %v3544
        %v3597 = vpack.c.bf16 %v3549, %v3545
        %v3598 = vpack.c.bf16 %v3550, %v3546
        %v3599 = vpack.c.bf16 %v3551, %v3547
        %v3600 = vpack.c.bf16 %v3556, %v3552
        %v3601 = vpack.c.bf16 %v3557, %v3553
        %v3602 = vpack.c.bf16 %v3558, %v3554
        %v3603 = vpack.c.bf16 %v3559, %v3555
        %v3604 = vpack.c.bf16 %v3564, %v3560
        %v3605 = vpack.c.bf16 %v3565, %v3561
        %v3606 = vpack.c.bf16 %v3566, %v3562
        %v3607 = vpack.c.bf16 %v3567, %v3563
        %v3608 = vpack.c.bf16 %v3572, %v3568
        %v3609 = vpack.c.bf16 %v3573, %v3569
        %v3610 = vpack.c.bf16 %v3574, %v3570
        %v3611 = vpack.c.bf16 %v3575, %v3571
        %v3612 = vpack.c.bf16 %v3580, %v3576
        %v3613 = vpack.c.bf16 %v3581, %v3577
        %v3614 = vpack.c.bf16 %v3582, %v3578
        %v3615 = vpack.c.bf16 %v3583, %v3579
        %v3616 = vld [vmem:[#allocation7] sm:$0xff]
        %v3617 = vld [vmem:[#allocation7 + $0x8] sm:$0xff]
        %v3618 = vld [vmem:[#allocation7 + $0x10] sm:$0xff]
        %v3619 = vld [vmem:[#allocation7 + $0x18] sm:$0xff]
        %v3620 = vld [vmem:[#allocation7 + $0x20] sm:$0xff]
        %v3621 = vld [vmem:[#allocation7 + $0x28] sm:$0xff]
        %v3622 = vld [vmem:[#allocation7 + $0x30] sm:$0xff]
        %v3623 = vld [vmem:[#allocation7 + $0x38] sm:$0xff]
        %v3624 = vld [vmem:[#allocation7 + $0x40] sm:$0xff]
        %v3625 = vld [vmem:[#allocation7 + $0x48] sm:$0xff]
        %v3626 = vld [vmem:[#allocation7 + $0x50] sm:$0xff]
        %v3627 = vld [vmem:[#allocation7 + $0x58] sm:$0xff]
        %v3628 = vld [vmem:[#allocation7 + $0x60] sm:$0xff]
        %v3629 = vld [vmem:[#allocation7 + $0x68] sm:$0xff]
        %v3630 = vld [vmem:[#allocation7 + $0x70] sm:$0xff]
        %v3631 = vld [vmem:[#allocation7 + $0x78] sm:$0xff]
        %v3632 = vld [vmem:[#allocation7 + $0x80] sm:$0xff]
        %v3633 = vld [vmem:[#allocation7 + $0x88] sm:$0xff]
        %v3634 = vld [vmem:[#allocation7 + $0x90] sm:$0xff]
        %v3635 = vld [vmem:[#allocation7 + $0x98] sm:$0xff]
        %v3636 = vld [vmem:[#allocation7 + $0xa0] sm:$0xff]
        %v3637 = vld [vmem:[#allocation7 + $0xa8] sm:$0xff]
        %v3638 = vld [vmem:[#allocation7 + $0xb0] sm:$0xff]
        %v3639 = vld [vmem:[#allocation7 + $0xb8] sm:$0xff]
        %v3640 = vld [vmem:[#allocation7 + $0xc0] sm:$0xff]
        %v3641 = vld [vmem:[#allocation7 + $0xc8] sm:$0xff]
        %v3642 = vld [vmem:[#allocation7 + $0xd0] sm:$0xff]
        %v3643 = vld [vmem:[#allocation7 + $0xd8] sm:$0xff]
        %v3644 = vld [vmem:[#allocation7 + $0xe0] sm:$0xff]
        %v3645 = vld [vmem:[#allocation7 + $0xe8] sm:$0xff]
        %v3646 = vld [vmem:[#allocation7 + $0xf0] sm:$0xff]
        %v3647 = vld [vmem:[#allocation7 + $0xf8] sm:$0xff]
        %v3648 = vld [vmem:[#allocation7 + $0x100] sm:$0xff]
        %v3649 = vld [vmem:[#allocation7 + $0x108] sm:$0xff]
        %v3650 = vld [vmem:[#allocation7 + $0x110] sm:$0xff]
        %v3651 = vld [vmem:[#allocation7 + $0x118] sm:$0xff]
        %v3652 = vld [vmem:[#allocation7 + $0x120] sm:$0xff]
        %v3653 = vld [vmem:[#allocation7 + $0x128] sm:$0xff]
        %v3654 = vld [vmem:[#allocation7 + $0x130] sm:$0xff]
        %v3655 = vld [vmem:[#allocation7 + $0x138] sm:$0xff]
        %v3656 = vld [vmem:[#allocation7 + $0x140] sm:$0xff]
        %v3657 = vld [vmem:[#allocation7 + $0x148] sm:$0xff]
        %v3658 = vld [vmem:[#allocation7 + $0x150] sm:$0xff]
        %v3659 = vld [vmem:[#allocation7 + $0x158] sm:$0xff]
        %v3660 = vld [vmem:[#allocation7 + $0x160] sm:$0xff]
        %v3661 = vld [vmem:[#allocation7 + $0x168] sm:$0xff]
        %v3662 = vld [vmem:[#allocation7 + $0x170] sm:$0xff]
        %v3663 = vld [vmem:[#allocation7 + $0x178] sm:$0xff]
        %v3664 = vld [vmem:[#allocation7 + $0x180] sm:$0xff]
        %v3665 = vld [vmem:[#allocation7 + $0x188] sm:$0xff]
        %v3666 = vld [vmem:[#allocation7 + $0x190] sm:$0xff]
        %v3667 = vld [vmem:[#allocation7 + $0x198] sm:$0xff]
        %v3668 = vld [vmem:[#allocation7 + $0x1a0] sm:$0xff]
        %v3669 = vld [vmem:[#allocation7 + $0x1a8] sm:$0xff]
        %v3670 = vld [vmem:[#allocation7 + $0x1b0] sm:$0xff]
        %v3671 = vld [vmem:[#allocation7 + $0x1b8] sm:$0xff]
        %v3672 = vld [vmem:[#allocation7 + $0x1c0] sm:$0xff]
        %v3673 = vld [vmem:[#allocation7 + $0x1c8] sm:$0xff]
        %v3674 = vld [vmem:[#allocation7 + $0x1d0] sm:$0xff]
        %v3675 = vld [vmem:[#allocation7 + $0x1d8] sm:$0xff]
        %v3676 = vld [vmem:[#allocation7 + $0x1e0] sm:$0xff]
        %v3677 = vld [vmem:[#allocation7 + $0x1e8] sm:$0xff]
        %v3678 = vld [vmem:[#allocation7 + $0x1f0] sm:$0xff]
        %v3679 = vld [vmem:[#allocation7 + $0x1f8] sm:$0xff]
        %v3680 = vld [vmem:[#allocation7 + $0x200] sm:$0xff]
        %v3681 = vld [vmem:[#allocation7 + $0x208] sm:$0xff]
        %v3682 = vld [vmem:[#allocation7 + $0x210] sm:$0xff]
        %v3683 = vld [vmem:[#allocation7 + $0x218] sm:$0xff]
        %v3684 = vld [vmem:[#allocation7 + $0x220] sm:$0xff]
        %v3685 = vld [vmem:[#allocation7 + $0x228] sm:$0xff]
        %v3686 = vld [vmem:[#allocation7 + $0x230] sm:$0xff]
        %v3687 = vld [vmem:[#allocation7 + $0x238] sm:$0xff]
        %v3688 = vld [vmem:[#allocation7 + $0x240] sm:$0xff]
        %v3689 = vld [vmem:[#allocation7 + $0x248] sm:$0xff]
        %v3690 = vld [vmem:[#allocation7 + $0x250] sm:$0xff]
        %v3691 = vld [vmem:[#allocation7 + $0x258] sm:$0xff]
        %v3692 = vld [vmem:[#allocation7 + $0x260] sm:$0xff]
        %v3693 = vld [vmem:[#allocation7 + $0x268] sm:$0xff]
        %v3694 = vld [vmem:[#allocation7 + $0x270] sm:$0xff]
        %v3695 = vld [vmem:[#allocation7 + $0x278] sm:$0xff]
        %v3696 = vld [vmem:[#allocation7 + $0x280] sm:$0xff]
        %v3697 = vld [vmem:[#allocation7 + $0x288] sm:$0xff]
        %v3698 = vld [vmem:[#allocation7 + $0x290] sm:$0xff]
        %v3699 = vld [vmem:[#allocation7 + $0x298] sm:$0xff]
        %v3700 = vld [vmem:[#allocation7 + $0x2a0] sm:$0xff]
        %v3701 = vld [vmem:[#allocation7 + $0x2a8] sm:$0xff]
        %v3702 = vld [vmem:[#allocation7 + $0x2b0] sm:$0xff]
        %v3703 = vld [vmem:[#allocation7 + $0x2b8] sm:$0xff]
        %v3704 = vld [vmem:[#allocation7 + $0x2c0] sm:$0xff]
        %v3705 = vld [vmem:[#allocation7 + $0x2c8] sm:$0xff]
        %v3706 = vld [vmem:[#allocation7 + $0x2d0] sm:$0xff]
        %v3707 = vld [vmem:[#allocation7 + $0x2d8] sm:$0xff]
        %v3708 = vld [vmem:[#allocation7 + $0x2e0] sm:$0xff]
        %v3709 = vld [vmem:[#allocation7 + $0x2e8] sm:$0xff]
        %v3710 = vld [vmem:[#allocation7 + $0x2f0] sm:$0xff]
        %v3711 = vld [vmem:[#allocation7 + $0x2f8] sm:$0xff]
        %v3712 = vld [vmem:[#allocation7 + $0x300] sm:$0xff]
        %v3713 = vld [vmem:[#allocation7 + $0x308] sm:$0xff]
        %v3714 = vld [vmem:[#allocation7 + $0x310] sm:$0xff]
        %v3715 = vld [vmem:[#allocation7 + $0x318] sm:$0xff]
        %v3716 = vld [vmem:[#allocation7 + $0x320] sm:$0xff]
        %v3717 = vld [vmem:[#allocation7 + $0x328] sm:$0xff]
        %v3718 = vld [vmem:[#allocation7 + $0x330] sm:$0xff]
        %v3719 = vld [vmem:[#allocation7 + $0x338] sm:$0xff]
        %v3720 = vld [vmem:[#allocation7 + $0x340] sm:$0xff]
        %v3721 = vld [vmem:[#allocation7 + $0x348] sm:$0xff]
        %v3722 = vld [vmem:[#allocation7 + $0x350] sm:$0xff]
        %v3723 = vld [vmem:[#allocation7 + $0x358] sm:$0xff]
        %v3724 = vld [vmem:[#allocation7 + $0x360] sm:$0xff]
        %v3725 = vld [vmem:[#allocation7 + $0x368] sm:$0xff]
        %v3726 = vld [vmem:[#allocation7 + $0x370] sm:$0xff]
        %v3727 = vld [vmem:[#allocation7 + $0x378] sm:$0xff]
        %v3728 = vld [vmem:[#allocation7 + $0x380] sm:$0xff]
        %v3729 = vld [vmem:[#allocation7 + $0x388] sm:$0xff]
        %v3730 = vld [vmem:[#allocation7 + $0x390] sm:$0xff]
        %v3731 = vld [vmem:[#allocation7 + $0x398] sm:$0xff]
        %v3732 = vld [vmem:[#allocation7 + $0x3a0] sm:$0xff]
        %v3733 = vld [vmem:[#allocation7 + $0x3a8] sm:$0xff]
        %v3734 = vld [vmem:[#allocation7 + $0x3b0] sm:$0xff]
        %v3735 = vld [vmem:[#allocation7 + $0x3b8] sm:$0xff]
        %v3736 = vld [vmem:[#allocation7 + $0x3c0] sm:$0xff]
        %v3737 = vld [vmem:[#allocation7 + $0x3c8] sm:$0xff]
        %v3738 = vld [vmem:[#allocation7 + $0x3d0] sm:$0xff]
        %v3739 = vld [vmem:[#allocation7 + $0x3d8] sm:$0xff]
        %v3740 = vld [vmem:[#allocation7 + $0x3e0] sm:$0xff]
        %v3741 = vld [vmem:[#allocation7 + $0x3e8] sm:$0xff]
        %v3742 = vld [vmem:[#allocation7 + $0x3f0] sm:$0xff]
        %v3743 = vld [vmem:[#allocation7 + $0x3f8] sm:$0xff]
        %v3744 = vld [vmem:[%s8] sm:$0xf]
        %v3746 = vlaneseq
        %v3747 = vshrl.u32 %v3746, 7
        %v3748 = vsub.s32 0, %v3747
        %v3749 = vrot.slane %v3744, %v3748
        %v3750 = vlaneseq
        %v3751 = vshrl.u32 %v3750, 7
        %v3752 = vsub.s32 1, %v3751
        %v3753 = vrot.slane %v3744, %v3752
        %v3754 = vlaneseq
        %v3755 = vshrl.u32 %v3754, 7
        %v3756 = vsub.s32 2, %v3755
        %v3757 = vrot.slane %v3744, %v3756
        %v3758 = vlaneseq
        %v3759 = vshrl.u32 %v3758, 7
        %v3760 = vsub.s32 3, %v3759
        %v3761 = vrot.slane %v3744, %v3760
        %v3894 = vunpack.c.l.b16 %v3616
        %v3895 = vunpack.c.h.b16 %v3616
        %v3896 = vunpack.c.l.b16 %v3617
        %v3897 = vunpack.c.h.b16 %v3617
        %v3898 = vunpack.c.l.b16 %v3618
        %v3899 = vunpack.c.h.b16 %v3618
        %v3900 = vunpack.c.l.b16 %v3619
        %v3901 = vunpack.c.h.b16 %v3619
        %v3902 = vunpack.c.l.b16 %v3620
        %v3903 = vunpack.c.h.b16 %v3620
        %v3904 = vunpack.c.l.b16 %v3621
        %v3905 = vunpack.c.h.b16 %v3621
        %v3906 = vunpack.c.l.b16 %v3622
        %v3907 = vunpack.c.h.b16 %v3622
        %v3908 = vunpack.c.l.b16 %v3623
        %v3909 = vunpack.c.h.b16 %v3623
        %v3910 = vunpack.c.l.b16 %v3624
        %v3911 = vunpack.c.h.b16 %v3624
        %v3912 = vunpack.c.l.b16 %v3625
        %v3913 = vunpack.c.h.b16 %v3625
        %v3914 = vunpack.c.l.b16 %v3626
        %v3915 = vunpack.c.h.b16 %v3626
        %v3916 = vunpack.c.l.b16 %v3627
        %v3917 = vunpack.c.h.b16 %v3627
        %v3918 = vunpack.c.l.b16 %v3628
        %v3919 = vunpack.c.h.b16 %v3628
        %v3920 = vunpack.c.l.b16 %v3629
        %v3921 = vunpack.c.h.b16 %v3629
        %v3922 = vunpack.c.l.b16 %v3630
        %v3923 = vunpack.c.h.b16 %v3630
        %v3924 = vunpack.c.l.b16 %v3631
        %v3925 = vunpack.c.h.b16 %v3631
        %v3926 = vunpack.c.l.b16 %v3632
        %v3927 = vunpack.c.h.b16 %v3632
        %v3928 = vunpack.c.l.b16 %v3633
        %v3929 = vunpack.c.h.b16 %v3633
        %v3930 = vunpack.c.l.b16 %v3634
        %v3931 = vunpack.c.h.b16 %v3634
        %v3932 = vunpack.c.l.b16 %v3635
        %v3933 = vunpack.c.h.b16 %v3635
        %v3934 = vunpack.c.l.b16 %v3636
        %v3935 = vunpack.c.h.b16 %v3636
        %v3936 = vunpack.c.l.b16 %v3637
        %v3937 = vunpack.c.h.b16 %v3637
        %v3938 = vunpack.c.l.b16 %v3638
        %v3939 = vunpack.c.h.b16 %v3638
        %v3940 = vunpack.c.l.b16 %v3639
        %v3941 = vunpack.c.h.b16 %v3639
        %v3942 = vunpack.c.l.b16 %v3640
        %v3943 = vunpack.c.h.b16 %v3640
        %v3944 = vunpack.c.l.b16 %v3641
        %v3945 = vunpack.c.h.b16 %v3641
        %v3946 = vunpack.c.l.b16 %v3642
        %v3947 = vunpack.c.h.b16 %v3642
        %v3948 = vunpack.c.l.b16 %v3643
        %v3949 = vunpack.c.h.b16 %v3643
        %v3950 = vunpack.c.l.b16 %v3644
        %v3951 = vunpack.c.h.b16 %v3644
        %v3952 = vunpack.c.l.b16 %v3645
        %v3953 = vunpack.c.h.b16 %v3645
        %v3954 = vunpack.c.l.b16 %v3646
        %v3955 = vunpack.c.h.b16 %v3646
        %v3956 = vunpack.c.l.b16 %v3647
        %v3957 = vunpack.c.h.b16 %v3647
        %v3958 = vunpack.c.l.b16 %v3648
        %v3959 = vunpack.c.h.b16 %v3648
        %v3960 = vunpack.c.l.b16 %v3649
        %v3961 = vunpack.c.h.b16 %v3649
        %v3962 = vunpack.c.l.b16 %v3650
        %v3963 = vunpack.c.h.b16 %v3650
        %v3964 = vunpack.c.l.b16 %v3651
        %v3965 = vunpack.c.h.b16 %v3651
        %v3966 = vunpack.c.l.b16 %v3652
        %v3967 = vunpack.c.h.b16 %v3652
        %v3968 = vunpack.c.l.b16 %v3653
        %v3969 = vunpack.c.h.b16 %v3653
        %v3970 = vunpack.c.l.b16 %v3654
        %v3971 = vunpack.c.h.b16 %v3654
        %v3972 = vunpack.c.l.b16 %v3655
        %v3973 = vunpack.c.h.b16 %v3655
        %v3974 = vunpack.c.l.b16 %v3656
        %v3975 = vunpack.c.h.b16 %v3656
        %v3976 = vunpack.c.l.b16 %v3657
        %v3977 = vunpack.c.h.b16 %v3657
        %v3978 = vunpack.c.l.b16 %v3658
        %v3979 = vunpack.c.h.b16 %v3658
        %v3980 = vunpack.c.l.b16 %v3659
        %v3981 = vunpack.c.h.b16 %v3659
        %v3982 = vunpack.c.l.b16 %v3660
        %v3983 = vunpack.c.h.b16 %v3660
        %v3984 = vunpack.c.l.b16 %v3661
        %v3985 = vunpack.c.h.b16 %v3661
        %v3986 = vunpack.c.l.b16 %v3662
        %v3987 = vunpack.c.h.b16 %v3662
        %v3988 = vunpack.c.l.b16 %v3663
        %v3989 = vunpack.c.h.b16 %v3663
        %v3990 = vunpack.c.l.b16 %v3664
        %v3991 = vunpack.c.h.b16 %v3664
        %v3992 = vunpack.c.l.b16 %v3665
        %v3993 = vunpack.c.h.b16 %v3665
        %v3994 = vunpack.c.l.b16 %v3666
        %v3995 = vunpack.c.h.b16 %v3666
        %v3996 = vunpack.c.l.b16 %v3667
        %v3997 = vunpack.c.h.b16 %v3667
        %v3998 = vunpack.c.l.b16 %v3668
        %v3999 = vunpack.c.h.b16 %v3668
        %v4000 = vunpack.c.l.b16 %v3669
        %v4001 = vunpack.c.h.b16 %v3669
        %v4002 = vunpack.c.l.b16 %v3670
        %v4003 = vunpack.c.h.b16 %v3670
        %v4004 = vunpack.c.l.b16 %v3671
        %v4005 = vunpack.c.h.b16 %v3671
        %v4006 = vunpack.c.l.b16 %v3672
        %v4007 = vunpack.c.h.b16 %v3672
        %v4008 = vunpack.c.l.b16 %v3673
        %v4009 = vunpack.c.h.b16 %v3673
        %v4010 = vunpack.c.l.b16 %v3674
        %v4011 = vunpack.c.h.b16 %v3674
        %v4012 = vunpack.c.l.b16 %v3675
        %v4013 = vunpack.c.h.b16 %v3675
        %v4014 = vunpack.c.l.b16 %v3676
        %v4015 = vunpack.c.h.b16 %v3676
        %v4016 = vunpack.c.l.b16 %v3677
        %v4017 = vunpack.c.h.b16 %v3677
        %v4018 = vunpack.c.l.b16 %v3678
        %v4019 = vunpack.c.h.b16 %v3678
        %v4020 = vunpack.c.l.b16 %v3679
        %v4021 = vunpack.c.h.b16 %v3679
        %v4022 = vunpack.c.l.b16 %v3680
        %v4023 = vunpack.c.h.b16 %v3680
        %v4024 = vunpack.c.l.b16 %v3681
        %v4025 = vunpack.c.h.b16 %v3681
        %v4026 = vunpack.c.l.b16 %v3682
        %v4027 = vunpack.c.h.b16 %v3682
        %v4028 = vunpack.c.l.b16 %v3683
        %v4029 = vunpack.c.h.b16 %v3683
        %v4030 = vunpack.c.l.b16 %v3684
        %v4031 = vunpack.c.h.b16 %v3684
        %v4032 = vunpack.c.l.b16 %v3685
        %v4033 = vunpack.c.h.b16 %v3685
        %v4034 = vunpack.c.l.b16 %v3686
        %v4035 = vunpack.c.h.b16 %v3686
        %v4036 = vunpack.c.l.b16 %v3687
        %v4037 = vunpack.c.h.b16 %v3687
        %v4038 = vunpack.c.l.b16 %v3688
        %v4039 = vunpack.c.h.b16 %v3688
        %v4040 = vunpack.c.l.b16 %v3689
        %v4041 = vunpack.c.h.b16 %v3689
        %v4042 = vunpack.c.l.b16 %v3690
        %v4043 = vunpack.c.h.b16 %v3690
        %v4044 = vunpack.c.l.b16 %v3691
        %v4045 = vunpack.c.h.b16 %v3691
        %v4046 = vunpack.c.l.b16 %v3692
        %v4047 = vunpack.c.h.b16 %v3692
        %v4048 = vunpack.c.l.b16 %v3693
        %v4049 = vunpack.c.h.b16 %v3693
        %v4050 = vunpack.c.l.b16 %v3694
        %v4051 = vunpack.c.h.b16 %v3694
        %v4052 = vunpack.c.l.b16 %v3695
        %v4053 = vunpack.c.h.b16 %v3695
        %v4054 = vunpack.c.l.b16 %v3696
        %v4055 = vunpack.c.h.b16 %v3696
        %v4056 = vunpack.c.l.b16 %v3697
        %v4057 = vunpack.c.h.b16 %v3697
        %v4058 = vunpack.c.l.b16 %v3698
        %v4059 = vunpack.c.h.b16 %v3698
        %v4060 = vunpack.c.l.b16 %v3699
        %v4061 = vunpack.c.h.b16 %v3699
        %v4062 = vunpack.c.l.b16 %v3700
        %v4063 = vunpack.c.h.b16 %v3700
        %v4064 = vunpack.c.l.b16 %v3701
        %v4065 = vunpack.c.h.b16 %v3701
        %v4066 = vunpack.c.l.b16 %v3702
        %v4067 = vunpack.c.h.b16 %v3702
        %v4068 = vunpack.c.l.b16 %v3703
        %v4069 = vunpack.c.h.b16 %v3703
        %v4070 = vunpack.c.l.b16 %v3704
        %v4071 = vunpack.c.h.b16 %v3704
        %v4072 = vunpack.c.l.b16 %v3705
        %v4073 = vunpack.c.h.b16 %v3705
        %v4074 = vunpack.c.l.b16 %v3706
        %v4075 = vunpack.c.h.b16 %v3706
        %v4076 = vunpack.c.l.b16 %v3707
        %v4077 = vunpack.c.h.b16 %v3707
        %v4078 = vunpack.c.l.b16 %v3708
        %v4079 = vunpack.c.h.b16 %v3708
        %v4080 = vunpack.c.l.b16 %v3709
        %v4081 = vunpack.c.h.b16 %v3709
        %v4082 = vunpack.c.l.b16 %v3710
        %v4083 = vunpack.c.h.b16 %v3710
        %v4084 = vunpack.c.l.b16 %v3711
        %v4085 = vunpack.c.h.b16 %v3711
        %v4086 = vunpack.c.l.b16 %v3712
        %v4087 = vunpack.c.h.b16 %v3712
        %v4088 = vunpack.c.l.b16 %v3713
        %v4089 = vunpack.c.h.b16 %v3713
        %v4090 = vunpack.c.l.b16 %v3714
        %v4091 = vunpack.c.h.b16 %v3714
        %v4092 = vunpack.c.l.b16 %v3715
        %v4093 = vunpack.c.h.b16 %v3715
        %v4094 = vunpack.c.l.b16 %v3716
        %v4095 = vunpack.c.h.b16 %v3716
        %v4096 = vunpack.c.l.b16 %v3717
        %v4097 = vunpack.c.h.b16 %v3717
        %v4098 = vunpack.c.l.b16 %v3718
        %v4099 = vunpack.c.h.b16 %v3718
        %v4100 = vunpack.c.l.b16 %v3719
        %v4101 = vunpack.c.h.b16 %v3719
        %v4102 = vunpack.c.l.b16 %v3720
        %v4103 = vunpack.c.h.b16 %v3720
        %v4104 = vunpack.c.l.b16 %v3721
        %v4105 = vunpack.c.h.b16 %v3721
        %v4106 = vunpack.c.l.b16 %v3722
        %v4107 = vunpack.c.h.b16 %v3722
        %v4108 = vunpack.c.l.b16 %v3723
        %v4109 = vunpack.c.h.b16 %v3723
        %v4110 = vunpack.c.l.b16 %v3724
        %v4111 = vunpack.c.h.b16 %v3724
        %v4112 = vunpack.c.l.b16 %v3725
        %v4113 = vunpack.c.h.b16 %v3725
        %v4114 = vunpack.c.l.b16 %v3726
        %v4115 = vunpack.c.h.b16 %v3726
        %v4116 = vunpack.c.l.b16 %v3727
        %v4117 = vunpack.c.h.b16 %v3727
        %v4118 = vunpack.c.l.b16 %v3728
        %v4119 = vunpack.c.h.b16 %v3728
        %v4120 = vunpack.c.l.b16 %v3729
        %v4121 = vunpack.c.h.b16 %v3729
        %v4122 = vunpack.c.l.b16 %v3730
        %v4123 = vunpack.c.h.b16 %v3730
        %v4124 = vunpack.c.l.b16 %v3731
        %v4125 = vunpack.c.h.b16 %v3731
        %v4126 = vunpack.c.l.b16 %v3732
        %v4127 = vunpack.c.h.b16 %v3732
        %v4128 = vunpack.c.l.b16 %v3733
        %v4129 = vunpack.c.h.b16 %v3733
        %v4130 = vunpack.c.l.b16 %v3734
        %v4131 = vunpack.c.h.b16 %v3734
        %v4132 = vunpack.c.l.b16 %v3735
        %v4133 = vunpack.c.h.b16 %v3735
        %v4134 = vunpack.c.l.b16 %v3736
        %v4135 = vunpack.c.h.b16 %v3736
        %v4136 = vunpack.c.l.b16 %v3737
        %v4137 = vunpack.c.h.b16 %v3737
        %v4138 = vunpack.c.l.b16 %v3738
        %v4139 = vunpack.c.h.b16 %v3738
        %v4140 = vunpack.c.l.b16 %v3739
        %v4141 = vunpack.c.h.b16 %v3739
        %v4142 = vunpack.c.l.b16 %v3740
        %v4143 = vunpack.c.h.b16 %v3740
        %v4144 = vunpack.c.l.b16 %v3741
        %v4145 = vunpack.c.h.b16 %v3741
        %v4146 = vunpack.c.l.b16 %v3742
        %v4147 = vunpack.c.h.b16 %v3742
        %v4148 = vunpack.c.l.b16 %v3743
        %v4149 = vunpack.c.h.b16 %v3743
        %v4150 = vpack.c.b16 %v3898, %v3894
        %v4151 = vpack.c.b16 %v3899, %v3895
        %v4152 = vpack.c.b16 %v3900, %v3896
        %v4153 = vpack.c.b16 %v3901, %v3897
        %v4154 = vpack.c.b16 %v3906, %v3902
        %v4155 = vpack.c.b16 %v3907, %v3903
        %v4156 = vpack.c.b16 %v3908, %v3904
        %v4157 = vpack.c.b16 %v3909, %v3905
        %v4158 = vpack.c.b16 %v3914, %v3910
        %v4159 = vpack.c.b16 %v3915, %v3911
        %v4160 = vpack.c.b16 %v3916, %v3912
        %v4161 = vpack.c.b16 %v3917, %v3913
        %v4162 = vpack.c.b16 %v3922, %v3918
        %v4163 = vpack.c.b16 %v3923, %v3919
        %v4164 = vpack.c.b16 %v3924, %v3920
        %v4165 = vpack.c.b16 %v3925, %v3921
        %v4166 = vpack.c.b16 %v3930, %v3926
        %v4167 = vpack.c.b16 %v3931, %v3927
        %v4168 = vpack.c.b16 %v3932, %v3928
        %v4169 = vpack.c.b16 %v3933, %v3929
        %v4170 = vpack.c.b16 %v3938, %v3934
        %v4171 = vpack.c.b16 %v3939, %v3935
        %v4172 = vpack.c.b16 %v3940, %v3936
        %v4173 = vpack.c.b16 %v3941, %v3937
        %v4174 = vpack.c.b16 %v3946, %v3942
        %v4175 = vpack.c.b16 %v3947, %v3943
        %v4176 = vpack.c.b16 %v3948, %v3944
        %v4177 = vpack.c.b16 %v3949, %v3945
        %v4178 = vpack.c.b16 %v3954, %v3950
        %v4179 = vpack.c.b16 %v3955, %v3951
        %v4180 = vpack.c.b16 %v3956, %v3952
        %v4181 = vpack.c.b16 %v3957, %v3953
        %v4182 = vpack.c.b16 %v3962, %v3958
        %v4183 = vpack.c.b16 %v3963, %v3959
        %v4184 = vpack.c.b16 %v3964, %v3960
        %v4185 = vpack.c.b16 %v3965, %v3961
        %v4186 = vpack.c.b16 %v3970, %v3966
        %v4187 = vpack.c.b16 %v3971, %v3967
        %v4188 = vpack.c.b16 %v3972, %v3968
        %v4189 = vpack.c.b16 %v3973, %v3969
        %v4190 = vpack.c.b16 %v3978, %v3974
        %v4191 = vpack.c.b16 %v3979, %v3975
        %v4192 = vpack.c.b16 %v3980, %v3976
        %v4193 = vpack.c.b16 %v3981, %v3977
        %v4194 = vpack.c.b16 %v3986, %v3982
        %v4195 = vpack.c.b16 %v3987, %v3983
        %v4196 = vpack.c.b16 %v3988, %v3984
        %v4197 = vpack.c.b16 %v3989, %v3985
        %v4198 = vpack.c.b16 %v3994, %v3990
        %v4199 = vpack.c.b16 %v3995, %v3991
        %v4200 = vpack.c.b16 %v3996, %v3992
        %v4201 = vpack.c.b16 %v3997, %v3993
        %v4202 = vpack.c.b16 %v4002, %v3998
        %v4203 = vpack.c.b16 %v4003, %v3999
        %v4204 = vpack.c.b16 %v4004, %v4000
        %v4205 = vpack.c.b16 %v4005, %v4001
        %v4206 = vpack.c.b16 %v4010, %v4006
        %v4207 = vpack.c.b16 %v4011, %v4007
        %v4208 = vpack.c.b16 %v4012, %v4008
        %v4209 = vpack.c.b16 %v4013, %v4009
        %v4210 = vpack.c.b16 %v4018, %v4014
        %v4211 = vpack.c.b16 %v4019, %v4015
        %v4212 = vpack.c.b16 %v4020, %v4016
        %v4213 = vpack.c.b16 %v4021, %v4017
        %v4214 = vpack.c.b16 %v4026, %v4022
        %v4215 = vpack.c.b16 %v4027, %v4023
        %v4216 = vpack.c.b16 %v4028, %v4024
        %v4217 = vpack.c.b16 %v4029, %v4025
        %v4218 = vpack.c.b16 %v4034, %v4030
        %v4219 = vpack.c.b16 %v4035, %v4031
        %v4220 = vpack.c.b16 %v4036, %v4032
        %v4221 = vpack.c.b16 %v4037, %v4033
        %v4222 = vpack.c.b16 %v4042, %v4038
        %v4223 = vpack.c.b16 %v4043, %v4039
        %v4224 = vpack.c.b16 %v4044, %v4040
        %v4225 = vpack.c.b16 %v4045, %v4041
        %v4226 = vpack.c.b16 %v4050, %v4046
        %v4227 = vpack.c.b16 %v4051, %v4047
        %v4228 = vpack.c.b16 %v4052, %v4048
        %v4229 = vpack.c.b16 %v4053, %v4049
        %v4230 = vpack.c.b16 %v4058, %v4054
        %v4231 = vpack.c.b16 %v4059, %v4055
        %v4232 = vpack.c.b16 %v4060, %v4056
        %v4233 = vpack.c.b16 %v4061, %v4057
        %v4234 = vpack.c.b16 %v4066, %v4062
        %v4235 = vpack.c.b16 %v4067, %v4063
        %v4236 = vpack.c.b16 %v4068, %v4064
        %v4237 = vpack.c.b16 %v4069, %v4065
        %v4238 = vpack.c.b16 %v4074, %v4070
        %v4239 = vpack.c.b16 %v4075, %v4071
        %v4240 = vpack.c.b16 %v4076, %v4072
        %v4241 = vpack.c.b16 %v4077, %v4073
        %v4242 = vpack.c.b16 %v4082, %v4078
        %v4243 = vpack.c.b16 %v4083, %v4079
        %v4244 = vpack.c.b16 %v4084, %v4080
        %v4245 = vpack.c.b16 %v4085, %v4081
        %v4246 = vpack.c.b16 %v4090, %v4086
        %v4247 = vpack.c.b16 %v4091, %v4087
        %v4248 = vpack.c.b16 %v4092, %v4088
        %v4249 = vpack.c.b16 %v4093, %v4089
        %v4250 = vpack.c.b16 %v4098, %v4094
        %v4251 = vpack.c.b16 %v4099, %v4095
        %v4252 = vpack.c.b16 %v4100, %v4096
        %v4253 = vpack.c.b16 %v4101, %v4097
        %v4254 = vpack.c.b16 %v4106, %v4102
        %v4255 = vpack.c.b16 %v4107, %v4103
        %v4256 = vpack.c.b16 %v4108, %v4104
        %v4257 = vpack.c.b16 %v4109, %v4105
        %v4258 = vpack.c.b16 %v4114, %v4110
        %v4259 = vpack.c.b16 %v4115, %v4111
        %v4260 = vpack.c.b16 %v4116, %v4112
        %v4261 = vpack.c.b16 %v4117, %v4113
        %v4262 = vpack.c.b16 %v4122, %v4118
        %v4263 = vpack.c.b16 %v4123, %v4119
        %v4264 = vpack.c.b16 %v4124, %v4120
        %v4265 = vpack.c.b16 %v4125, %v4121
        %v4266 = vpack.c.b16 %v4130, %v4126
        %v4267 = vpack.c.b16 %v4131, %v4127
        %v4268 = vpack.c.b16 %v4132, %v4128
        %v4269 = vpack.c.b16 %v4133, %v4129
        %v4270 = vpack.c.b16 %v4138, %v4134
        %v4271 = vpack.c.b16 %v4139, %v4135
        %v4272 = vpack.c.b16 %v4140, %v4136
        %v4273 = vpack.c.b16 %v4141, %v4137
        %v4274 = vpack.c.b16 %v4146, %v4142
        %v4275 = vpack.c.b16 %v4147, %v4143
        %v4276 = vpack.c.b16 %v4148, %v4144
        %v4277 = vpack.c.b16 %v4149, %v4145
        %4406 = vmatprep.subr.bf16.mxu0 %v4151
        %4407 = vmatpush1.bf16.msra.mxu0 %v4150
        %4408 = vmatprep.subr.bf16.mxu0 %v4155
        %4409 = vmatpush1.bf16.msra.mxu0 %v4154
        %4410 = vmatprep.subr.bf16.mxu0 %v4159
        %4411 = vmatpush1.bf16.msra.mxu0 %v4158
        %4412 = vmatprep.subr.bf16.mxu0 %v4163
        %4413 = vmatpush1.bf16.msra.mxu0 %v4162
        %4414 = vmatprep.subr.bf16.mxu0 %v4167
        %4415 = vmatpush1.bf16.msra.mxu0 %v4166
        %4416 = vmatprep.subr.bf16.mxu0 %v4171
        %4417 = vmatpush1.bf16.msra.mxu0 %v4170
        %4418 = vmatprep.subr.bf16.mxu0 %v4175
        %4419 = vmatpush1.bf16.msra.mxu0 %v4174
        %4420 = vmatprep.subr.bf16.mxu0 %v4179
        %4421 = vmatpush1.bf16.msra.mxu0 %v4178
        %4422 = vmatprep.subr.bf16.mxu0 %v4183
        %4423 = vmatpush1.bf16.msra.mxu0 %v4182
        %4424 = vmatprep.subr.bf16.mxu0 %v4187
        %4425 = vmatpush1.bf16.msra.mxu0 %v4186
        %4426 = vmatprep.subr.bf16.mxu0 %v4191
        %4427 = vmatpush1.bf16.msra.mxu0 %v4190
        %4428 = vmatprep.subr.bf16.mxu0 %v4195
        %4429 = vmatpush1.bf16.msra.mxu0 %v4194
        %4430 = vmatprep.subr.bf16.mxu0 %v4199
        %4431 = vmatpush1.bf16.msra.mxu0 %v4198
        %4432 = vmatprep.subr.bf16.mxu0 %v4203
        %4433 = vmatpush1.bf16.msra.mxu0 %v4202
        %4434 = vmatprep.subr.bf16.mxu0 %v4207
        %4435 = vmatpush1.bf16.msra.mxu0 %v4206
        %4436 = vmatprep.subr.bf16.mxu0 %v4211
        %4437 = vmatpush1.bf16.msra.mxu0 %v4210
        %4438 = vmatprep.mubr.bf16.mxu0 %v3585
        %4439 = vmatmul.mubr.bf16.gmra.mrb[0].mxu0 %v3584
        %v4440 = vpop.f32.mrb[0].mxu0
        %v4441 = vadd.f32 %v3749, %v4440
        %v4442 = vpop.f32.mrb[0].mxu0
        %v4443 = vadd.f32 %v3753, %v4442
        %v4444 = vpop.f32.mrb[0].mxu0
        %v4445 = vadd.f32 %v3749, %v4444
        %v4446 = vpop.f32.mrb[0].mxu0
        %v4447 = vadd.f32 %v3753, %v4446
        %4448 = vmatprep.mubr.bf16.mxu0 %v3589
        %4449 = vmatmul.mubr.bf16.gmra.mrb[0].mxu0 %v3588
        %v4450 = vpop.f32.mrb[0].mxu0
        %v4451 = vadd.f32 %v3749, %v4450
        %v4452 = vpop.f32.mrb[0].mxu0
        %v4453 = vadd.f32 %v3753, %v4452
        %v4454 = vpop.f32.mrb[0].mxu0
        %v4455 = vadd.f32 %v3749, %v4454
        %v4456 = vpop.f32.mrb[0].mxu0
        %v4457 = vadd.f32 %v3753, %v4456
        %4458 = vmatprep.mubr.bf16.mxu0 %v3593
        %4459 = vmatmul.mubr.bf16.gmra.mrb[0].mxu0 %v3592
        %v4460 = vpop.f32.mrb[0].mxu0
        %v4461 = vadd.f32 %v3749, %v4460
        %v4462 = vpop.f32.mrb[0].mxu0
        %v4463 = vadd.f32 %v3753, %v4462
        %v4464 = vpop.f32.mrb[0].mxu0
        %v4465 = vadd.f32 %v3749, %v4464
        %v4466 = vpop.f32.mrb[0].mxu0
        %v4467 = vadd.f32 %v3753, %v4466
        %4468 = vmatprep.mubr.bf16.mxu0 %v3597
        %4469 = vmatmul.mubr.bf16.gmra.mrb[0].mxu0 %v3596
        %v4470 = vpop.f32.mrb[0].mxu0
        %v4471 = vadd.f32 %v3749, %v4470
        %v4472 = vpop.f32.mrb[0].mxu0
        %v4473 = vadd.f32 %v3753, %v4472
        %v4474 = vpop.f32.mrb[0].mxu0
        %v4475 = vadd.f32 %v3749, %v4474
        %v4476 = vpop.f32.mrb[0].mxu0
        %v4477 = vadd.f32 %v3753, %v4476
        %4478 = vmatprep.mubr.bf16.mxu0 %v3601
        %4479 = vmatmul.mubr.bf16.gmra.mrb[0].mxu0 %v3600
        %v4480 = vpop.f32.mrb[0].mxu0
        %v4481 = vadd.f32 %v3749, %v4480
        %v4482 = vpop.f32.mrb[0].mxu0
        %v4483 = vadd.f32 %v3753, %v4482
        %v4484 = vpop.f32.mrb[0].mxu0
        %v4485 = vadd.f32 %v3749, %v4484
        %v4486 = vpop.f32.mrb[0].mxu0
        %v4487 = vadd.f32 %v3753, %v4486
        %4488 = vmatprep.mubr.bf16.mxu0 %v3605
        %4489 = vmatmul.mubr.bf16.gmra.mrb[0].mxu0 %v3604
        %v4490 = vpop.f32.mrb[0].mxu0
        %v4491 = vadd.f32 %v3749, %v4490
        %v4492 = vpop.f32.mrb[0].mxu0
        %v4493 = vadd.f32 %v3753, %v4492
        %v4494 = vpop.f32.mrb[0].mxu0
        %v4495 = vadd.f32 %v3749, %v4494
        %v4496 = vpop.f32.mrb[0].mxu0
        %v4497 = vadd.f32 %v3753, %v4496
        %4498 = vmatprep.mubr.bf16.mxu0 %v3609
        %4499 = vmatmul.mubr.bf16.gmra.mrb[0].mxu0 %v3608
        %v4500 = vpop.f32.mrb[0].mxu0
        %v4501 = vadd.f32 %v3749, %v4500
        %v4502 = vpop.f32.mrb[0].mxu0
        %v4503 = vadd.f32 %v3753, %v4502
        %v4504 = vpop.f32.mrb[0].mxu0
        %v4505 = vadd.f32 %v3749, %v4504
        %v4506 = vpop.f32.mrb[0].mxu0
        %v4507 = vadd.f32 %v3753, %v4506
        %4508 = vmatprep.mubr.bf16.mxu0 %v3613
        %4509 = vmatmul.mubr.bf16.gmra.mrb[0].mxu0 %v3612
        %v4510 = vpop.f32.mrb[0].mxu0
        %v4511 = vadd.f32 %v3749, %v4510
        %v4512 = vpop.f32.mrb[0].mxu0
        %v4513 = vadd.f32 %v3753, %v4512
        %v4514 = vpop.f32.mrb[0].mxu0
        %v4515 = vadd.f32 %v3749, %v4514
        %v4516 = vpop.f32.mrb[0].mxu0
        %v4517 = vadd.f32 %v3753, %v4516
        %4518 = vdwg.mxu0
        %4519 = vmatprep.subr.bf16.mxu0 %v4215
        %4520 = vmatpush1.bf16.msra.mxu0 %v4214
        %4521 = vmatprep.subr.bf16.mxu0 %v4219
        %4522 = vmatpush1.bf16.msra.mxu0 %v4218
        %4523 = vmatprep.subr.bf16.mxu0 %v4223
        %4524 = vmatpush1.bf16.msra.mxu0 %v4222
        %4525 = vmatprep.subr.bf16.mxu0 %v4227
        %4526 = vmatpush1.bf16.msra.mxu0 %v4226
        %4527 = vmatprep.subr.bf16.mxu0 %v4231
        %4528 = vmatpush1.bf16.msra.mxu0 %v4230
        %4529 = vmatprep.subr.bf16.mxu0 %v4235
        %4530 = vmatpush1.bf16.msra.mxu0 %v4234
        %4531 = vmatprep.subr.bf16.mxu0 %v4239
        %4532 = vmatpush1.bf16.msra.mxu0 %v4238
        %4533 = vmatprep.subr.bf16.mxu0 %v4243
        %4534 = vmatpush1.bf16.msra.mxu0 %v4242
        %4535 = vmatprep.subr.bf16.mxu0 %v4247
        %4536 = vmatpush1.bf16.msra.mxu0 %v4246
        %4537 = vmatprep.subr.bf16.mxu0 %v4251
        %4538 = vmatpush1.bf16.msra.mxu0 %v4250
        %4539 = vmatprep.subr.bf16.mxu0 %v4255
        %4540 = vmatpush1.bf16.msra.mxu0 %v4254
        %4541 = vmatprep.subr.bf16.mxu0 %v4259
        %4542 = vmatpush1.bf16.msra.mxu0 %v4258
        %4543 = vmatprep.subr.bf16.mxu0 %v4263
        %4544 = vmatpush1.bf16.msra.mxu0 %v4262
        %4545 = vmatprep.subr.bf16.mxu0 %v4267
        %4546 = vmatpush1.bf16.msra.mxu0 %v4266
        %4547 = vmatprep.subr.bf16.mxu0 %v4271
        %4548 = vmatpush1.bf16.msra.mxu0 %v4270
        %4549 = vmatprep.subr.bf16.mxu0 %v4275
        %4550 = vmatpush1.bf16.msra.mxu0 %v4274
        %4551 = vmatprep.mubr.bf16.mxu0 %v3587
        %4552 = vmatmul.mubr.bf16.gmra.mrb[0].mxu0 %v3586
        %v4553 = vpop.f32.mrb[0].mxu0
        %v4554 = vadd.f32 %v4441, %v4553
        %v4555 = vpop.f32.mrb[0].mxu0
        %v4556 = vadd.f32 %v4443, %v4555
        %v4557 = vpop.f32.mrb[0].mxu0
        %v4558 = vadd.f32 %v4445, %v4557
        %v4559 = vpop.f32.mrb[0].mxu0
        %v4560 = vadd.f32 %v4447, %v4559
        %4561 = vmatprep.mubr.bf16.mxu0 %v3591
        %4562 = vmatmul.mubr.bf16.gmra.mrb[0].mxu0 %v3590
        %v4563 = vpop.f32.mrb[0].mxu0
        %v4564 = vadd.f32 %v4451, %v4563
        %v4565 = vpop.f32.mrb[0].mxu0
        %v4566 = vadd.f32 %v4453, %v4565
        %v4567 = vpop.f32.mrb[0].mxu0
        %v4568 = vadd.f32 %v4455, %v4567
        %v4569 = vpop.f32.mrb[0].mxu0
        %v4570 = vadd.f32 %v4457, %v4569
        %4571 = vmatprep.mubr.bf16.mxu0 %v3595
        %4572 = vmatmul.mubr.bf16.gmra.mrb[0].mxu0 %v3594
        %v4573 = vpop.f32.mrb[0].mxu0
        %v4574 = vadd.f32 %v4461, %v4573
        %v4575 = vpop.f32.mrb[0].mxu0
        %v4576 = vadd.f32 %v4463, %v4575
        %v4577 = vpop.f32.mrb[0].mxu0
        %v4578 = vadd.f32 %v4465, %v4577
        %v4579 = vpop.f32.mrb[0].mxu0
        %v4580 = vadd.f32 %v4467, %v4579
        %4581 = vmatprep.mubr.bf16.mxu0 %v3599
        %4582 = vmatmul.mubr.bf16.gmra.mrb[0].mxu0 %v3598
        %v4583 = vpop.f32.mrb[0].mxu0
        %v4584 = vadd.f32 %v4471, %v4583
        %v4585 = vpop.f32.mrb[0].mxu0
        %v4586 = vadd.f32 %v4473, %v4585
        %v4587 = vpop.f32.mrb[0].mxu0
        %v4588 = vadd.f32 %v4475, %v4587
        %v4589 = vpop.f32.mrb[0].mxu0
        %v4590 = vadd.f32 %v4477, %v4589
        %4591 = vmatprep.mubr.bf16.mxu0 %v3603
        %4592 = vmatmul.mubr.bf16.gmra.mrb[0].mxu0 %v3602
        %v4593 = vpop.f32.mrb[0].mxu0
        %v4594 = vadd.f32 %v4481, %v4593
        %v4595 = vpop.f32.mrb[0].mxu0
        %v4596 = vadd.f32 %v4483, %v4595
        %v4597 = vpop.f32.mrb[0].mxu0
        %v4598 = vadd.f32 %v4485, %v4597
        %v4599 = vpop.f32.mrb[0].mxu0
        %v4600 = vadd.f32 %v4487, %v4599
        %4601 = vmatprep.mubr.bf16.mxu0 %v3607
        %4602 = vmatmul.mubr.bf16.gmra.mrb[0].mxu0 %v3606
        %v4603 = vpop.f32.mrb[0].mxu0
        %v4604 = vadd.f32 %v4491, %v4603
        %v4605 = vpop.f32.mrb[0].mxu0
        %v4606 = vadd.f32 %v4493, %v4605
        %v4607 = vpop.f32.mrb[0].mxu0
        %v4608 = vadd.f32 %v4495, %v4607
        %v4609 = vpop.f32.mrb[0].mxu0
        %v4610 = vadd.f32 %v4497, %v4609
        %4611 = vmatprep.mubr.bf16.mxu0 %v3611
        %4612 = vmatmul.mubr.bf16.gmra.mrb[0].mxu0 %v3610
        %v4613 = vpop.f32.mrb[0].mxu0
        %v4614 = vadd.f32 %v4501, %v4613
        %v4615 = vpop.f32.mrb[0].mxu0
        %v4616 = vadd.f32 %v4503, %v4615
        %v4617 = vpop.f32.mrb[0].mxu0
        %v4618 = vadd.f32 %v4505, %v4617
        %v4619 = vpop.f32.mrb[0].mxu0
        %v4620 = vadd.f32 %v4507, %v4619
        %4621 = vmatprep.mubr.bf16.mxu0 %v3615
        %4622 = vmatmul.mubr.bf16.gmra.mrb[0].mxu0 %v3614
        %v4623 = vpop.f32.mrb[0].mxu0
        %v4624 = vadd.f32 %v4511, %v4623
        %v4625 = vpop.f32.mrb[0].mxu0
        %v4626 = vadd.f32 %v4513, %v4625
        %v4627 = vpop.f32.mrb[0].mxu0
        %v4628 = vadd.f32 %v4515, %v4627
        %v4629 = vpop.f32.mrb[0].mxu0
        %v4630 = vadd.f32 %v4517, %v4629
        %4631 = vdwg.mxu0
        %4632 = vmatprep.subr.bf16.mxu0 %v4153
        %4633 = vmatpush1.bf16.msra.mxu0 %v4152
        %4634 = vmatprep.subr.bf16.mxu0 %v4157
        %4635 = vmatpush1.bf16.msra.mxu0 %v4156
        %4636 = vmatprep.subr.bf16.mxu0 %v4161
        %4637 = vmatpush1.bf16.msra.mxu0 %v4160
        %4638 = vmatprep.subr.bf16.mxu0 %v4165
        %4639 = vmatpush1.bf16.msra.mxu0 %v4164
        %4640 = vmatprep.subr.bf16.mxu0 %v4169
        %4641 = vmatpush1.bf16.msra.mxu0 %v4168
        %4642 = vmatprep.subr.bf16.mxu0 %v4173
        %4643 = vmatpush1.bf16.msra.mxu0 %v4172
        %4644 = vmatprep.subr.bf16.mxu0 %v4177
        %4645 = vmatpush1.bf16.msra.mxu0 %v4176
        %4646 = vmatprep.subr.bf16.mxu0 %v4181
        %4647 = vmatpush1.bf16.msra.mxu0 %v4180
        %4648 = vmatprep.subr.bf16.mxu0 %v4185
        %4649 = vmatpush1.bf16.msra.mxu0 %v4184
        %4650 = vmatprep.subr.bf16.mxu0 %v4189
        %4651 = vmatpush1.bf16.msra.mxu0 %v4188
        %4652 = vmatprep.subr.bf16.mxu0 %v4193
        %4653 = vmatpush1.bf16.msra.mxu0 %v4192
        %4654 = vmatprep.subr.bf16.mxu0 %v4197
        %4655 = vmatpush1.bf16.msra.mxu0 %v4196
        %4656 = vmatprep.subr.bf16.mxu0 %v4201
        %4657 = vmatpush1.bf16.msra.mxu0 %v4200
        %4658 = vmatprep.subr.bf16.mxu0 %v4205
        %4659 = vmatpush1.bf16.msra.mxu0 %v4204
        %4660 = vmatprep.subr.bf16.mxu0 %v4209
        %4661 = vmatpush1.bf16.msra.mxu0 %v4208
        %4662 = vmatprep.subr.bf16.mxu0 %v4213
        %4663 = vmatpush1.bf16.msra.mxu0 %v4212
        %4664 = vmatprep.mubr.bf16.mxu0 %v3585
        %4665 = vmatmul.mubr.bf16.gmra.mrb[0].mxu0 %v3584
        %v4666 = vpop.f32.mrb[0].mxu0
        %v4667 = vadd.f32 %v3757, %v4666
        %v4668 = vpop.f32.mrb[0].mxu0
        %v4669 = vadd.f32 %v3761, %v4668
        %v4670 = vpop.f32.mrb[0].mxu0
        %v4671 = vadd.f32 %v3757, %v4670
        %v4672 = vpop.f32.mrb[0].mxu0
        %v4673 = vadd.f32 %v3761, %v4672
        %4674 = vmatprep.mubr.bf16.mxu0 %v3589
        %4675 = vmatmul.mubr.bf16.gmra.mrb[0].mxu0 %v3588
        %v4676 = vpop.f32.mrb[0].mxu0
        %v4677 = vadd.f32 %v3757, %v4676
        %v4678 = vpop.f32.mrb[0].mxu0
        %v4679 = vadd.f32 %v3761, %v4678
        %v4680 = vpop.f32.mrb[0].mxu0
        %v4681 = vadd.f32 %v3757, %v4680
        %v4682 = vpop.f32.mrb[0].mxu0
        %v4683 = vadd.f32 %v3761, %v4682
        %4684 = vmatprep.mubr.bf16.mxu0 %v3593
        %4685 = vmatmul.mubr.bf16.gmra.mrb[0].mxu0 %v3592
        %v4686 = vpop.f32.mrb[0].mxu0
        %v4687 = vadd.f32 %v3757, %v4686
        %v4688 = vpop.f32.mrb[0].mxu0
        %v4689 = vadd.f32 %v3761, %v4688
        %v4690 = vpop.f32.mrb[0].mxu0
        %v4691 = vadd.f32 %v3757, %v4690
        %v4692 = vpop.f32.mrb[0].mxu0
        %v4693 = vadd.f32 %v3761, %v4692
        %4694 = vmatprep.mubr.bf16.mxu0 %v3597
        %4695 = vmatmul.mubr.bf16.gmra.mrb[0].mxu0 %v3596
        %v4696 = vpop.f32.mrb[0].mxu0
        %v4697 = vadd.f32 %v3757, %v4696
        %v4698 = vpop.f32.mrb[0].mxu0
        %v4699 = vadd.f32 %v3761, %v4698
        %v4700 = vpop.f32.mrb[0].mxu0
        %v4701 = vadd.f32 %v3757, %v4700
        %v4702 = vpop.f32.mrb[0].mxu0
        %v4703 = vadd.f32 %v3761, %v4702
        %4704 = vmatprep.mubr.bf16.mxu0 %v3601
        %4705 = vmatmul.mubr.bf16.gmra.mrb[0].mxu0 %v3600
        %v4706 = vpop.f32.mrb[0].mxu0
        %v4707 = vadd.f32 %v3757, %v4706
        %v4708 = vpop.f32.mrb[0].mxu0
        %v4709 = vadd.f32 %v3761, %v4708
        %v4710 = vpop.f32.mrb[0].mxu0
        %v4711 = vadd.f32 %v3757, %v4710
        %v4712 = vpop.f32.mrb[0].mxu0
        %v4713 = vadd.f32 %v3761, %v4712
        %4714 = vmatprep.mubr.bf16.mxu0 %v3605
        %4715 = vmatmul.mubr.bf16.gmra.mrb[0].mxu0 %v3604
        %v4716 = vpop.f32.mrb[0].mxu0
        %v4717 = vadd.f32 %v3757, %v4716
        %v4718 = vpop.f32.mrb[0].mxu0
        %v4719 = vadd.f32 %v3761, %v4718
        %v4720 = vpop.f32.mrb[0].mxu0
        %v4721 = vadd.f32 %v3757, %v4720
        %v4722 = vpop.f32.mrb[0].mxu0
        %v4723 = vadd.f32 %v3761, %v4722
        %4724 = vmatprep.mubr.bf16.mxu0 %v3609
        %4725 = vmatmul.mubr.bf16.gmra.mrb[0].mxu0 %v3608
        %v4726 = vpop.f32.mrb[0].mxu0
        %v4727 = vadd.f32 %v3757, %v4726
        %v4728 = vpop.f32.mrb[0].mxu0
        %v4729 = vadd.f32 %v3761, %v4728
        %v4730 = vpop.f32.mrb[0].mxu0
        %v4731 = vadd.f32 %v3757, %v4730
        %v4732 = vpop.f32.mrb[0].mxu0
        %v4733 = vadd.f32 %v3761, %v4732
        %4734 = vmatprep.mubr.bf16.mxu0 %v3613
        %4735 = vmatmul.mubr.bf16.gmra.mrb[0].mxu0 %v3612
        %v4736 = vpop.f32.mrb[0].mxu0
        %v4737 = vadd.f32 %v3757, %v4736
        %v4738 = vpop.f32.mrb[0].mxu0
        %v4739 = vadd.f32 %v3761, %v4738
        %v4740 = vpop.f32.mrb[0].mxu0
        %v4741 = vadd.f32 %v3757, %v4740
        %v4742 = vpop.f32.mrb[0].mxu0
        %v4743 = vadd.f32 %v3761, %v4742
        %4744 = vdwg.mxu0
        %4745 = vmatprep.subr.bf16.mxu0 %v4217
        %4746 = vmatpush1.bf16.msra.mxu0 %v4216
        %4747 = vmatprep.subr.bf16.mxu0 %v4221
        %4748 = vmatpush1.bf16.msra.mxu0 %v4220
        %4749 = vmatprep.subr.bf16.mxu0 %v4225
        %4750 = vmatpush1.bf16.msra.mxu0 %v4224
        %4751 = vmatprep.subr.bf16.mxu0 %v4229
        %4752 = vmatpush1.bf16.msra.mxu0 %v4228
        %4753 = vmatprep.subr.bf16.mxu0 %v4233
        %4754 = vmatpush1.bf16.msra.mxu0 %v4232
        %4755 = vmatprep.subr.bf16.mxu0 %v4237
        %4756 = vmatpush1.bf16.msra.mxu0 %v4236
        %4757 = vmatprep.subr.bf16.mxu0 %v4241
        %4758 = vmatpush1.bf16.msra.mxu0 %v4240
        %4759 = vmatprep.subr.bf16.mxu0 %v4245
        %4760 = vmatpush1.bf16.msra.mxu0 %v4244
        %4761 = vmatprep.subr.bf16.mxu0 %v4249
        %4762 = vmatpush1.bf16.msra.mxu0 %v4248
        %4763 = vmatprep.subr.bf16.mxu0 %v4253
        %4764 = vmatpush1.bf16.msra.mxu0 %v4252
        %4765 = vmatprep.subr.bf16.mxu0 %v4257
        %4766 = vmatpush1.bf16.msra.mxu0 %v4256
        %4767 = vmatprep.subr.bf16.mxu0 %v4261
        %4768 = vmatpush1.bf16.msra.mxu0 %v4260
        %4769 = vmatprep.subr.bf16.mxu0 %v4265
        %4770 = vmatpush1.bf16.msra.mxu0 %v4264
        %4771 = vmatprep.subr.bf16.mxu0 %v4269
        %4772 = vmatpush1.bf16.msra.mxu0 %v4268
        %4773 = vmatprep.subr.bf16.mxu0 %v4273
        %4774 = vmatpush1.bf16.msra.mxu0 %v4272
        %4775 = vmatprep.subr.bf16.mxu0 %v4277
        %4776 = vmatpush1.bf16.msra.mxu0 %v4276
        %4777 = vmatprep.mubr.bf16.mxu0 %v3587
        %4778 = vmatmul.mubr.bf16.gmra.mrb[0].mxu0 %v3586
        %v4779 = vpop.f32.mrb[0].mxu0
        %v4780 = vadd.f32 %v4667, %v4779
        %v4781 = vpop.f32.mrb[0].mxu0
        %v4782 = vadd.f32 %v4669, %v4781
        %v4783 = vpop.f32.mrb[0].mxu0
        %v4784 = vadd.f32 %v4671, %v4783
        %v4785 = vpop.f32.mrb[0].mxu0
        %v4786 = vadd.f32 %v4673, %v4785
        %4787 = vmatprep.mubr.bf16.mxu0 %v3591
        %4788 = vmatmul.mubr.bf16.gmra.mrb[0].mxu0 %v3590
        %v4789 = vpop.f32.mrb[0].mxu0
        %v4790 = vadd.f32 %v4677, %v4789
        %v4791 = vpop.f32.mrb[0].mxu0
        %v4792 = vadd.f32 %v4679, %v4791
        %v4793 = vpop.f32.mrb[0].mxu0
        %v4794 = vadd.f32 %v4681, %v4793
        %v4795 = vpop.f32.mrb[0].mxu0
        %v4796 = vadd.f32 %v4683, %v4795
        %4797 = vmatprep.mubr.bf16.mxu0 %v3595
        %4798 = vmatmul.mubr.bf16.gmra.mrb[0].mxu0 %v3594
        %v4799 = vpop.f32.mrb[0].mxu0
        %v4800 = vadd.f32 %v4687, %v4799
        %v4801 = vpop.f32.mrb[0].mxu0
        %v4802 = vadd.f32 %v4689, %v4801
        %v4803 = vpop.f32.mrb[0].mxu0
        %v4804 = vadd.f32 %v4691, %v4803
        %v4805 = vpop.f32.mrb[0].mxu0
        %v4806 = vadd.f32 %v4693, %v4805
        %4807 = vmatprep.mubr.bf16.mxu0 %v3599
        %4808 = vmatmul.mubr.bf16.gmra.mrb[0].mxu0 %v3598
        %v4809 = vpop.f32.mrb[0].mxu0
        %v4810 = vadd.f32 %v4697, %v4809
        %v4811 = vpop.f32.mrb[0].mxu0
        %v4812 = vadd.f32 %v4699, %v4811
        %v4813 = vpop.f32.mrb[0].mxu0
        %v4814 = vadd.f32 %v4701, %v4813
        %v4815 = vpop.f32.mrb[0].mxu0
        %v4816 = vadd.f32 %v4703, %v4815
        %4817 = vmatprep.mubr.bf16.mxu0 %v3603
        %4818 = vmatmul.mubr.bf16.gmra.mrb[0].mxu0 %v3602
        %v4819 = vpop.f32.mrb[0].mxu0
        %v4820 = vadd.f32 %v4707, %v4819
        %v4821 = vpop.f32.mrb[0].mxu0
        %v4822 = vadd.f32 %v4709, %v4821
        %v4823 = vpop.f32.mrb[0].mxu0
        %v4824 = vadd.f32 %v4711, %v4823
        %v4825 = vpop.f32.mrb[0].mxu0
        %v4826 = vadd.f32 %v4713, %v4825
        %4827 = vmatprep.mubr.bf16.mxu0 %v3607
        %4828 = vmatmul.mubr.bf16.gmra.mrb[0].mxu0 %v3606
        %v4829 = vpop.f32.mrb[0].mxu0
        %v4830 = vadd.f32 %v4717, %v4829
        %v4831 = vpop.f32.mrb[0].mxu0
        %v4832 = vadd.f32 %v4719, %v4831
        %v4833 = vpop.f32.mrb[0].mxu0
        %v4834 = vadd.f32 %v4721, %v4833
        %v4835 = vpop.f32.mrb[0].mxu0
        %v4836 = vadd.f32 %v4723, %v4835
        %4837 = vmatprep.mubr.bf16.mxu0 %v3611
        %4838 = vmatmul.mubr.bf16.gmra.mrb[0].mxu0 %v3610
        %v4839 = vpop.f32.mrb[0].mxu0
        %v4840 = vadd.f32 %v4727, %v4839
        %v4841 = vpop.f32.mrb[0].mxu0
        %v4842 = vadd.f32 %v4729, %v4841
        %v4843 = vpop.f32.mrb[0].mxu0
        %v4844 = vadd.f32 %v4731, %v4843
        %v4845 = vpop.f32.mrb[0].mxu0
        %v4846 = vadd.f32 %v4733, %v4845
        %4847 = vmatprep.mubr.bf16.mxu0 %v3615
        %4848 = vmatmul.mubr.bf16.gmra.mrb[0].mxu0 %v3614
        %v4849 = vpop.f32.mrb[0].mxu0
        %v4850 = vadd.f32 %v4737, %v4849
        %v4851 = vpop.f32.mrb[0].mxu0
        %v4852 = vadd.f32 %v4739, %v4851
        %v4853 = vpop.f32.mrb[0].mxu0
        %v4854 = vadd.f32 %v4741, %v4853
        %v4855 = vpop.f32.mrb[0].mxu0
        %v4856 = vadd.f32 %v4743, %v4855
        %4857 = vdwg.mxu0
        %v4858 = vmax.f32 %v4554, 0.0
        %v4859 = vmax.f32 %v4556, 0.0
        %v4860 = vmax.f32 %v4780, 0.0
        %v4861 = vmax.f32 %v4782, 0.0
        %v4862 = vmax.f32 %v4558, 0.0
        %v4863 = vmax.f32 %v4560, 0.0
        %v4864 = vmax.f32 %v4784, 0.0
        %v4865 = vmax.f32 %v4786, 0.0
        %v4866 = vmax.f32 %v4564, 0.0
        %v4867 = vmax.f32 %v4566, 0.0
        %v4868 = vmax.f32 %v4790, 0.0
        %v4869 = vmax.f32 %v4792, 0.0
        %v4870 = vmax.f32 %v4568, 0.0
        %v4871 = vmax.f32 %v4570, 0.0
        %v4872 = vmax.f32 %v4794, 0.0
        %v4873 = vmax.f32 %v4796, 0.0
        %v4874 = vmax.f32 %v4574, 0.0
        %v4875 = vmax.f32 %v4576, 0.0
        %v4876 = vmax.f32 %v4800, 0.0
        %v4877 = vmax.f32 %v4802, 0.0
        %v4878 = vmax.f32 %v4578, 0.0
        %v4879 = vmax.f32 %v4580, 0.0
        %v4880 = vmax.f32 %v4804, 0.0
        %v4881 = vmax.f32 %v4806, 0.0
        %v4882 = vmax.f32 %v4584, 0.0
        %v4883 = vmax.f32 %v4586, 0.0
        %v4884 = vmax.f32 %v4810, 0.0
        %v4885 = vmax.f32 %v4812, 0.0
        %v4886 = vmax.f32 %v4588, 0.0
        %v4887 = vmax.f32 %v4590, 0.0
        %v4888 = vmax.f32 %v4814, 0.0
        %v4889 = vmax.f32 %v4816, 0.0
        %v4890 = vmax.f32 %v4594, 0.0
        %v4891 = vmax.f32 %v4596, 0.0
        %v4892 = vmax.f32 %v4820, 0.0
        %v4893 = vmax.f32 %v4822, 0.0
        %v4894 = vmax.f32 %v4598, 0.0
        %v4895 = vmax.f32 %v4600, 0.0
        %v4896 = vmax.f32 %v4824, 0.0
        %v4897 = vmax.f32 %v4826, 0.0
        %v4898 = vmax.f32 %v4604, 0.0
        %v4899 = vmax.f32 %v4606, 0.0
        %v4900 = vmax.f32 %v4830, 0.0
        %v4901 = vmax.f32 %v4832, 0.0
        %v4902 = vmax.f32 %v4608, 0.0
        %v4903 = vmax.f32 %v4610, 0.0
        %v4904 = vmax.f32 %v4834, 0.0
        %v4905 = vmax.f32 %v4836, 0.0
        %v4906 = vmax.f32 %v4614, 0.0
        %v4907 = vmax.f32 %v4616, 0.0
        %v4908 = vmax.f32 %v4840, 0.0
        %v4909 = vmax.f32 %v4842, 0.0
        %v4910 = vmax.f32 %v4618, 0.0
        %v4911 = vmax.f32 %v4620, 0.0
        %v4912 = vmax.f32 %v4844, 0.0
        %v4913 = vmax.f32 %v4846, 0.0
        %v4914 = vmax.f32 %v4624, 0.0
        %v4915 = vmax.f32 %v4626, 0.0
        %v4916 = vmax.f32 %v4850, 0.0
        %v4917 = vmax.f32 %v4852, 0.0
        %v4918 = vmax.f32 %v4628, 0.0
        %v4919 = vmax.f32 %v4630, 0.0
        %v4920 = vmax.f32 %v4854, 0.0
        %v4921 = vmax.f32 %v4856, 0.0
        %v4922 = vpack.c.bf16 %v4862, %v4858
        %v4923 = vpack.c.bf16 %v4863, %v4859
        %v4924 = vpack.c.bf16 %v4864, %v4860
        %v4925 = vpack.c.bf16 %v4865, %v4861
        %v4926 = vpack.c.bf16 %v4870, %v4866
        %v4927 = vpack.c.bf16 %v4871, %v4867
        %v4928 = vpack.c.bf16 %v4872, %v4868
        %v4929 = vpack.c.bf16 %v4873, %v4869
        %v4930 = vpack.c.bf16 %v4878, %v4874
        %v4931 = vpack.c.bf16 %v4879, %v4875
        %v4932 = vpack.c.bf16 %v4880, %v4876
        %v4933 = vpack.c.bf16 %v4881, %v4877
        %v4934 = vpack.c.bf16 %v4886, %v4882
        %v4935 = vpack.c.bf16 %v4887, %v4883
        %v4936 = vpack.c.bf16 %v4888, %v4884
        %v4937 = vpack.c.bf16 %v4889, %v4885
        %v4938 = vpack.c.bf16 %v4894, %v4890
        %v4939 = vpack.c.bf16 %v4895, %v4891
        %v4940 = vpack.c.bf16 %v4896, %v4892
        %v4941 = vpack.c.bf16 %v4897, %v4893
        %v4942 = vpack.c.bf16 %v4902, %v4898
        %v4943 = vpack.c.bf16 %v4903, %v4899
        %v4944 = vpack.c.bf16 %v4904, %v4900
        %v4945 = vpack.c.bf16 %v4905, %v4901
        %v4946 = vpack.c.bf16 %v4910, %v4906
        %v4947 = vpack.c.bf16 %v4911, %v4907
        %v4948 = vpack.c.bf16 %v4912, %v4908
        %v4949 = vpack.c.bf16 %v4913, %v4909
        %v4950 = vpack.c.bf16 %v4918, %v4914
        %v4951 = vpack.c.bf16 %v4919, %v4915
        %v4952 = vpack.c.bf16 %v4920, %v4916
        %v4953 = vpack.c.bf16 %v4921, %v4917
        %v4954 = vld [vmem:[#allocation8] sm:$0xff]
        %v4955 = vld [vmem:[#allocation8 + $0x8] sm:$0xff]
        %v4956 = vld [vmem:[#allocation8 + $0x10] sm:$0xff]
        %v4957 = vld [vmem:[#allocation8 + $0x18] sm:$0xff]
        %v4958 = vld [vmem:[#allocation8 + $0x20] sm:$0xff]
        %v4959 = vld [vmem:[#allocation8 + $0x28] sm:$0xff]
        %v4960 = vld [vmem:[#allocation8 + $0x30] sm:$0xff]
        %v4961 = vld [vmem:[#allocation8 + $0x38] sm:$0xff]
        %v4962 = vld [vmem:[#allocation8 + $0x40] sm:$0xff]
        %v4963 = vld [vmem:[#allocation8 + $0x48] sm:$0xff]
        %v4964 = vld [vmem:[#allocation8 + $0x50] sm:$0xff]
        %v4965 = vld [vmem:[#allocation8 + $0x58] sm:$0xff]
        %v4966 = vld [vmem:[#allocation8 + $0x60] sm:$0xff]
        %v4967 = vld [vmem:[#allocation8 + $0x68] sm:$0xff]
        %v4968 = vld [vmem:[#allocation8 + $0x70] sm:$0xff]
        %v4969 = vld [vmem:[#allocation8 + $0x78] sm:$0xff]
        %v4970 = vld [vmem:[#allocation8 + $0x80] sm:$0xff]
        %v4971 = vld [vmem:[#allocation8 + $0x88] sm:$0xff]
        %v4972 = vld [vmem:[#allocation8 + $0x90] sm:$0xff]
        %v4973 = vld [vmem:[#allocation8 + $0x98] sm:$0xff]
        %v4974 = vld [vmem:[#allocation8 + $0xa0] sm:$0xff]
        %v4975 = vld [vmem:[#allocation8 + $0xa8] sm:$0xff]
        %v4976 = vld [vmem:[#allocation8 + $0xb0] sm:$0xff]
        %v4977 = vld [vmem:[#allocation8 + $0xb8] sm:$0xff]
        %v4978 = vld [vmem:[#allocation8 + $0xc0] sm:$0xff]
        %v4979 = vld [vmem:[#allocation8 + $0xc8] sm:$0xff]
        %v4980 = vld [vmem:[#allocation8 + $0xd0] sm:$0xff]
        %v4981 = vld [vmem:[#allocation8 + $0xd8] sm:$0xff]
        %v4982 = vld [vmem:[#allocation8 + $0xe0] sm:$0xff]
        %v4983 = vld [vmem:[#allocation8 + $0xe8] sm:$0xff]
        %v4984 = vld [vmem:[#allocation8 + $0xf0] sm:$0xff]
        %v4985 = vld [vmem:[#allocation8 + $0xf8] sm:$0xff]
        %v4986 = vld [vmem:[#allocation8 + $0x100] sm:$0xff]
        %v4987 = vld [vmem:[#allocation8 + $0x108] sm:$0xff]
        %v4988 = vld [vmem:[#allocation8 + $0x110] sm:$0xff]
        %v4989 = vld [vmem:[#allocation8 + $0x118] sm:$0xff]
        %v4990 = vld [vmem:[#allocation8 + $0x120] sm:$0xff]
        %v4991 = vld [vmem:[#allocation8 + $0x128] sm:$0xff]
        %v4992 = vld [vmem:[#allocation8 + $0x130] sm:$0xff]
        %v4993 = vld [vmem:[#allocation8 + $0x138] sm:$0xff]
        %v4994 = vld [vmem:[#allocation8 + $0x140] sm:$0xff]
        %v4995 = vld [vmem:[#allocation8 + $0x148] sm:$0xff]
        %v4996 = vld [vmem:[#allocation8 + $0x150] sm:$0xff]
        %v4997 = vld [vmem:[#allocation8 + $0x158] sm:$0xff]
        %v4998 = vld [vmem:[#allocation8 + $0x160] sm:$0xff]
        %v4999 = vld [vmem:[#allocation8 + $0x168] sm:$0xff]
        %v5000 = vld [vmem:[#allocation8 + $0x170] sm:$0xff]
        %v5001 = vld [vmem:[#allocation8 + $0x178] sm:$0xff]
        %v5002 = vld [vmem:[#allocation8 + $0x180] sm:$0xff]
        %v5003 = vld [vmem:[#allocation8 + $0x188] sm:$0xff]
        %v5004 = vld [vmem:[#allocation8 + $0x190] sm:$0xff]
        %v5005 = vld [vmem:[#allocation8 + $0x198] sm:$0xff]
        %v5006 = vld [vmem:[#allocation8 + $0x1a0] sm:$0xff]
        %v5007 = vld [vmem:[#allocation8 + $0x1a8] sm:$0xff]
        %v5008 = vld [vmem:[#allocation8 + $0x1b0] sm:$0xff]
        %v5009 = vld [vmem:[#allocation8 + $0x1b8] sm:$0xff]
        %v5010 = vld [vmem:[#allocation8 + $0x1c0] sm:$0xff]
        %v5011 = vld [vmem:[#allocation8 + $0x1c8] sm:$0xff]
        %v5012 = vld [vmem:[#allocation8 + $0x1d0] sm:$0xff]
        %v5013 = vld [vmem:[#allocation8 + $0x1d8] sm:$0xff]
        %v5014 = vld [vmem:[#allocation8 + $0x1e0] sm:$0xff]
        %v5015 = vld [vmem:[#allocation8 + $0x1e8] sm:$0xff]
        %v5016 = vld [vmem:[#allocation8 + $0x1f0] sm:$0xff]
        %v5017 = vld [vmem:[#allocation8 + $0x1f8] sm:$0xff]
        %v5018 = vld [vmem:[#allocation8 + $0x200] sm:$0xff]
        %v5019 = vld [vmem:[#allocation8 + $0x208] sm:$0xff]
        %v5020 = vld [vmem:[#allocation8 + $0x210] sm:$0xff]
        %v5021 = vld [vmem:[#allocation8 + $0x218] sm:$0xff]
        %v5022 = vld [vmem:[#allocation8 + $0x220] sm:$0xff]
        %v5023 = vld [vmem:[#allocation8 + $0x228] sm:$0xff]
        %v5024 = vld [vmem:[#allocation8 + $0x230] sm:$0xff]
        %v5025 = vld [vmem:[#allocation8 + $0x238] sm:$0xff]
        %v5026 = vld [vmem:[#allocation8 + $0x240] sm:$0xff]
        %v5027 = vld [vmem:[#allocation8 + $0x248] sm:$0xff]
        %v5028 = vld [vmem:[#allocation8 + $0x250] sm:$0xff]
        %v5029 = vld [vmem:[#allocation8 + $0x258] sm:$0xff]
        %v5030 = vld [vmem:[#allocation8 + $0x260] sm:$0xff]
        %v5031 = vld [vmem:[#allocation8 + $0x268] sm:$0xff]
        %v5032 = vld [vmem:[#allocation8 + $0x270] sm:$0xff]
        %v5033 = vld [vmem:[#allocation8 + $0x278] sm:$0xff]
        %v5034 = vld [vmem:[#allocation8 + $0x280] sm:$0xff]
        %v5035 = vld [vmem:[#allocation8 + $0x288] sm:$0xff]
        %v5036 = vld [vmem:[#allocation8 + $0x290] sm:$0xff]
        %v5037 = vld [vmem:[#allocation8 + $0x298] sm:$0xff]
        %v5038 = vld [vmem:[#allocation8 + $0x2a0] sm:$0xff]
        %v5039 = vld [vmem:[#allocation8 + $0x2a8] sm:$0xff]
        %v5040 = vld [vmem:[#allocation8 + $0x2b0] sm:$0xff]
        %v5041 = vld [vmem:[#allocation8 + $0x2b8] sm:$0xff]
        %v5042 = vld [vmem:[#allocation8 + $0x2c0] sm:$0xff]
        %v5043 = vld [vmem:[#allocation8 + $0x2c8] sm:$0xff]
        %v5044 = vld [vmem:[#allocation8 + $0x2d0] sm:$0xff]
        %v5045 = vld [vmem:[#allocation8 + $0x2d8] sm:$0xff]
        %v5046 = vld [vmem:[#allocation8 + $0x2e0] sm:$0xff]
        %v5047 = vld [vmem:[#allocation8 + $0x2e8] sm:$0xff]
        %v5048 = vld [vmem:[#allocation8 + $0x2f0] sm:$0xff]
        %v5049 = vld [vmem:[#allocation8 + $0x2f8] sm:$0xff]
        %v5050 = vld [vmem:[#allocation8 + $0x300] sm:$0xff]
        %v5051 = vld [vmem:[#allocation8 + $0x308] sm:$0xff]
        %v5052 = vld [vmem:[#allocation8 + $0x310] sm:$0xff]
        %v5053 = vld [vmem:[#allocation8 + $0x318] sm:$0xff]
        %v5054 = vld [vmem:[#allocation8 + $0x320] sm:$0xff]
        %v5055 = vld [vmem:[#allocation8 + $0x328] sm:$0xff]
        %v5056 = vld [vmem:[#allocation8 + $0x330] sm:$0xff]
        %v5057 = vld [vmem:[#allocation8 + $0x338] sm:$0xff]
        %v5058 = vld [vmem:[#allocation8 + $0x340] sm:$0xff]
        %v5059 = vld [vmem:[#allocation8 + $0x348] sm:$0xff]
        %v5060 = vld [vmem:[#allocation8 + $0x350] sm:$0xff]
        %v5061 = vld [vmem:[#allocation8 + $0x358] sm:$0xff]
        %v5062 = vld [vmem:[#allocation8 + $0x360] sm:$0xff]
        %v5063 = vld [vmem:[#allocation8 + $0x368] sm:$0xff]
        %v5064 = vld [vmem:[#allocation8 + $0x370] sm:$0xff]
        %v5065 = vld [vmem:[#allocation8 + $0x378] sm:$0xff]
        %v5066 = vld [vmem:[#allocation8 + $0x380] sm:$0xff]
        %v5067 = vld [vmem:[#allocation8 + $0x388] sm:$0xff]
        %v5068 = vld [vmem:[#allocation8 + $0x390] sm:$0xff]
        %v5069 = vld [vmem:[#allocation8 + $0x398] sm:$0xff]
        %v5070 = vld [vmem:[#allocation8 + $0x3a0] sm:$0xff]
        %v5071 = vld [vmem:[#allocation8 + $0x3a8] sm:$0xff]
        %v5072 = vld [vmem:[#allocation8 + $0x3b0] sm:$0xff]
        %v5073 = vld [vmem:[#allocation8 + $0x3b8] sm:$0xff]
        %v5074 = vld [vmem:[#allocation8 + $0x3c0] sm:$0xff]
        %v5075 = vld [vmem:[#allocation8 + $0x3c8] sm:$0xff]
        %v5076 = vld [vmem:[#allocation8 + $0x3d0] sm:$0xff]
        %v5077 = vld [vmem:[#allocation8 + $0x3d8] sm:$0xff]
        %v5078 = vld [vmem:[#allocation8 + $0x3e0] sm:$0xff]
        %v5079 = vld [vmem:[#allocation8 + $0x3e8] sm:$0xff]
        %v5080 = vld [vmem:[#allocation8 + $0x3f0] sm:$0xff]
        %v5081 = vld [vmem:[#allocation8 + $0x3f8] sm:$0xff]
        %v5082 = vld [vmem:[%s10] sm:$0xf]
        %v5084 = vlaneseq
        %v5085 = vshrl.u32 %v5084, 7
        %v5086 = vsub.s32 0, %v5085
        %v5087 = vrot.slane %v5082, %v5086
        %v5088 = vlaneseq
        %v5089 = vshrl.u32 %v5088, 7
        %v5090 = vsub.s32 1, %v5089
        %v5091 = vrot.slane %v5082, %v5090
        %v5092 = vlaneseq
        %v5093 = vshrl.u32 %v5092, 7
        %v5094 = vsub.s32 2, %v5093
        %v5095 = vrot.slane %v5082, %v5094
        %v5096 = vlaneseq
        %v5097 = vshrl.u32 %v5096, 7
        %v5098 = vsub.s32 3, %v5097
        %v5099 = vrot.slane %v5082, %v5098
        %v5232 = vunpack.c.l.b16 %v4954
        %v5233 = vunpack.c.h.b16 %v4954
        %v5234 = vunpack.c.l.b16 %v4955
        %v5235 = vunpack.c.h.b16 %v4955
        %v5236 = vunpack.c.l.b16 %v4956
        %v5237 = vunpack.c.h.b16 %v4956
        %v5238 = vunpack.c.l.b16 %v4957
        %v5239 = vunpack.c.h.b16 %v4957
        %v5240 = vunpack.c.l.b16 %v4958
        %v5241 = vunpack.c.h.b16 %v4958
        %v5242 = vunpack.c.l.b16 %v4959
        %v5243 = vunpack.c.h.b16 %v4959
        %v5244 = vunpack.c.l.b16 %v4960
        %v5245 = vunpack.c.h.b16 %v4960
        %v5246 = vunpack.c.l.b16 %v4961
        %v5247 = vunpack.c.h.b16 %v4961
        %v5248 = vunpack.c.l.b16 %v4962
        %v5249 = vunpack.c.h.b16 %v4962
        %v5250 = vunpack.c.l.b16 %v4963
        %v5251 = vunpack.c.h.b16 %v4963
        %v5252 = vunpack.c.l.b16 %v4964
        %v5253 = vunpack.c.h.b16 %v4964
        %v5254 = vunpack.c.l.b16 %v4965
        %v5255 = vunpack.c.h.b16 %v4965
        %v5256 = vunpack.c.l.b16 %v4966
        %v5257 = vunpack.c.h.b16 %v4966
        %v5258 = vunpack.c.l.b16 %v4967
        %v5259 = vunpack.c.h.b16 %v4967
        %v5260 = vunpack.c.l.b16 %v4968
        %v5261 = vunpack.c.h.b16 %v4968
        %v5262 = vunpack.c.l.b16 %v4969
        %v5263 = vunpack.c.h.b16 %v4969
        %v5264 = vunpack.c.l.b16 %v4970
        %v5265 = vunpack.c.h.b16 %v4970
        %v5266 = vunpack.c.l.b16 %v4971
        %v5267 = vunpack.c.h.b16 %v4971
        %v5268 = vunpack.c.l.b16 %v4972
        %v5269 = vunpack.c.h.b16 %v4972
        %v5270 = vunpack.c.l.b16 %v4973
        %v5271 = vunpack.c.h.b16 %v4973
        %v5272 = vunpack.c.l.b16 %v4974
        %v5273 = vunpack.c.h.b16 %v4974
        %v5274 = vunpack.c.l.b16 %v4975
        %v5275 = vunpack.c.h.b16 %v4975
        %v5276 = vunpack.c.l.b16 %v4976
        %v5277 = vunpack.c.h.b16 %v4976
        %v5278 = vunpack.c.l.b16 %v4977
        %v5279 = vunpack.c.h.b16 %v4977
        %v5280 = vunpack.c.l.b16 %v4978
        %v5281 = vunpack.c.h.b16 %v4978
        %v5282 = vunpack.c.l.b16 %v4979
        %v5283 = vunpack.c.h.b16 %v4979
        %v5284 = vunpack.c.l.b16 %v4980
        %v5285 = vunpack.c.h.b16 %v4980
        %v5286 = vunpack.c.l.b16 %v4981
        %v5287 = vunpack.c.h.b16 %v4981
        %v5288 = vunpack.c.l.b16 %v4982
        %v5289 = vunpack.c.h.b16 %v4982
        %v5290 = vunpack.c.l.b16 %v4983
        %v5291 = vunpack.c.h.b16 %v4983
        %v5292 = vunpack.c.l.b16 %v4984
        %v5293 = vunpack.c.h.b16 %v4984
        %v5294 = vunpack.c.l.b16 %v4985
        %v5295 = vunpack.c.h.b16 %v4985
        %v5296 = vunpack.c.l.b16 %v4986
        %v5297 = vunpack.c.h.b16 %v4986
        %v5298 = vunpack.c.l.b16 %v4987
        %v5299 = vunpack.c.h.b16 %v4987
        %v5300 = vunpack.c.l.b16 %v4988
        %v5301 = vunpack.c.h.b16 %v4988
        %v5302 = vunpack.c.l.b16 %v4989
        %v5303 = vunpack.c.h.b16 %v4989
        %v5304 = vunpack.c.l.b16 %v4990
        %v5305 = vunpack.c.h.b16 %v4990
        %v5306 = vunpack.c.l.b16 %v4991
        %v5307 = vunpack.c.h.b16 %v4991
        %v5308 = vunpack.c.l.b16 %v4992
        %v5309 = vunpack.c.h.b16 %v4992
        %v5310 = vunpack.c.l.b16 %v4993
        %v5311 = vunpack.c.h.b16 %v4993
        %v5312 = vunpack.c.l.b16 %v4994
        %v5313 = vunpack.c.h.b16 %v4994
        %v5314 = vunpack.c.l.b16 %v4995
        %v5315 = vunpack.c.h.b16 %v4995
        %v5316 = vunpack.c.l.b16 %v4996
        %v5317 = vunpack.c.h.b16 %v4996
        %v5318 = vunpack.c.l.b16 %v4997
        %v5319 = vunpack.c.h.b16 %v4997
        %v5320 = vunpack.c.l.b16 %v4998
        %v5321 = vunpack.c.h.b16 %v4998
        %v5322 = vunpack.c.l.b16 %v4999
        %v5323 = vunpack.c.h.b16 %v4999
        %v5324 = vunpack.c.l.b16 %v5000
        %v5325 = vunpack.c.h.b16 %v5000
        %v5326 = vunpack.c.l.b16 %v5001
        %v5327 = vunpack.c.h.b16 %v5001
        %v5328 = vunpack.c.l.b16 %v5002
        %v5329 = vunpack.c.h.b16 %v5002
        %v5330 = vunpack.c.l.b16 %v5003
        %v5331 = vunpack.c.h.b16 %v5003
        %v5332 = vunpack.c.l.b16 %v5004
        %v5333 = vunpack.c.h.b16 %v5004
        %v5334 = vunpack.c.l.b16 %v5005
        %v5335 = vunpack.c.h.b16 %v5005
        %v5336 = vunpack.c.l.b16 %v5006
        %v5337 = vunpack.c.h.b16 %v5006
        %v5338 = vunpack.c.l.b16 %v5007
        %v5339 = vunpack.c.h.b16 %v5007
        %v5340 = vunpack.c.l.b16 %v5008
        %v5341 = vunpack.c.h.b16 %v5008
        %v5342 = vunpack.c.l.b16 %v5009
        %v5343 = vunpack.c.h.b16 %v5009
        %v5344 = vunpack.c.l.b16 %v5010
        %v5345 = vunpack.c.h.b16 %v5010
        %v5346 = vunpack.c.l.b16 %v5011
        %v5347 = vunpack.c.h.b16 %v5011
        %v5348 = vunpack.c.l.b16 %v5012
        %v5349 = vunpack.c.h.b16 %v5012
        %v5350 = vunpack.c.l.b16 %v5013
        %v5351 = vunpack.c.h.b16 %v5013
        %v5352 = vunpack.c.l.b16 %v5014
        %v5353 = vunpack.c.h.b16 %v5014
        %v5354 = vunpack.c.l.b16 %v5015
        %v5355 = vunpack.c.h.b16 %v5015
        %v5356 = vunpack.c.l.b16 %v5016
        %v5357 = vunpack.c.h.b16 %v5016
        %v5358 = vunpack.c.l.b16 %v5017
        %v5359 = vunpack.c.h.b16 %v5017
        %v5360 = vunpack.c.l.b16 %v5018
        %v5361 = vunpack.c.h.b16 %v5018
        %v5362 = vunpack.c.l.b16 %v5019
        %v5363 = vunpack.c.h.b16 %v5019
        %v5364 = vunpack.c.l.b16 %v5020
        %v5365 = vunpack.c.h.b16 %v5020
        %v5366 = vunpack.c.l.b16 %v5021
        %v5367 = vunpack.c.h.b16 %v5021
        %v5368 = vunpack.c.l.b16 %v5022
        %v5369 = vunpack.c.h.b16 %v5022
        %v5370 = vunpack.c.l.b16 %v5023
        %v5371 = vunpack.c.h.b16 %v5023
        %v5372 = vunpack.c.l.b16 %v5024
        %v5373 = vunpack.c.h.b16 %v5024
        %v5374 = vunpack.c.l.b16 %v5025
        %v5375 = vunpack.c.h.b16 %v5025
        %v5376 = vunpack.c.l.b16 %v5026
        %v5377 = vunpack.c.h.b16 %v5026
        %v5378 = vunpack.c.l.b16 %v5027
        %v5379 = vunpack.c.h.b16 %v5027
        %v5380 = vunpack.c.l.b16 %v5028
        %v5381 = vunpack.c.h.b16 %v5028
        %v5382 = vunpack.c.l.b16 %v5029
        %v5383 = vunpack.c.h.b16 %v5029
        %v5384 = vunpack.c.l.b16 %v5030
        %v5385 = vunpack.c.h.b16 %v5030
        %v5386 = vunpack.c.l.b16 %v5031
        %v5387 = vunpack.c.h.b16 %v5031
        %v5388 = vunpack.c.l.b16 %v5032
        %v5389 = vunpack.c.h.b16 %v5032
        %v5390 = vunpack.c.l.b16 %v5033
        %v5391 = vunpack.c.h.b16 %v5033
        %v5392 = vunpack.c.l.b16 %v5034
        %v5393 = vunpack.c.h.b16 %v5034
        %v5394 = vunpack.c.l.b16 %v5035
        %v5395 = vunpack.c.h.b16 %v5035
        %v5396 = vunpack.c.l.b16 %v5036
        %v5397 = vunpack.c.h.b16 %v5036
        %v5398 = vunpack.c.l.b16 %v5037
        %v5399 = vunpack.c.h.b16 %v5037
        %v5400 = vunpack.c.l.b16 %v5038
        %v5401 = vunpack.c.h.b16 %v5038
        %v5402 = vunpack.c.l.b16 %v5039
        %v5403 = vunpack.c.h.b16 %v5039
        %v5404 = vunpack.c.l.b16 %v5040
        %v5405 = vunpack.c.h.b16 %v5040
        %v5406 = vunpack.c.l.b16 %v5041
        %v5407 = vunpack.c.h.b16 %v5041
        %v5408 = vunpack.c.l.b16 %v5042
        %v5409 = vunpack.c.h.b16 %v5042
        %v5410 = vunpack.c.l.b16 %v5043
        %v5411 = vunpack.c.h.b16 %v5043
        %v5412 = vunpack.c.l.b16 %v5044
        %v5413 = vunpack.c.h.b16 %v5044
        %v5414 = vunpack.c.l.b16 %v5045
        %v5415 = vunpack.c.h.b16 %v5045
        %v5416 = vunpack.c.l.b16 %v5046
        %v5417 = vunpack.c.h.b16 %v5046
        %v5418 = vunpack.c.l.b16 %v5047
        %v5419 = vunpack.c.h.b16 %v5047
        %v5420 = vunpack.c.l.b16 %v5048
        %v5421 = vunpack.c.h.b16 %v5048
        %v5422 = vunpack.c.l.b16 %v5049
        %v5423 = vunpack.c.h.b16 %v5049
        %v5424 = vunpack.c.l.b16 %v5050
        %v5425 = vunpack.c.h.b16 %v5050
        %v5426 = vunpack.c.l.b16 %v5051
        %v5427 = vunpack.c.h.b16 %v5051
        %v5428 = vunpack.c.l.b16 %v5052
        %v5429 = vunpack.c.h.b16 %v5052
        %v5430 = vunpack.c.l.b16 %v5053
        %v5431 = vunpack.c.h.b16 %v5053
        %v5432 = vunpack.c.l.b16 %v5054
        %v5433 = vunpack.c.h.b16 %v5054
        %v5434 = vunpack.c.l.b16 %v5055
        %v5435 = vunpack.c.h.b16 %v5055
        %v5436 = vunpack.c.l.b16 %v5056
        %v5437 = vunpack.c.h.b16 %v5056
        %v5438 = vunpack.c.l.b16 %v5057
        %v5439 = vunpack.c.h.b16 %v5057
        %v5440 = vunpack.c.l.b16 %v5058
        %v5441 = vunpack.c.h.b16 %v5058
        %v5442 = vunpack.c.l.b16 %v5059
        %v5443 = vunpack.c.h.b16 %v5059
        %v5444 = vunpack.c.l.b16 %v5060
        %v5445 = vunpack.c.h.b16 %v5060
        %v5446 = vunpack.c.l.b16 %v5061
        %v5447 = vunpack.c.h.b16 %v5061
        %v5448 = vunpack.c.l.b16 %v5062
        %v5449 = vunpack.c.h.b16 %v5062
        %v5450 = vunpack.c.l.b16 %v5063
        %v5451 = vunpack.c.h.b16 %v5063
        %v5452 = vunpack.c.l.b16 %v5064
        %v5453 = vunpack.c.h.b16 %v5064
        %v5454 = vunpack.c.l.b16 %v5065
        %v5455 = vunpack.c.h.b16 %v5065
        %v5456 = vunpack.c.l.b16 %v5066
        %v5457 = vunpack.c.h.b16 %v5066
        %v5458 = vunpack.c.l.b16 %v5067
        %v5459 = vunpack.c.h.b16 %v5067
        %v5460 = vunpack.c.l.b16 %v5068
        %v5461 = vunpack.c.h.b16 %v5068
        %v5462 = vunpack.c.l.b16 %v5069
        %v5463 = vunpack.c.h.b16 %v5069
        %v5464 = vunpack.c.l.b16 %v5070
        %v5465 = vunpack.c.h.b16 %v5070
        %v5466 = vunpack.c.l.b16 %v5071
        %v5467 = vunpack.c.h.b16 %v5071
        %v5468 = vunpack.c.l.b16 %v5072
        %v5469 = vunpack.c.h.b16 %v5072
        %v5470 = vunpack.c.l.b16 %v5073
        %v5471 = vunpack.c.h.b16 %v5073
        %v5472 = vunpack.c.l.b16 %v5074
        %v5473 = vunpack.c.h.b16 %v5074
        %v5474 = vunpack.c.l.b16 %v5075
        %v5475 = vunpack.c.h.b16 %v5075
        %v5476 = vunpack.c.l.b16 %v5076
        %v5477 = vunpack.c.h.b16 %v5076
        %v5478 = vunpack.c.l.b16 %v5077
        %v5479 = vunpack.c.h.b16 %v5077
        %v5480 = vunpack.c.l.b16 %v5078
        %v5481 = vunpack.c.h.b16 %v5078
        %v5482 = vunpack.c.l.b16 %v5079
        %v5483 = vunpack.c.h.b16 %v5079
        %v5484 = vunpack.c.l.b16 %v5080
        %v5485 = vunpack.c.h.b16 %v5080
        %v5486 = vunpack.c.l.b16 %v5081
        %v5487 = vunpack.c.h.b16 %v5081
        %v5488 = vpack.c.b16 %v5236, %v5232
        %v5489 = vpack.c.b16 %v5237, %v5233
        %v5490 = vpack.c.b16 %v5238, %v5234
        %v5491 = vpack.c.b16 %v5239, %v5235
        %v5492 = vpack.c.b16 %v5244, %v5240
        %v5493 = vpack.c.b16 %v5245, %v5241
        %v5494 = vpack.c.b16 %v5246, %v5242
        %v5495 = vpack.c.b16 %v5247, %v5243
        %v5496 = vpack.c.b16 %v5252, %v5248
        %v5497 = vpack.c.b16 %v5253, %v5249
        %v5498 = vpack.c.b16 %v5254, %v5250
        %v5499 = vpack.c.b16 %v5255, %v5251
        %v5500 = vpack.c.b16 %v5260, %v5256
        %v5501 = vpack.c.b16 %v5261, %v5257
        %v5502 = vpack.c.b16 %v5262, %v5258
        %v5503 = vpack.c.b16 %v5263, %v5259
        %v5504 = vpack.c.b16 %v5268, %v5264
        %v5505 = vpack.c.b16 %v5269, %v5265
        %v5506 = vpack.c.b16 %v5270, %v5266
        %v5507 = vpack.c.b16 %v5271, %v5267
        %v5508 = vpack.c.b16 %v5276, %v5272
        %v5509 = vpack.c.b16 %v5277, %v5273
        %v5510 = vpack.c.b16 %v5278, %v5274
        %v5511 = vpack.c.b16 %v5279, %v5275
        %v5512 = vpack.c.b16 %v5284, %v5280
        %v5513 = vpack.c.b16 %v5285, %v5281
        %v5514 = vpack.c.b16 %v5286, %v5282
        %v5515 = vpack.c.b16 %v5287, %v5283
        %v5516 = vpack.c.b16 %v5292, %v5288
        %v5517 = vpack.c.b16 %v5293, %v5289
        %v5518 = vpack.c.b16 %v5294, %v5290
        %v5519 = vpack.c.b16 %v5295, %v5291
        %v5520 = vpack.c.b16 %v5300, %v5296
        %v5521 = vpack.c.b16 %v5301, %v5297
        %v5522 = vpack.c.b16 %v5302, %v5298
        %v5523 = vpack.c.b16 %v5303, %v5299
        %v5524 = vpack.c.b16 %v5308, %v5304
        %v5525 = vpack.c.b16 %v5309, %v5305
        %v5526 = vpack.c.b16 %v5310, %v5306
        %v5527 = vpack.c.b16 %v5311, %v5307
        %v5528 = vpack.c.b16 %v5316, %v5312
        %v5529 = vpack.c.b16 %v5317, %v5313
        %v5530 = vpack.c.b16 %v5318, %v5314
        %v5531 = vpack.c.b16 %v5319, %v5315
        %v5532 = vpack.c.b16 %v5324, %v5320
        %v5533 = vpack.c.b16 %v5325, %v5321
        %v5534 = vpack.c.b16 %v5326, %v5322
        %v5535 = vpack.c.b16 %v5327, %v5323
        %v5536 = vpack.c.b16 %v5332, %v5328
        %v5537 = vpack.c.b16 %v5333, %v5329
        %v5538 = vpack.c.b16 %v5334, %v5330
        %v5539 = vpack.c.b16 %v5335, %v5331
        %v5540 = vpack.c.b16 %v5340, %v5336
        %v5541 = vpack.c.b16 %v5341, %v5337
        %v5542 = vpack.c.b16 %v5342, %v5338
        %v5543 = vpack.c.b16 %v5343, %v5339
        %v5544 = vpack.c.b16 %v5348, %v5344
        %v5545 = vpack.c.b16 %v5349, %v5345
        %v5546 = vpack.c.b16 %v5350, %v5346
        %v5547 = vpack.c.b16 %v5351, %v5347
        %v5548 = vpack.c.b16 %v5356, %v5352
        %v5549 = vpack.c.b16 %v5357, %v5353
        %v5550 = vpack.c.b16 %v5358, %v5354
        %v5551 = vpack.c.b16 %v5359, %v5355
        %v5552 = vpack.c.b16 %v5364, %v5360
        %v5553 = vpack.c.b16 %v5365, %v5361
        %v5554 = vpack.c.b16 %v5366, %v5362
        %v5555 = vpack.c.b16 %v5367, %v5363
        %v5556 = vpack.c.b16 %v5372, %v5368
        %v5557 = vpack.c.b16 %v5373, %v5369
        %v5558 = vpack.c.b16 %v5374, %v5370
        %v5559 = vpack.c.b16 %v5375, %v5371
        %v5560 = vpack.c.b16 %v5380, %v5376
        %v5561 = vpack.c.b16 %v5381, %v5377
        %v5562 = vpack.c.b16 %v5382, %v5378
        %v5563 = vpack.c.b16 %v5383, %v5379
        %v5564 = vpack.c.b16 %v5388, %v5384
        %v5565 = vpack.c.b16 %v5389, %v5385
        %v5566 = vpack.c.b16 %v5390, %v5386
        %v5567 = vpack.c.b16 %v5391, %v5387
        %v5568 = vpack.c.b16 %v5396, %v5392
        %v5569 = vpack.c.b16 %v5397, %v5393
        %v5570 = vpack.c.b16 %v5398, %v5394
        %v5571 = vpack.c.b16 %v5399, %v5395
        %v5572 = vpack.c.b16 %v5404, %v5400
        %v5573 = vpack.c.b16 %v5405, %v5401
        %v5574 = vpack.c.b16 %v5406, %v5402
        %v5575 = vpack.c.b16 %v5407, %v5403
        %v5576 = vpack.c.b16 %v5412, %v5408
        %v5577 = vpack.c.b16 %v5413, %v5409
        %v5578 = vpack.c.b16 %v5414, %v5410
        %v5579 = vpack.c.b16 %v5415, %v5411
        %v5580 = vpack.c.b16 %v5420, %v5416
        %v5581 = vpack.c.b16 %v5421, %v5417
        %v5582 = vpack.c.b16 %v5422, %v5418
        %v5583 = vpack.c.b16 %v5423, %v5419
        %v5584 = vpack.c.b16 %v5428, %v5424
        %v5585 = vpack.c.b16 %v5429, %v5425
        %v5586 = vpack.c.b16 %v5430, %v5426
        %v5587 = vpack.c.b16 %v5431, %v5427
        %v5588 = vpack.c.b16 %v5436, %v5432
        %v5589 = vpack.c.b16 %v5437, %v5433
        %v5590 = vpack.c.b16 %v5438, %v5434
        %v5591 = vpack.c.b16 %v5439, %v5435
        %v5592 = vpack.c.b16 %v5444, %v5440
        %v5593 = vpack.c.b16 %v5445, %v5441
        %v5594 = vpack.c.b16 %v5446, %v5442
        %v5595 = vpack.c.b16 %v5447, %v5443
        %v5596 = vpack.c.b16 %v5452, %v5448
        %v5597 = vpack.c.b16 %v5453, %v5449
        %v5598 = vpack.c.b16 %v5454, %v5450
        %v5599 = vpack.c.b16 %v5455, %v5451
        %v5600 = vpack.c.b16 %v5460, %v5456
        %v5601 = vpack.c.b16 %v5461, %v5457
        %v5602 = vpack.c.b16 %v5462, %v5458
        %v5603 = vpack.c.b16 %v5463, %v5459
        %v5604 = vpack.c.b16 %v5468, %v5464
        %v5605 = vpack.c.b16 %v5469, %v5465
        %v5606 = vpack.c.b16 %v5470, %v5466
        %v5607 = vpack.c.b16 %v5471, %v5467
        %v5608 = vpack.c.b16 %v5476, %v5472
        %v5609 = vpack.c.b16 %v5477, %v5473
        %v5610 = vpack.c.b16 %v5478, %v5474
        %v5611 = vpack.c.b16 %v5479, %v5475
        %v5612 = vpack.c.b16 %v5484, %v5480
        %v5613 = vpack.c.b16 %v5485, %v5481
        %v5614 = vpack.c.b16 %v5486, %v5482
        %v5615 = vpack.c.b16 %v5487, %v5483
        %5744 = vmatprep.subr.bf16.mxu0 %v5489
        %5745 = vmatpush1.bf16.msra.mxu0 %v5488
        %5746 = vmatprep.subr.bf16.mxu0 %v5493
        %5747 = vmatpush1.bf16.msra.mxu0 %v5492
        %5748 = vmatprep.subr.bf16.mxu0 %v5497
        %5749 = vmatpush1.bf16.msra.mxu0 %v5496
        %5750 = vmatprep.subr.bf16.mxu0 %v5501
        %5751 = vmatpush1.bf16.msra.mxu0 %v5500
        %5752 = vmatprep.subr.bf16.mxu0 %v5505
        %5753 = vmatpush1.bf16.msra.mxu0 %v5504
        %5754 = vmatprep.subr.bf16.mxu0 %v5509
        %5755 = vmatpush1.bf16.msra.mxu0 %v5508
        %5756 = vmatprep.subr.bf16.mxu0 %v5513
        %5757 = vmatpush1.bf16.msra.mxu0 %v5512
        %5758 = vmatprep.subr.bf16.mxu0 %v5517
        %5759 = vmatpush1.bf16.msra.mxu0 %v5516
        %5760 = vmatprep.subr.bf16.mxu0 %v5521
        %5761 = vmatpush1.bf16.msra.mxu0 %v5520
        %5762 = vmatprep.subr.bf16.mxu0 %v5525
        %5763 = vmatpush1.bf16.msra.mxu0 %v5524
        %5764 = vmatprep.subr.bf16.mxu0 %v5529
        %5765 = vmatpush1.bf16.msra.mxu0 %v5528
        %5766 = vmatprep.subr.bf16.mxu0 %v5533
        %5767 = vmatpush1.bf16.msra.mxu0 %v5532
        %5768 = vmatprep.subr.bf16.mxu0 %v5537
        %5769 = vmatpush1.bf16.msra.mxu0 %v5536
        %5770 = vmatprep.subr.bf16.mxu0 %v5541
        %5771 = vmatpush1.bf16.msra.mxu0 %v5540
        %5772 = vmatprep.subr.bf16.mxu0 %v5545
        %5773 = vmatpush1.bf16.msra.mxu0 %v5544
        %5774 = vmatprep.subr.bf16.mxu0 %v5549
        %5775 = vmatpush1.bf16.msra.mxu0 %v5548
        %5776 = vmatprep.mubr.bf16.mxu0 %v4923
        %5777 = vmatmul.mubr.bf16.gmra.mrb[0].mxu0 %v4922
        %v5778 = vpop.f32.mrb[0].mxu0
        %v5779 = vadd.f32 %v5087, %v5778
        %v5780 = vpop.f32.mrb[0].mxu0
        %v5781 = vadd.f32 %v5091, %v5780
        %v5782 = vpop.f32.mrb[0].mxu0
        %v5783 = vadd.f32 %v5087, %v5782
        %v5784 = vpop.f32.mrb[0].mxu0
        %v5785 = vadd.f32 %v5091, %v5784
        %5786 = vmatprep.mubr.bf16.mxu0 %v4927
        %5787 = vmatmul.mubr.bf16.gmra.mrb[0].mxu0 %v4926
        %v5788 = vpop.f32.mrb[0].mxu0
        %v5789 = vadd.f32 %v5087, %v5788
        %v5790 = vpop.f32.mrb[0].mxu0
        %v5791 = vadd.f32 %v5091, %v5790
        %v5792 = vpop.f32.mrb[0].mxu0
        %v5793 = vadd.f32 %v5087, %v5792
        %v5794 = vpop.f32.mrb[0].mxu0
        %v5795 = vadd.f32 %v5091, %v5794
        %5796 = vmatprep.mubr.bf16.mxu0 %v4931
        %5797 = vmatmul.mubr.bf16.gmra.mrb[0].mxu0 %v4930
        %v5798 = vpop.f32.mrb[0].mxu0
        %v5799 = vadd.f32 %v5087, %v5798
        %v5800 = vpop.f32.mrb[0].mxu0
        %v5801 = vadd.f32 %v5091, %v5800
        %v5802 = vpop.f32.mrb[0].mxu0
        %v5803 = vadd.f32 %v5087, %v5802
        %v5804 = vpop.f32.mrb[0].mxu0
        %v5805 = vadd.f32 %v5091, %v5804
        %5806 = vmatprep.mubr.bf16.mxu0 %v4935
        %5807 = vmatmul.mubr.bf16.gmra.mrb[0].mxu0 %v4934
        %v5808 = vpop.f32.mrb[0].mxu0
        %v5809 = vadd.f32 %v5087, %v5808
        %v5810 = vpop.f32.mrb[0].mxu0
        %v5811 = vadd.f32 %v5091, %v5810
        %v5812 = vpop.f32.mrb[0].mxu0
        %v5813 = vadd.f32 %v5087, %v5812
        %v5814 = vpop.f32.mrb[0].mxu0
        %v5815 = vadd.f32 %v5091, %v5814
        %5816 = vmatprep.mubr.bf16.mxu0 %v4939
        %5817 = vmatmul.mubr.bf16.gmra.mrb[0].mxu0 %v4938
        %v5818 = vpop.f32.mrb[0].mxu0
        %v5819 = vadd.f32 %v5087, %v5818
        %v5820 = vpop.f32.mrb[0].mxu0
        %v5821 = vadd.f32 %v5091, %v5820
        %v5822 = vpop.f32.mrb[0].mxu0
        %v5823 = vadd.f32 %v5087, %v5822
        %v5824 = vpop.f32.mrb[0].mxu0
        %v5825 = vadd.f32 %v5091, %v5824
        %5826 = vmatprep.mubr.bf16.mxu0 %v4943
        %5827 = vmatmul.mubr.bf16.gmra.mrb[0].mxu0 %v4942
        %v5828 = vpop.f32.mrb[0].mxu0
        %v5829 = vadd.f32 %v5087, %v5828
        %v5830 = vpop.f32.mrb[0].mxu0
        %v5831 = vadd.f32 %v5091, %v5830
        %v5832 = vpop.f32.mrb[0].mxu0
        %v5833 = vadd.f32 %v5087, %v5832
        %v5834 = vpop.f32.mrb[0].mxu0
        %v5835 = vadd.f32 %v5091, %v5834
        %5836 = vmatprep.mubr.bf16.mxu0 %v4947
        %5837 = vmatmul.mubr.bf16.gmra.mrb[0].mxu0 %v4946
        %v5838 = vpop.f32.mrb[0].mxu0
        %v5839 = vadd.f32 %v5087, %v5838
        %v5840 = vpop.f32.mrb[0].mxu0
        %v5841 = vadd.f32 %v5091, %v5840
        %v5842 = vpop.f32.mrb[0].mxu0
        %v5843 = vadd.f32 %v5087, %v5842
        %v5844 = vpop.f32.mrb[0].mxu0
        %v5845 = vadd.f32 %v5091, %v5844
        %5846 = vmatprep.mubr.bf16.mxu0 %v4951
        %5847 = vmatmul.mubr.bf16.gmra.mrb[0].mxu0 %v4950
        %v5848 = vpop.f32.mrb[0].mxu0
        %v5849 = vadd.f32 %v5087, %v5848
        %v5850 = vpop.f32.mrb[0].mxu0
        %v5851 = vadd.f32 %v5091, %v5850
        %v5852 = vpop.f32.mrb[0].mxu0
        %v5853 = vadd.f32 %v5087, %v5852
        %v5854 = vpop.f32.mrb[0].mxu0
        %v5855 = vadd.f32 %v5091, %v5854
        %5856 = vdwg.mxu0
        %5857 = vmatprep.subr.bf16.mxu0 %v5553
        %5858 = vmatpush1.bf16.msra.mxu0 %v5552
        %5859 = vmatprep.subr.bf16.mxu0 %v5557
        %5860 = vmatpush1.bf16.msra.mxu0 %v5556
        %5861 = vmatprep.subr.bf16.mxu0 %v5561
        %5862 = vmatpush1.bf16.msra.mxu0 %v5560
        %5863 = vmatprep.subr.bf16.mxu0 %v5565
        %5864 = vmatpush1.bf16.msra.mxu0 %v5564
        %5865 = vmatprep.subr.bf16.mxu0 %v5569
        %5866 = vmatpush1.bf16.msra.mxu0 %v5568
        %5867 = vmatprep.subr.bf16.mxu0 %v5573
        %5868 = vmatpush1.bf16.msra.mxu0 %v5572
        %5869 = vmatprep.subr.bf16.mxu0 %v5577
        %5870 = vmatpush1.bf16.msra.mxu0 %v5576
        %5871 = vmatprep.subr.bf16.mxu0 %v5581
        %5872 = vmatpush1.bf16.msra.mxu0 %v5580
        %5873 = vmatprep.subr.bf16.mxu0 %v5585
        %5874 = vmatpush1.bf16.msra.mxu0 %v5584
        %5875 = vmatprep.subr.bf16.mxu0 %v5589
        %5876 = vmatpush1.bf16.msra.mxu0 %v5588
        %5877 = vmatprep.subr.bf16.mxu0 %v5593
        %5878 = vmatpush1.bf16.msra.mxu0 %v5592
        %5879 = vmatprep.subr.bf16.mxu0 %v5597
        %5880 = vmatpush1.bf16.msra.mxu0 %v5596
        %5881 = vmatprep.subr.bf16.mxu0 %v5601
        %5882 = vmatpush1.bf16.msra.mxu0 %v5600
        %5883 = vmatprep.subr.bf16.mxu0 %v5605
        %5884 = vmatpush1.bf16.msra.mxu0 %v5604
        %5885 = vmatprep.subr.bf16.mxu0 %v5609
        %5886 = vmatpush1.bf16.msra.mxu0 %v5608
        %5887 = vmatprep.subr.bf16.mxu0 %v5613
        %5888 = vmatpush1.bf16.msra.mxu0 %v5612
        %5889 = vmatprep.mubr.bf16.mxu0 %v4925
        %5890 = vmatmul.mubr.bf16.gmra.mrb[0].mxu0 %v4924
        %v5891 = vpop.f32.mrb[0].mxu0
        %v5892 = vadd.f32 %v5779, %v5891
        %v5893 = vpop.f32.mrb[0].mxu0
        %v5894 = vadd.f32 %v5781, %v5893
        %v5895 = vpop.f32.mrb[0].mxu0
        %v5896 = vadd.f32 %v5783, %v5895
        %v5897 = vpop.f32.mrb[0].mxu0
        %v5898 = vadd.f32 %v5785, %v5897
        %5899 = vmatprep.mubr.bf16.mxu0 %v4929
        %5900 = vmatmul.mubr.bf16.gmra.mrb[0].mxu0 %v4928
        %v5901 = vpop.f32.mrb[0].mxu0
        %v5902 = vadd.f32 %v5789, %v5901
        %v5903 = vpop.f32.mrb[0].mxu0
        %v5904 = vadd.f32 %v5791, %v5903
        %v5905 = vpop.f32.mrb[0].mxu0
        %v5906 = vadd.f32 %v5793, %v5905
        %v5907 = vpop.f32.mrb[0].mxu0
        %v5908 = vadd.f32 %v5795, %v5907
        %5909 = vmatprep.mubr.bf16.mxu0 %v4933
        %5910 = vmatmul.mubr.bf16.gmra.mrb[0].mxu0 %v4932
        %v5911 = vpop.f32.mrb[0].mxu0
        %v5912 = vadd.f32 %v5799, %v5911
        %v5913 = vpop.f32.mrb[0].mxu0
        %v5914 = vadd.f32 %v5801, %v5913
        %v5915 = vpop.f32.mrb[0].mxu0
        %v5916 = vadd.f32 %v5803, %v5915
        %v5917 = vpop.f32.mrb[0].mxu0
        %v5918 = vadd.f32 %v5805, %v5917
        %5919 = vmatprep.mubr.bf16.mxu0 %v4937
        %5920 = vmatmul.mubr.bf16.gmra.mrb[0].mxu0 %v4936
        %v5921 = vpop.f32.mrb[0].mxu0
        %v5922 = vadd.f32 %v5809, %v5921
        %v5923 = vpop.f32.mrb[0].mxu0
        %v5924 = vadd.f32 %v5811, %v5923
        %v5925 = vpop.f32.mrb[0].mxu0
        %v5926 = vadd.f32 %v5813, %v5925
        %v5927 = vpop.f32.mrb[0].mxu0
        %v5928 = vadd.f32 %v5815, %v5927
        %5929 = vmatprep.mubr.bf16.mxu0 %v4941
        %5930 = vmatmul.mubr.bf16.gmra.mrb[0].mxu0 %v4940
        %v5931 = vpop.f32.mrb[0].mxu0
        %v5932 = vadd.f32 %v5819, %v5931
        %v5933 = vpop.f32.mrb[0].mxu0
        %v5934 = vadd.f32 %v5821, %v5933
        %v5935 = vpop.f32.mrb[0].mxu0
        %v5936 = vadd.f32 %v5823, %v5935
        %v5937 = vpop.f32.mrb[0].mxu0
        %v5938 = vadd.f32 %v5825, %v5937
        %5939 = vmatprep.mubr.bf16.mxu0 %v4945
        %5940 = vmatmul.mubr.bf16.gmra.mrb[0].mxu0 %v4944
        %v5941 = vpop.f32.mrb[0].mxu0
        %v5942 = vadd.f32 %v5829, %v5941
        %v5943 = vpop.f32.mrb[0].mxu0
        %v5944 = vadd.f32 %v5831, %v5943
        %v5945 = vpop.f32.mrb[0].mxu0
        %v5946 = vadd.f32 %v5833, %v5945
        %v5947 = vpop.f32.mrb[0].mxu0
        %v5948 = vadd.f32 %v5835, %v5947
        %5949 = vmatprep.mubr.bf16.mxu0 %v4949
        %5950 = vmatmul.mubr.bf16.gmra.mrb[0].mxu0 %v4948
        %v5951 = vpop.f32.mrb[0].mxu0
        %v5952 = vadd.f32 %v5839, %v5951
        %v5953 = vpop.f32.mrb[0].mxu0
        %v5954 = vadd.f32 %v5841, %v5953
        %v5955 = vpop.f32.mrb[0].mxu0
        %v5956 = vadd.f32 %v5843, %v5955
        %v5957 = vpop.f32.mrb[0].mxu0
        %v5958 = vadd.f32 %v5845, %v5957
        %5959 = vmatprep.mubr.bf16.mxu0 %v4953
        %5960 = vmatmul.mubr.bf16.gmra.mrb[0].mxu0 %v4952
        %v5961 = vpop.f32.mrb[0].mxu0
        %v5962 = vadd.f32 %v5849, %v5961
        %v5963 = vpop.f32.mrb[0].mxu0
        %v5964 = vadd.f32 %v5851, %v5963
        %v5965 = vpop.f32.mrb[0].mxu0
        %v5966 = vadd.f32 %v5853, %v5965
        %v5967 = vpop.f32.mrb[0].mxu0
        %v5968 = vadd.f32 %v5855, %v5967
        %5969 = vdwg.mxu0
        %5970 = vmatprep.subr.bf16.mxu0 %v5491
        %5971 = vmatpush1.bf16.msra.mxu0 %v5490
        %5972 = vmatprep.subr.bf16.mxu0 %v5495
        %5973 = vmatpush1.bf16.msra.mxu0 %v5494
        %5974 = vmatprep.subr.bf16.mxu0 %v5499
        %5975 = vmatpush1.bf16.msra.mxu0 %v5498
        %5976 = vmatprep.subr.bf16.mxu0 %v5503
        %5977 = vmatpush1.bf16.msra.mxu0 %v5502
        %5978 = vmatprep.subr.bf16.mxu0 %v5507
        %5979 = vmatpush1.bf16.msra.mxu0 %v5506
        %5980 = vmatprep.subr.bf16.mxu0 %v5511
        %5981 = vmatpush1.bf16.msra.mxu0 %v5510
        %5982 = vmatprep.subr.bf16.mxu0 %v5515
        %5983 = vmatpush1.bf16.msra.mxu0 %v5514
        %5984 = vmatprep.subr.bf16.mxu0 %v5519
        %5985 = vmatpush1.bf16.msra.mxu0 %v5518
        %5986 = vmatprep.subr.bf16.mxu0 %v5523
        %5987 = vmatpush1.bf16.msra.mxu0 %v5522
        %5988 = vmatprep.subr.bf16.mxu0 %v5527
        %5989 = vmatpush1.bf16.msra.mxu0 %v5526
        %5990 = vmatprep.subr.bf16.mxu0 %v5531
        %5991 = vmatpush1.bf16.msra.mxu0 %v5530
        %5992 = vmatprep.subr.bf16.mxu0 %v5535
        %5993 = vmatpush1.bf16.msra.mxu0 %v5534
        %5994 = vmatprep.subr.bf16.mxu0 %v5539
        %5995 = vmatpush1.bf16.msra.mxu0 %v5538
        %5996 = vmatprep.subr.bf16.mxu0 %v5543
        %5997 = vmatpush1.bf16.msra.mxu0 %v5542
        %5998 = vmatprep.subr.bf16.mxu0 %v5547
        %5999 = vmatpush1.bf16.msra.mxu0 %v5546
        %6000 = vmatprep.subr.bf16.mxu0 %v5551
        %6001 = vmatpush1.bf16.msra.mxu0 %v5550
        %6002 = vmatprep.mubr.bf16.mxu0 %v4923
        %6003 = vmatmul.mubr.bf16.gmra.mrb[0].mxu0 %v4922
        %v6004 = vpop.f32.mrb[0].mxu0
        %v6005 = vadd.f32 %v5095, %v6004
        %v6006 = vpop.f32.mrb[0].mxu0
        %v6007 = vadd.f32 %v5099, %v6006
        %v6008 = vpop.f32.mrb[0].mxu0
        %v6009 = vadd.f32 %v5095, %v6008
        %v6010 = vpop.f32.mrb[0].mxu0
        %v6011 = vadd.f32 %v5099, %v6010
        %6012 = vmatprep.mubr.bf16.mxu0 %v4927
        %6013 = vmatmul.mubr.bf16.gmra.mrb[0].mxu0 %v4926
        %v6014 = vpop.f32.mrb[0].mxu0
        %v6015 = vadd.f32 %v5095, %v6014
        %v6016 = vpop.f32.mrb[0].mxu0
        %v6017 = vadd.f32 %v5099, %v6016
        %v6018 = vpop.f32.mrb[0].mxu0
        %v6019 = vadd.f32 %v5095, %v6018
        %v6020 = vpop.f32.mrb[0].mxu0
        %v6021 = vadd.f32 %v5099, %v6020
        %6022 = vmatprep.mubr.bf16.mxu0 %v4931
        %6023 = vmatmul.mubr.bf16.gmra.mrb[0].mxu0 %v4930
        %v6024 = vpop.f32.mrb[0].mxu0
        %v6025 = vadd.f32 %v5095, %v6024
        %v6026 = vpop.f32.mrb[0].mxu0
        %v6027 = vadd.f32 %v5099, %v6026
        %v6028 = vpop.f32.mrb[0].mxu0
        %v6029 = vadd.f32 %v5095, %v6028
        %v6030 = vpop.f32.mrb[0].mxu0
        %v6031 = vadd.f32 %v5099, %v6030
        %6032 = vmatprep.mubr.bf16.mxu0 %v4935
        %6033 = vmatmul.mubr.bf16.gmra.mrb[0].mxu0 %v4934
        %v6034 = vpop.f32.mrb[0].mxu0
        %v6035 = vadd.f32 %v5095, %v6034
        %v6036 = vpop.f32.mrb[0].mxu0
        %v6037 = vadd.f32 %v5099, %v6036
        %v6038 = vpop.f32.mrb[0].mxu0
        %v6039 = vadd.f32 %v5095, %v6038
        %v6040 = vpop.f32.mrb[0].mxu0
        %v6041 = vadd.f32 %v5099, %v6040
        %6042 = vmatprep.mubr.bf16.mxu0 %v4939
        %6043 = vmatmul.mubr.bf16.gmra.mrb[0].mxu0 %v4938
        %v6044 = vpop.f32.mrb[0].mxu0
        %v6045 = vadd.f32 %v5095, %v6044
        %v6046 = vpop.f32.mrb[0].mxu0
        %v6047 = vadd.f32 %v5099, %v6046
        %v6048 = vpop.f32.mrb[0].mxu0
        %v6049 = vadd.f32 %v5095, %v6048
        %v6050 = vpop.f32.mrb[0].mxu0
        %v6051 = vadd.f32 %v5099, %v6050
        %6052 = vmatprep.mubr.bf16.mxu0 %v4943
        %6053 = vmatmul.mubr.bf16.gmra.mrb[0].mxu0 %v4942
        %v6054 = vpop.f32.mrb[0].mxu0
        %v6055 = vadd.f32 %v5095, %v6054
        %v6056 = vpop.f32.mrb[0].mxu0
        %v6057 = vadd.f32 %v5099, %v6056
        %v6058 = vpop.f32.mrb[0].mxu0
        %v6059 = vadd.f32 %v5095, %v6058
        %v6060 = vpop.f32.mrb[0].mxu0
        %v6061 = vadd.f32 %v5099, %v6060
        %6062 = vmatprep.mubr.bf16.mxu0 %v4947
        %6063 = vmatmul.mubr.bf16.gmra.mrb[0].mxu0 %v4946
        %v6064 = vpop.f32.mrb[0].mxu0
        %v6065 = vadd.f32 %v5095, %v6064
        %v6066 = vpop.f32.mrb[0].mxu0
        %v6067 = vadd.f32 %v5099, %v6066
        %v6068 = vpop.f32.mrb[0].mxu0
        %v6069 = vadd.f32 %v5095, %v6068
        %v6070 = vpop.f32.mrb[0].mxu0
        %v6071 = vadd.f32 %v5099, %v6070
        %6072 = vmatprep.mubr.bf16.mxu0 %v4951
        %6073 = vmatmul.mubr.bf16.gmra.mrb[0].mxu0 %v4950
        %v6074 = vpop.f32.mrb[0].mxu0
        %v6075 = vadd.f32 %v5095, %v6074
        %v6076 = vpop.f32.mrb[0].mxu0
        %v6077 = vadd.f32 %v5099, %v6076
        %v6078 = vpop.f32.mrb[0].mxu0
        %v6079 = vadd.f32 %v5095, %v6078
        %v6080 = vpop.f32.mrb[0].mxu0
        %v6081 = vadd.f32 %v5099, %v6080
        %6082 = vdwg.mxu0
        %6083 = vmatprep.subr.bf16.mxu0 %v5555
        %6084 = vmatpush1.bf16.msra.mxu0 %v5554
        %6085 = vmatprep.subr.bf16.mxu0 %v5559
        %6086 = vmatpush1.bf16.msra.mxu0 %v5558
        %6087 = vmatprep.subr.bf16.mxu0 %v5563
        %6088 = vmatpush1.bf16.msra.mxu0 %v5562
        %6089 = vmatprep.subr.bf16.mxu0 %v5567
        %6090 = vmatpush1.bf16.msra.mxu0 %v5566
        %6091 = vmatprep.subr.bf16.mxu0 %v5571
        %6092 = vmatpush1.bf16.msra.mxu0 %v5570
        %6093 = vmatprep.subr.bf16.mxu0 %v5575
        %6094 = vmatpush1.bf16.msra.mxu0 %v5574
        %6095 = vmatprep.subr.bf16.mxu0 %v5579
        %6096 = vmatpush1.bf16.msra.mxu0 %v5578
        %6097 = vmatprep.subr.bf16.mxu0 %v5583
        %6098 = vmatpush1.bf16.msra.mxu0 %v5582
        %6099 = vmatprep.subr.bf16.mxu0 %v5587
        %6100 = vmatpush1.bf16.msra.mxu0 %v5586
        %6101 = vmatprep.subr.bf16.mxu0 %v5591
        %6102 = vmatpush1.bf16.msra.mxu0 %v5590
        %6103 = vmatprep.subr.bf16.mxu0 %v5595
        %6104 = vmatpush1.bf16.msra.mxu0 %v5594
        %6105 = vmatprep.subr.bf16.mxu0 %v5599
        %6106 = vmatpush1.bf16.msra.mxu0 %v5598
        %6107 = vmatprep.subr.bf16.mxu0 %v5603
        %6108 = vmatpush1.bf16.msra.mxu0 %v5602
        %6109 = vmatprep.subr.bf16.mxu0 %v5607
        %6110 = vmatpush1.bf16.msra.mxu0 %v5606
        %6111 = vmatprep.subr.bf16.mxu0 %v5611
        %6112 = vmatpush1.bf16.msra.mxu0 %v5610
        %6113 = vmatprep.subr.bf16.mxu0 %v5615
        %6114 = vmatpush1.bf16.msra.mxu0 %v5614
        %6115 = vmatprep.mubr.bf16.mxu0 %v4925
        %6116 = vmatmul.mubr.bf16.gmra.mrb[0].mxu0 %v4924
        %v6117 = vpop.f32.mrb[0].mxu0
        %v6118 = vadd.f32 %v6005, %v6117
        %v6119 = vpop.f32.mrb[0].mxu0
        %v6120 = vadd.f32 %v6007, %v6119
        %v6121 = vpop.f32.mrb[0].mxu0
        %v6122 = vadd.f32 %v6009, %v6121
        %v6123 = vpop.f32.mrb[0].mxu0
        %v6124 = vadd.f32 %v6011, %v6123
        %6125 = vmatprep.mubr.bf16.mxu0 %v4929
        %6126 = vmatmul.mubr.bf16.gmra.mrb[0].mxu0 %v4928
        %v6127 = vpop.f32.mrb[0].mxu0
        %v6128 = vadd.f32 %v6015, %v6127
        %v6129 = vpop.f32.mrb[0].mxu0
        %v6130 = vadd.f32 %v6017, %v6129
        %v6131 = vpop.f32.mrb[0].mxu0
        %v6132 = vadd.f32 %v6019, %v6131
        %v6133 = vpop.f32.mrb[0].mxu0
        %v6134 = vadd.f32 %v6021, %v6133
        %6135 = vmatprep.mubr.bf16.mxu0 %v4933
        %6136 = vmatmul.mubr.bf16.gmra.mrb[0].mxu0 %v4932
        %v6137 = vpop.f32.mrb[0].mxu0
        %v6138 = vadd.f32 %v6025, %v6137
        %v6139 = vpop.f32.mrb[0].mxu0
        %v6140 = vadd.f32 %v6027, %v6139
        %v6141 = vpop.f32.mrb[0].mxu0
        %v6142 = vadd.f32 %v6029, %v6141
        %v6143 = vpop.f32.mrb[0].mxu0
        %v6144 = vadd.f32 %v6031, %v6143
        %6145 = vmatprep.mubr.bf16.mxu0 %v4937
        %6146 = vmatmul.mubr.bf16.gmra.mrb[0].mxu0 %v4936
        %v6147 = vpop.f32.mrb[0].mxu0
        %v6148 = vadd.f32 %v6035, %v6147
        %v6149 = vpop.f32.mrb[0].mxu0
        %v6150 = vadd.f32 %v6037, %v6149
        %v6151 = vpop.f32.mrb[0].mxu0
        %v6152 = vadd.f32 %v6039, %v6151
        %v6153 = vpop.f32.mrb[0].mxu0
        %v6154 = vadd.f32 %v6041, %v6153
        %6155 = vmatprep.mubr.bf16.mxu0 %v4941
        %6156 = vmatmul.mubr.bf16.gmra.mrb[0].mxu0 %v4940
        %v6157 = vpop.f32.mrb[0].mxu0
        %v6158 = vadd.f32 %v6045, %v6157
        %v6159 = vpop.f32.mrb[0].mxu0
        %v6160 = vadd.f32 %v6047, %v6159
        %v6161 = vpop.f32.mrb[0].mxu0
        %v6162 = vadd.f32 %v6049, %v6161
        %v6163 = vpop.f32.mrb[0].mxu0
        %v6164 = vadd.f32 %v6051, %v6163
        %6165 = vmatprep.mubr.bf16.mxu0 %v4945
        %6166 = vmatmul.mubr.bf16.gmra.mrb[0].mxu0 %v4944
        %v6167 = vpop.f32.mrb[0].mxu0
        %v6168 = vadd.f32 %v6055, %v6167
        %v6169 = vpop.f32.mrb[0].mxu0
        %v6170 = vadd.f32 %v6057, %v6169
        %v6171 = vpop.f32.mrb[0].mxu0
        %v6172 = vadd.f32 %v6059, %v6171
        %v6173 = vpop.f32.mrb[0].mxu0
        %v6174 = vadd.f32 %v6061, %v6173
        %6175 = vmatprep.mubr.bf16.mxu0 %v4949
        %6176 = vmatmul.mubr.bf16.gmra.mrb[0].mxu0 %v4948
        %v6177 = vpop.f32.mrb[0].mxu0
        %v6178 = vadd.f32 %v6065, %v6177
        %v6179 = vpop.f32.mrb[0].mxu0
        %v6180 = vadd.f32 %v6067, %v6179
        %v6181 = vpop.f32.mrb[0].mxu0
        %v6182 = vadd.f32 %v6069, %v6181
        %v6183 = vpop.f32.mrb[0].mxu0
        %v6184 = vadd.f32 %v6071, %v6183
        %6185 = vmatprep.mubr.bf16.mxu0 %v4953
        %6186 = vmatmul.mubr.bf16.gmra.mrb[0].mxu0 %v4952
        %v6187 = vpop.f32.mrb[0].mxu0
        %v6188 = vadd.f32 %v6075, %v6187
        %v6189 = vpop.f32.mrb[0].mxu0
        %v6190 = vadd.f32 %v6077, %v6189
        %v6191 = vpop.f32.mrb[0].mxu0
        %v6192 = vadd.f32 %v6079, %v6191
        %v6193 = vpop.f32.mrb[0].mxu0
        %v6194 = vadd.f32 %v6081, %v6193
        %6195 = vdwg.mxu0
        %v6196 = vmax.f32 %v5892, 0.0
        %v6197 = vmax.f32 %v5894, 0.0
        %v6198 = vmax.f32 %v6118, 0.0
        %v6199 = vmax.f32 %v6120, 0.0
        %v6200 = vmax.f32 %v5896, 0.0
        %v6201 = vmax.f32 %v5898, 0.0
        %v6202 = vmax.f32 %v6122, 0.0
        %v6203 = vmax.f32 %v6124, 0.0
        %v6204 = vmax.f32 %v5902, 0.0
        %v6205 = vmax.f32 %v5904, 0.0
        %v6206 = vmax.f32 %v6128, 0.0
        %v6207 = vmax.f32 %v6130, 0.0
        %v6208 = vmax.f32 %v5906, 0.0
        %v6209 = vmax.f32 %v5908, 0.0
        %v6210 = vmax.f32 %v6132, 0.0
        %v6211 = vmax.f32 %v6134, 0.0
        %v6212 = vmax.f32 %v5912, 0.0
        %v6213 = vmax.f32 %v5914, 0.0
        %v6214 = vmax.f32 %v6138, 0.0
        %v6215 = vmax.f32 %v6140, 0.0
        %v6216 = vmax.f32 %v5916, 0.0
        %v6217 = vmax.f32 %v5918, 0.0
        %v6218 = vmax.f32 %v6142, 0.0
        %v6219 = vmax.f32 %v6144, 0.0
        %v6220 = vmax.f32 %v5922, 0.0
        %v6221 = vmax.f32 %v5924, 0.0
        %v6222 = vmax.f32 %v6148, 0.0
        %v6223 = vmax.f32 %v6150, 0.0
        %v6224 = vmax.f32 %v5926, 0.0
        %v6225 = vmax.f32 %v5928, 0.0
        %v6226 = vmax.f32 %v6152, 0.0
        %v6227 = vmax.f32 %v6154, 0.0
        %v6228 = vmax.f32 %v5932, 0.0
        %v6229 = vmax.f32 %v5934, 0.0
        %v6230 = vmax.f32 %v6158, 0.0
        %v6231 = vmax.f32 %v6160, 0.0
        %v6232 = vmax.f32 %v5936, 0.0
        %v6233 = vmax.f32 %v5938, 0.0
        %v6234 = vmax.f32 %v6162, 0.0
        %v6235 = vmax.f32 %v6164, 0.0
        %v6236 = vmax.f32 %v5942, 0.0
        %v6237 = vmax.f32 %v5944, 0.0
        %v6238 = vmax.f32 %v6168, 0.0
        %v6239 = vmax.f32 %v6170, 0.0
        %v6240 = vmax.f32 %v5946, 0.0
        %v6241 = vmax.f32 %v5948, 0.0
        %v6242 = vmax.f32 %v6172, 0.0
        %v6243 = vmax.f32 %v6174, 0.0
        %v6244 = vmax.f32 %v5952, 0.0
        %v6245 = vmax.f32 %v5954, 0.0
        %v6246 = vmax.f32 %v6178, 0.0
        %v6247 = vmax.f32 %v6180, 0.0
        %v6248 = vmax.f32 %v5956, 0.0
        %v6249 = vmax.f32 %v5958, 0.0
        %v6250 = vmax.f32 %v6182, 0.0
        %v6251 = vmax.f32 %v6184, 0.0
        %v6252 = vmax.f32 %v5962, 0.0
        %v6253 = vmax.f32 %v5964, 0.0
        %v6254 = vmax.f32 %v6188, 0.0
        %v6255 = vmax.f32 %v6190, 0.0
        %v6256 = vmax.f32 %v5966, 0.0
        %v6257 = vmax.f32 %v5968, 0.0
        %v6258 = vmax.f32 %v6192, 0.0
        %v6259 = vmax.f32 %v6194, 0.0
        %v6260 = vld [vmem:[%s11] sm:$0xf]
        %v6261 = vunpack.c.l.bf16 %v6260
        %v6263 = vlaneseq
        %v6264 = vshrl.u32 %v6263, 7
        %v6265 = vsub.s32 0, %v6264
        %v6266 = vrot.slane %v6261, %v6265
        %v6267 = vlaneseq
        %v6268 = vshrl.u32 %v6267, 7
        %v6269 = vsub.s32 2, %v6268
        %v6270 = vrot.slane %v6261, %v6269
        %v6271 = vlaneseq
        %v6272 = vshrl.u32 %v6271, 7
        %v6273 = vsub.s32 4, %v6272
        %v6274 = vrot.slane %v6261, %v6273
        %v6275 = vlaneseq
        %v6276 = vshrl.u32 %v6275, 7
        %v6277 = vsub.s32 6, %v6276
        %v6278 = vrot.slane %v6261, %v6277
        %v6283 = vlaneseq
        %v6284 = vshrl.u32 %v6283, 7
        %v6285 = vsub.s32 0, %v6284
        %v6286 = vrot.slane %v6266, %v6285
        %v6287 = vlaneseq
        %v6288 = vshrl.u32 %v6287, 7
        %v6289 = vsub.s32 0, %v6288
        %v6290 = vrot.slane %v6270, %v6289
        %v6291 = vlaneseq
        %v6292 = vshrl.u32 %v6291, 7
        %v6293 = vsub.s32 0, %v6292
        %v6294 = vrot.slane %v6274, %v6293
        %v6295 = vlaneseq
        %v6296 = vshrl.u32 %v6295, 7
        %v6297 = vsub.s32 0, %v6296
        %v6298 = vrot.slane %v6278, %v6297
        %v6299 = vmul.f32 %v6196, %v6286
        %v6300 = vmul.f32 %v6197, %v6290
        %v6301 = vmul.f32 %v6198, %v6294
        %v6302 = vmul.f32 %v6199, %v6298
        %v6303 = vmul.f32 %v6200, %v6286
        %v6304 = vmul.f32 %v6201, %v6290
        %v6305 = vmul.f32 %v6202, %v6294
        %v6306 = vmul.f32 %v6203, %v6298
        %v6307 = vmul.f32 %v6204, %v6286
        %v6308 = vmul.f32 %v6205, %v6290
        %v6309 = vmul.f32 %v6206, %v6294
        %v6310 = vmul.f32 %v6207, %v6298
        %v6311 = vmul.f32 %v6208, %v6286
        %v6312 = vmul.f32 %v6209, %v6290
        %v6313 = vmul.f32 %v6210, %v6294
        %v6314 = vmul.f32 %v6211, %v6298
        %v6315 = vmul.f32 %v6212, %v6286
        %v6316 = vmul.f32 %v6213, %v6290
        %v6317 = vmul.f32 %v6214, %v6294
        %v6318 = vmul.f32 %v6215, %v6298
        %v6319 = vmul.f32 %v6216, %v6286
        %v6320 = vmul.f32 %v6217, %v6290
        %v6321 = vmul.f32 %v6218, %v6294
        %v6322 = vmul.f32 %v6219, %v6298
        %v6323 = vmul.f32 %v6220, %v6286
        %v6324 = vmul.f32 %v6221, %v6290
        %v6325 = vmul.f32 %v6222, %v6294
        %v6326 = vmul.f32 %v6223, %v6298
        %v6327 = vmul.f32 %v6224, %v6286
        %v6328 = vmul.f32 %v6225, %v6290
        %v6329 = vmul.f32 %v6226, %v6294
        %v6330 = vmul.f32 %v6227, %v6298
        %v6331 = vmul.f32 %v6228, %v6286
        %v6332 = vmul.f32 %v6229, %v6290
        %v6333 = vmul.f32 %v6230, %v6294
        %v6334 = vmul.f32 %v6231, %v6298
        %v6335 = vmul.f32 %v6232, %v6286
        %v6336 = vmul.f32 %v6233, %v6290
        %v6337 = vmul.f32 %v6234, %v6294
        %v6338 = vmul.f32 %v6235, %v6298
        %v6339 = vmul.f32 %v6236, %v6286
        %v6340 = vmul.f32 %v6237, %v6290
        %v6341 = vmul.f32 %v6238, %v6294
        %v6342 = vmul.f32 %v6239, %v6298
        %v6343 = vmul.f32 %v6240, %v6286
        %v6344 = vmul.f32 %v6241, %v6290
        %v6345 = vmul.f32 %v6242, %v6294
        %v6346 = vmul.f32 %v6243, %v6298
        %v6347 = vmul.f32 %v6244, %v6286
        %v6348 = vmul.f32 %v6245, %v6290
        %v6349 = vmul.f32 %v6246, %v6294
        %v6350 = vmul.f32 %v6247, %v6298
        %v6351 = vmul.f32 %v6248, %v6286
        %v6352 = vmul.f32 %v6249, %v6290
        %v6353 = vmul.f32 %v6250, %v6294
        %v6354 = vmul.f32 %v6251, %v6298
        %v6355 = vmul.f32 %v6252, %v6286
        %v6356 = vmul.f32 %v6253, %v6290
        %v6357 = vmul.f32 %v6254, %v6294
        %v6358 = vmul.f32 %v6255, %v6298
        %v6359 = vmul.f32 %v6256, %v6286
        %v6360 = vmul.f32 %v6257, %v6290
        %v6361 = vmul.f32 %v6258, %v6294
        %v6362 = vmul.f32 %v6259, %v6298
        %v6363 = vadd.f32 %v6299, %v6300
        %v6364 = vadd.f32 %v6363, %v6301
        %v6365 = vadd.f32 %v6364, %v6302
        %6366 = vadd.xlane.f32.xlu0 %v6365
        %v6367 = vpop.xlane.xlu0 %6366
        %v6368 = vadd.f32 %v6303, %v6304
        %v6369 = vadd.f32 %v6368, %v6305
        %v6370 = vadd.f32 %v6369, %v6306
        %6371 = vadd.xlane.f32.xlu0 %v6370
        %v6372 = vpop.xlane.xlu0 %6371
        %v6373 = vadd.f32 %v6307, %v6308
        %v6374 = vadd.f32 %v6373, %v6309
        %v6375 = vadd.f32 %v6374, %v6310
        %6376 = vadd.xlane.f32.xlu0 %v6375
        %v6377 = vpop.xlane.xlu0 %6376
        %v6378 = vadd.f32 %v6311, %v6312
        %v6379 = vadd.f32 %v6378, %v6313
        %v6380 = vadd.f32 %v6379, %v6314
        %6381 = vadd.xlane.f32.xlu0 %v6380
        %v6382 = vpop.xlane.xlu0 %6381
        %v6383 = vadd.f32 %v6315, %v6316
        %v6384 = vadd.f32 %v6383, %v6317
        %v6385 = vadd.f32 %v6384, %v6318
        %6386 = vadd.xlane.f32.xlu0 %v6385
        %v6387 = vpop.xlane.xlu0 %6386
        %v6388 = vadd.f32 %v6319, %v6320
        %v6389 = vadd.f32 %v6388, %v6321
        %v6390 = vadd.f32 %v6389, %v6322
        %6391 = vadd.xlane.f32.xlu0 %v6390
        %v6392 = vpop.xlane.xlu0 %6391
        %v6393 = vadd.f32 %v6323, %v6324
        %v6394 = vadd.f32 %v6393, %v6325
        %v6395 = vadd.f32 %v6394, %v6326
        %6396 = vadd.xlane.f32.xlu0 %v6395
        %v6397 = vpop.xlane.xlu0 %6396
        %v6398 = vadd.f32 %v6327, %v6328
        %v6399 = vadd.f32 %v6398, %v6329
        %v6400 = vadd.f32 %v6399, %v6330
        %6401 = vadd.xlane.f32.xlu0 %v6400
        %v6402 = vpop.xlane.xlu0 %6401
        %v6403 = vadd.f32 %v6331, %v6332
        %v6404 = vadd.f32 %v6403, %v6333
        %v6405 = vadd.f32 %v6404, %v6334
        %6406 = vadd.xlane.f32.xlu0 %v6405
        %v6407 = vpop.xlane.xlu0 %6406
        %v6408 = vadd.f32 %v6335, %v6336
        %v6409 = vadd.f32 %v6408, %v6337
        %v6410 = vadd.f32 %v6409, %v6338
        %6411 = vadd.xlane.f32.xlu0 %v6410
        %v6412 = vpop.xlane.xlu0 %6411
        %v6413 = vadd.f32 %v6339, %v6340
        %v6414 = vadd.f32 %v6413, %v6341
        %v6415 = vadd.f32 %v6414, %v6342
        %6416 = vadd.xlane.f32.xlu0 %v6415
        %v6417 = vpop.xlane.xlu0 %6416
        %v6418 = vadd.f32 %v6343, %v6344
        %v6419 = vadd.f32 %v6418, %v6345
        %v6420 = vadd.f32 %v6419, %v6346
        %6421 = vadd.xlane.f32.xlu0 %v6420
        %v6422 = vpop.xlane.xlu0 %6421
        %v6423 = vadd.f32 %v6347, %v6348
        %v6424 = vadd.f32 %v6423, %v6349
        %v6425 = vadd.f32 %v6424, %v6350
        %6426 = vadd.xlane.f32.xlu0 %v6425
        %v6427 = vpop.xlane.xlu0 %6426
        %v6428 = vadd.f32 %v6351, %v6352
        %v6429 = vadd.f32 %v6428, %v6353
        %v6430 = vadd.f32 %v6429, %v6354
        %6431 = vadd.xlane.f32.xlu0 %v6430
        %v6432 = vpop.xlane.xlu0 %6431
        %v6433 = vadd.f32 %v6355, %v6356
        %v6434 = vadd.f32 %v6433, %v6357
        %v6435 = vadd.f32 %v6434, %v6358
        %6436 = vadd.xlane.f32.xlu0 %v6435
        %v6437 = vpop.xlane.xlu0 %6436
        %v6438 = vadd.f32 %v6359, %v6360
        %v6439 = vadd.f32 %v6438, %v6361
        %v6440 = vadd.f32 %v6439, %v6362
        %6441 = vadd.xlane.f32.xlu0 %v6440
        %v6442 = vpop.xlane.xlu0 %6441
        %v6443 = vld [vmem:[#allocation2] sm:$0x1]
        %v6445 = vlaneseq
        %v6446 = vshrl.u32 %v6445, 7
        %v6447 = vsub.s32 0, %v6446
        %v6448 = vrot.slane %v6443, %v6447
        %v6450 = vadd.f32 %v6367, %v6448
        %v6451 = vadd.f32 %v6372, %v6448
        %v6452 = vadd.f32 %v6377, %v6448
        %v6453 = vadd.f32 %v6382, %v6448
        %v6454 = vadd.f32 %v6387, %v6448
        %v6455 = vadd.f32 %v6392, %v6448
        %v6456 = vadd.f32 %v6397, %v6448
        %v6457 = vadd.f32 %v6402, %v6448
        %v6458 = vadd.f32 %v6407, %v6448
        %v6459 = vadd.f32 %v6412, %v6448
        %v6460 = vadd.f32 %v6417, %v6448
        %v6461 = vadd.f32 %v6422, %v6448
        %v6462 = vadd.f32 %v6427, %v6448
        %v6463 = vadd.f32 %v6432, %v6448
        %v6464 = vadd.f32 %v6437, %v6448
        %v6465 = vadd.f32 %v6442, %v6448
        %vm6466 = vcmask 7168
        %6467 = vst.msk [vmem:[%s503] sm:$0xff] %vm6466, %v6450
        %6468 = vst.msk [vmem:[%s503 + $0x8] sm:$0xff] %vm6466, %v6451
        %6469 = vst.msk [vmem:[%s503 + $0x10] sm:$0xff] %vm6466, %v6452
        %6470 = vst.msk [vmem:[%s503 + $0x18] sm:$0xff] %vm6466, %v6453
        %6471 = vst.msk [vmem:[%s503 + $0x20] sm:$0xff] %vm6466, %v6454
        %6472 = vst.msk [vmem:[%s503 + $0x28] sm:$0xff] %vm6466, %v6455
        %6473 = vst.msk [vmem:[%s503 + $0x30] sm:$0xff] %vm6466, %v6456
        %6474 = vst.msk [vmem:[%s503 + $0x38] sm:$0xff] %vm6466, %v6457
        %6475 = vst.msk [vmem:[%s503 + $0x40] sm:$0xff] %vm6466, %v6458
        %6476 = vst.msk [vmem:[%s503 + $0x48] sm:$0xff] %vm6466, %v6459
        %6477 = vst.msk [vmem:[%s503 + $0x50] sm:$0xff] %vm6466, %v6460
        %6478 = vst.msk [vmem:[%s503 + $0x58] sm:$0xff] %vm6466, %v6461
        %6479 = vst.msk [vmem:[%s503 + $0x60] sm:$0xff] %vm6466, %v6462
        %6480 = vst.msk [vmem:[%s503 + $0x68] sm:$0xff] %vm6466, %v6463
        %6481 = vst.msk [vmem:[%s503 + $0x70] sm:$0xff] %vm6466, %v6464
        %6482 = vst.msk [vmem:[%s503 + $0x78] sm:$0xff] %vm6466, %v6465
        %s6483 = smul.u32 16, %s29
        %p6484 = scmp.lt.s32.totalorder %s6483, 31
        %s6485 = scalar_select %p6484, %s6483, 31
        %s6486 = smul.addr %s6485, 8
        %s6487 = scalar_lea.vmem %s13, %s6486
        // Predicated region
        $region89: #{tpu_custom_call.1} parent=71 // pred_check
          %p6488 = pneg %p325
        $region90: #{tpu_custom_call.1} parent=71 // pred_check_branch
          %6490 = sbr.rel (%p6488) target = $region92
        $region91: #{tpu_custom_call.1} parent=71 // pred_region
          %s6491 = smul.u32 16, %s29
        $region92: #{tpu_custom_call.1} parent=71 // pred_fallthru
          _
      $region72: #{tpu_custom_call.1} parent=5 // pred_fallthru
        _
      %p6492 = scmp.le.s32.totalorder 2, %s24
      // Predicated region
      $region93: #{tpu_custom_call.1} parent=5 // pred_check
        %p6493 = pneg %p6492
      $region94: #{tpu_custom_call.1} parent=5 // pred_check_branch
        %6495 = sbr.rel (%p6493) target = $region96
      $region95: #{tpu_custom_call.1} parent=5 // pred_region
        %s6496 = ssub.s32 %s24, 2
        // Predicated region
        $region97: #{tpu_custom_call.1} parent=95 // pred_check
          %p6497 = pneg %p331
        $region98: #{tpu_custom_call.1} parent=95 // pred_check_branch
          %6499 = sbr.rel (%p6497) target = $region100
        $region99: #{tpu_custom_call.1} parent=95 // pred_region
          %s6500 = smul.u32 16, %s30
          %p6501 = scmp.lt.s32.totalorder %s6500, 31
          %s6502 = scalar_select %p6501, %s6500, 31
          %s6503 = smul.addr %s6502, 8
          %s6504 = scalar_lea.vmem %s13, %s6503
        $region100: #{tpu_custom_call.1} parent=95 // pred_fallthru
          _
      $region96: #{tpu_custom_call.1} parent=5 // pred_fallthru
        _
    $region6: #{tpu_custom_call.1} parent=1 // loop_footer
      %s28 = sadd.s32 1, %s24
    $region7: #{tpu_custom_call.1} parent=1 // loop_footer_branch
      %23 = sbr.rel target = $region3
    $region8: #{tpu_custom_call.1} parent=1 // loop_exit
      _
    %6505 = vsyncpa [#allocation4], 1
    %s6506 = scalar_lea.sflag [#allocation4], 1
    %6507 = vsyncpa %s6506, 1
    %6508 = vsyncpa [#allocation6], 1
    %6509 = vsyncpa [#allocation9], 1

</llo_original>
